<compile_context>
chip_gen: v7x
topology: tpu7x:2x2x1
jax: 0.10.0
libtpu: 0.0.40
codegen_flags: <defaults>
</compile_context>

<pallas_src>
import functools

import jax
import jax.numpy as jnp
from jax import lax
from jax.experimental import pallas as pl
from jax.experimental.pallas import tpu as pltpu

BN_EPS = 1e-5            # PyTorch BatchNorm2d default eps
NEG_SLOPE = 0.2          # LeakyReLU negative_slope
LANE = 128


# ----------------------------------------------------------------------------
# small helpers
# ----------------------------------------------------------------------------
def _round_up(v, m):
    return (v + m - 1) // m * m


def _pad_last(a, to):
    pad = to - a.shape[-1]
    if pad == 0:
        return a
    widths = [(0, 0)] * (a.ndim - 1) + [(0, pad)]
    return jnp.pad(a, widths)


def _pad_axis0(a, to):
    pad = to - a.shape[0]
    if pad == 0:
        return a
    widths = [(0, pad)] + [(0, 0)] * (a.ndim - 1)
    return jnp.pad(a, widths)


def _const_spec(shape):
    nd = len(shape)
    return pl.BlockSpec(shape, lambda i, _nd=nd: (0,) * _nd)


def _vmem_budgets():
    """Generation-specific (vmem_limit_bytes, per-tile working-set budget)."""
    cap = None
    try:
        info = pltpu.get_tpu_info()
        cap = int(getattr(info, "vmem_capacity_bytes", 0)) or None
    except Exception:
        cap = None
    if cap is not None and cap >= 100 * 1024 * 1024:     # v5e / v6e: 128 MiB VMEM
        return 96 * 1024 * 1024, 32 * 1024 * 1024
    return 48 * 1024 * 1024, 12 * 1024 * 1024            # v7x (64 MiB) / unknown


def _choose_tile_points(m, k, cp, h_ch, o_ch, tile_budget, target=None):
    """Largest #points per tile with tm % 16 == 0 (bf16 sublane packing of the
    (tm*k, cp)/(tm, cp) blocks; f32 sublanes of the (tm, o_ch) out block) that
    fits a lane-padding-aware VMEM working-set model."""
    cp_l = _round_up(cp, LANE)
    h_l = _round_up(h_ch, LANE)
    o_l = _round_up(o_ch, LANE)
    per_point = (2 * 2 * k * cp_l                      # nbr bf16, double-buffered
                 + 2 * 2 * cp_l                        # ctr bf16, double-buffered
                 + 2 * k * (4 * h_l + 2 * h_l + 4 * o_l)   # live h f32/bf16, o f32 (2x headroom)
                 + 2 * 4 * o_l)                        # out tile f32, double-buffered
    fixed = 2 * 1024 * 1024                            # weights / scales / scratch slack
    cap = max(16, (tile_budget - fixed) // max(per_point, 1))
    cap = min(cap, 4096, _round_up(m, 16))
    if target is not None:
        cap = min(cap, max(16, target))
    return max(16, (cap // 16) * 16)


# ----------------------------------------------------------------------------
# shared in-kernel compute:  h = nbr @ W1a + broadcast_K(ctr @ W1c)
# ----------------------------------------------------------------------------
def _hidden_pre_bn(nbr_ref, ctr_ref, w1a_ref, w1c_ref, *, tm, k, h_ch):
    h = jnp.dot(nbr_ref[...], w1a_ref[...], preferred_element_type=jnp.float32)
    hc = jnp.dot(ctr_ref[...], w1c_ref[...], preferred_element_type=jnp.float32)
    h = (h.reshape(tm, k, h_ch) + hc[:, None, :]).reshape(tm * k, h_ch)
    return h


# ----------------------------------------------------------------------------
# Pass A: layer-1 BN statistics — per-tile (8, H) partial sum / sum-of-squares
# (padded rows have nbr = ctr = 0, so they contribute exact zeros: no masking)
# ----------------------------------------------------------------------------
def _stats1_kernel(nbr_ref, ctr_ref, w1a_ref, w1c_ref, sum_ref, sumsq_ref,
                   *, tm, k, h_ch):
    h = _hidden_pre_bn(nbr_ref, ctr_ref, w1a_ref, w1c_ref, tm=tm, k=k, h_ch=h_ch)
    h8 = h.reshape(tm * k // 8, 8, h_ch)
    sum_ref[...] = jnp.sum(h8, axis=0, keepdims=True)
    sumsq_ref[...] = jnp.sum(h8 * h8, axis=0, keepdims=True)


# ----------------------------------------------------------------------------
# Pass B: layer-2 BN statistics (needs global layer-1 stats); padded rows are
# masked out because BN1's shift makes them nonzero.
# ----------------------------------------------------------------------------
def _stats2_kernel(nbr_ref, ctr_ref, w1a_ref, w1c_ref, s1_ref, t1_ref, w2_ref,
                   sum_ref, sumsq_ref, *, tm, k, h_ch, o_ch, valid_rows, masked):
    h = _hidden_pre_bn(nbr_ref, ctr_ref, w1a_ref, w1c_ref, tm=tm, k=k, h_ch=h_ch)
    h = h * s1_ref[...] + t1_ref[...]                   # BN1 (f32)
    h = jnp.maximum(h, NEG_SLOPE * h)                   # LeakyReLU (f32)
    o = jnp.dot(h.astype(jnp.bfloat16), w2_ref[...],
                preferred_element_type=jnp.float32)
    if masked:
        row0 = pl.program_id(0) * (tm * k)
        ridx = row0 + lax.broadcasted_iota(jnp.int32, (tm * k, 1), 0)
        o = jnp.where(ridx < valid_rows, o, 0.0)
    o8 = o.reshape(tm * k // 8, 8, o_ch)
    sum_ref[...] = jnp.sum(o8, axis=0, keepdims=True)
    sumsq_ref[...] = jnp.sum(o8 * o8, axis=0, keepdims=True)


# ----------------------------------------------------------------------------
# Pass C: full forward per tile + max over K neighbors, unpadded output write
# ----------------------------------------------------------------------------
def _final_kernel(nbr_ref, ctr_ref, w1a_ref, w1c_ref, s1_ref, t1_ref, w2_ref,
                  s2_ref, t2_ref, out_ref, *, tm, k, h_ch, o_ch):
    h = _hidden_pre_bn(nbr_ref, ctr_ref, w1a_ref, w1c_ref, tm=tm, k=k, h_ch=h_ch)
    h = h * s1_ref[...] + t1_ref[...]
    h = jnp.maximum(h, NEG_SLOPE * h)
    o = jnp.dot(h.astype(jnp.bfloat16), w2_ref[...],
                preferred_element_type=jnp.float32)
    o = o * s2_ref[...] + t2_ref[...]                   # BN2 (f32)
    o = jnp.maximum(o, NEG_SLOPE * o)                   # LeakyReLU (f32)
    out_ref[...] = jnp.max(o.reshape(tm, k, o_ch), axis=1)   # max over K


# ----------------------------------------------------------------------------
# Plain-JAX glue: knn graph construction (data-dependent indexing stays in XLA)
# TODO(synk): knn (top_k) and the neighbor gather are data-dependent indexing
#             with no clean BlockSpec expression; only conv/BN/LeakyReLU/max
#             run in Pallas.
# ----------------------------------------------------------------------------
def knn_jax(pts, k):
    """pts: (B, N, D) -> idx (B, N, k), excluding self (rank 0 of topk)."""
    sq = jnp.sum(pts * pts, axis=-1)
    d2 = sq[:, :, None] + sq[:, None, :] - 2.0 * jnp.einsum('bnd,bmd->bnm', pts, pts)
    _, idx = lax.top_k(-d2, k + 1)
    return idx[:, :, 1:]


def _split_w1(w1, c, edge_function):
    if edge_function == 'local_global':
        return w1[:c], w1[c:] - w1[:c]
    if edge_function == 'local':
        return w1, -w1
    if edge_function == 'global':
        return w1, jnp.zeros_like(w1)
    raise ValueError(f'Edge Function {edge_function} is not allowed.')


# ----------------------------------------------------------------------------
# Wrapper equivalent to EdgeGraphConvBlock.forward
# ----------------------------------------------------------------------------
@functools.partial(jax.jit, static_argnames=('edge_function', 'k', 'tile_points'))
def edge_graph_conv_block(x, params, *, edge_function='local_global', k=8,
                          pos=None, idx=None, tile_points=None):
    """x: (B, N, C_in)  ->  (out (B, N, C_out), idx (B, N, k))."""
    B, N, C = x.shape
    if pos is None:
        pos = x
    if idx is None:
        idx = knn_jax(pos, k)

    w1, g1, b1, w2, g2, b2 = params
    h_ch = w1.shape[1]
    o_ch = w2.shape[1]
    w1a, w1c = _split_w1(w1, C, edge_function)

    cp = _round_up(C, 8)                       # padded streamed-channel width
    m = B * N
    rows = m * k                               # true BN denominator

    vmem_limit, tile_budget = _vmem_budgets()
    tm = _choose_tile_points(m, k, cp, h_ch, o_ch, tile_budget, tile_points)
    m_pad = _round_up(m, tm)
    nm = m_pad // tm
    block_rows = tm * k
    rows_pad = m_pad * k
    masked = (m_pad != m)

    # ---- edge features: gather-only neighbor stream, built directly in bf16 ----
    xb = _pad_last(x.astype(jnp.bfloat16), cp)                      # (B, N, cp)
    nbr = jax.vmap(lambda pts, ids: pts[ids])(xb, idx)              # (B, N, K, cp)
    nbr = _pad_axis0(nbr.reshape(m * k, cp), rows_pad)              # (rows_pad, cp)
    ctr = _pad_axis0(xb.reshape(m, cp), m_pad)                      # (m_pad, cp)

    w1a_b = _pad_axis0(w1a, cp).astype(jnp.bfloat16)                # (cp, H)
    w1c_b = _pad_axis0(w1c, cp).astype(jnp.bfloat16)                # (cp, H)
    w2_b = w2.astype(jnp.bfloat16)                                  # (H, O)

    nbr_spec = pl.BlockSpec((block_rows, cp), lambda i: (i, 0))
    ctr_spec = pl.BlockSpec((tm, cp), lambda i: (i, 0))
    part_h = pl.BlockSpec((1, 8, h_ch), lambda i: (i, 0, 0))
    part_o = pl.BlockSpec((1, 8, o_ch), lambda i: (i, 0, 0))
    cnt = jnp.float32(rows)
    stream_bytes = rows_pad * cp * 2 + m_pad * cp * 2

    # ---------------- pass A: layer-1 BN statistics -------------------------
    sum1_p, sumsq1_p = pl.pallas_call(
        functools.partial(_stats1_kernel, tm=tm, k=k, h_ch=h_ch),
        out_shape=(jax.ShapeDtypeStruct((nm, 8, h_ch), jnp.float32),
                   jax.ShapeDtypeStruct((nm, 8, h_ch), jnp.float32)),
        grid_spec=pltpu.PrefetchScalarGridSpec(
            num_scalar_prefetch=0, grid=(nm,),
            in_specs=[nbr_spec, ctr_spec,
                      _const_spec((cp, h_ch)), _const_spec((cp, h_ch))],
            out_specs=(part_h, part_h)),
        compiler_params=pltpu.CompilerParams(
            dimension_semantics=("parallel",),
            vmem_limit_bytes=vmem_limit),
        cost_estimate=pl.CostEstimate(
            flops=int(2 * (rows_pad + m_pad) * cp * h_ch + 4 * rows_pad * h_ch),
            transcendentals=0,
            bytes_accessed=int(stream_bytes + 4 * cp * h_ch + 2 * nm * 8 * h_ch * 4)),
    )(nbr, ctr, w1a_b, w1c_b)

    mean1 = (jnp.sum(sum1_p, axis=(0, 1)) / cnt).reshape(1, h_ch)
    var1 = jnp.maximum(jnp.sum(sumsq1_p, axis=(0, 1)).reshape(1, h_ch) / cnt
                       - mean1 * mean1, 0.0)
    scale1 = g1 * lax.rsqrt(var1 + BN_EPS)
    shift1 = b1 - mean1 * scale1

    # ---------------- pass B: layer-2 BN statistics -------------------------
    # TODO(synk): when cp > h_ch, caching the post-BN1 activation here (bf16)
    #             and consuming it in pass C would be a further bandwidth win.
    sum2_p, sumsq2_p = pl.pallas_call(
        functools.partial(_stats2_kernel, tm=tm, k=k, h_ch=h_ch, o_ch=o_ch,
                          valid_rows=rows, masked=masked),
        out_shape=(jax.ShapeDtypeStruct((nm, 8, o_ch), jnp.float32),
                   jax.ShapeDtypeStruct((nm, 8, o_ch), jnp.float32)),
        grid_spec=pltpu.PrefetchScalarGridSpec(
            num_scalar_prefetch=0, grid=(nm,),
            in_specs=[nbr_spec, ctr_spec,
                      _const_spec((cp, h_ch)), _const_spec((cp, h_ch)),
                      _const_spec((1, h_ch)), _const_spec((1, h_ch)),
                      _const_spec((h_ch, o_ch))],
            out_specs=(part_o, part_o)),
        compiler_params=pltpu.CompilerParams(
            dimension_semantics=("parallel",),
            vmem_limit_bytes=vmem_limit),
        cost_estimate=pl.CostEstimate(
            flops=int(2 * rows_pad * (cp * h_ch + h_ch * o_ch)
                      + 2 * m_pad * cp * h_ch + 8 * rows_pad * o_ch),
            transcendentals=0,
            bytes_accessed=int(stream_bytes + (4 * cp + 2 * o_ch) * h_ch
                               + 2 * nm * 8 * o_ch * 4)),
    )(nbr, ctr, w1a_b, w1c_b, scale1, shift1, w2_b)

    mean2 = (jnp.sum(sum2_p, axis=(0, 1)) / cnt).reshape(1, o_ch)
    var2 = jnp.maximum(jnp.sum(sumsq2_p, axis=(0, 1)).reshape(1, o_ch) / cnt
                       - mean2 * mean2, 0.0)
    scale2 = g2 * lax.rsqrt(var2 + BN_EPS)
    shift2 = b2 - mean2 * scale2

    # ---------------- pass C: normalize, activate, max over K ---------------
    out = pl.pallas_call(
        functools.partial(_final_kernel, tm=tm, k=k, h_ch=h_ch, o_ch=o_ch),
        out_shape=jax.ShapeDtypeStruct((m_pad, o_ch), jnp.float32),
        grid_spec=pltpu.PrefetchScalarGridSpec(
            num_scalar_prefetch=0, grid=(nm,),
            in_specs=[nbr_spec, ctr_spec,
                      _const_spec((cp, h_ch)), _const_spec((cp, h_ch)),
                      _const_spec((1, h_ch)), _const_spec((1, h_ch)),
                      _const_spec((h_ch, o_ch)),
                      _const_spec((1, o_ch)), _const_spec((1, o_ch))],
            out_specs=pl.BlockSpec((tm, o_ch), lambda i: (i, 0))),
        compiler_params=pltpu.CompilerParams(
            dimension_semantics=("parallel",),
            vmem_limit_bytes=vmem_limit),
        cost_estimate=pl.CostEstimate(
            flops=int(2 * rows_pad * (cp * h_ch + h_ch * o_ch)
                      + 2 * m_pad * cp * h_ch + 7 * rows_pad * o_ch),
            transcendentals=0,
            bytes_accessed=int(stream_bytes + (4 * cp + 2 * o_ch) * h_ch
                               + m_pad * o_ch * 4)),
    )(nbr, ctr, w1a_b, w1c_b, scale1, shift1, w2_b, scale2, shift2)

    return out[:m].reshape(B, N, o_ch), idx


# ----------------------------------------------------------------------------
# Pure-JAX reference (PyTorch semantics; shares the kernel's bf16 operand casts
# and center/neighbor split so the comparison isolates the kernel's stats /
# accumulation / tiling path)
# ----------------------------------------------------------------------------
def reference(x, params, *, edge_function, k, idx=None):
    B, N, C = x.shape
    if idx is None:
        idx = knn_jax(x, k)
    w1, g1, b1, w2, g2, b2 = params
    w1a, w1c = _split_w1(w1, C, edge_function)
    cp = _round_up(C, 8)

    xb = _pad_last(x.astype(jnp.bfloat16), cp).astype(jnp.float32)   # (B,N,cp)
    nbr = jax.vmap(lambda pts, ids: pts[ids])(xb, idx)               # (B,N,K,cp)
    w1a_f = _pad_axis0(w1a, cp).astype(jnp.bfloat16).astype(jnp.float32)
    w1c_f = _pad_axis0(w1c, cp).astype(jnp.bfloat16).astype(jnp.float32)
    w2_f = w2.astype(jnp.bfloat16).astype(jnp.float32)

    h = (jnp.einsum('bnkc,ch->bnkh', nbr, w1a_f)
         + jnp.einsum('bnc,ch->bnh', xb, w1c_f)[:, :, None, :])
    h = h.reshape(B * N * k, -1)
    m1 = jnp.mean(h, axis=0, keepdims=True)
    v1 = jnp.mean((h - m1) ** 2, axis=0, keepdims=True)
    h = (h - m1) * lax.rsqrt(v1 + BN_EPS) * g1 + b1
    h = jnp.maximum(h, NEG_SLOPE * h)
    h = h.astype(jnp.bfloat16).astype(jnp.float32)

    o = h @ w2_f
    m2 = jnp.mean(o, axis=0, keepdims=True)
    v2 = jnp.mean((o - m2) ** 2, axis=0, keepdims=True)
    o = (o - m2) * lax.rsqrt(v2 + BN_EPS) * g2 + b2
    o = jnp.maximum(o, NEG_SLOPE * o)

    o = jnp.max(o.reshape(B * N, k, -1), axis=1)
    return o.reshape(B, N, -1), idx


# ----------------------------------------------------------------------------
def init_params(key, in_channels, hidden_channels, out_channels, edge_function):
    c_eff = in_channels * 2 if edge_function == 'local_global' else in_channels
    k1, k2 = jax.random.split(key)
    # 1x1 conv == dense (bias=False); BN gamma=1 / beta=0 like PyTorch defaults
    w1 = jax.random.normal(k1, (c_eff, hidden_channels), jnp.float32) * 0.1
    w2 = jax.random.normal(k2, (hidden_channels, out_channels), jnp.float32) * 0.1
    g1 = jnp.ones((1, hidden_channels), jnp.float32)
    b1 = jnp.zeros((1, hidden_channels), jnp.float32)
    g2 = jnp.ones((1, out_channels), jnp.float32)
    b2 = jnp.zeros((1, out_channels), jnp.float32)
    return (w1, g1, b1, w2, g2, b2)


if __name__ == "__main__":
    B, N, C_IN = 2, 128, 4
    HIDDEN, OUT = 32, 32
    K = 8
    EDGE_FN = 'local_global'

    key = jax.random.PRNGKey(0)
    kx, kp = jax.random.split(key)
    x = jax.random.normal(kx, (B, N, C_IN), jnp.float32)
    params = init_params(kp, C_IN, HIDDEN, OUT, EDGE_FN)

    idx = knn_jax(x, K)
    ref_out, _ = reference(x, params, edge_function=EDGE_FN, k=K, idx=idx)

    # tile_points=32 -> 8 grid steps: exercises tiled, per-tile-partial stats.
    out, idx_out = edge_graph_conv_block(
        x, params, edge_function=EDGE_FN, k=K, idx=idx, tile_points=32)
    out = jax.block_until_ready(out)
    assert out.shape == (B, N, OUT)
    assert idx_out.shape == (B, N, K)
    assert bool(jnp.array_equal(idx_out, idx))
    assert jnp.allclose(out, ref_out, atol=3e-3, rtol=3e-3)

    # tile_points=48 -> M (=256) padded to 288: exercises the zero-padded /
    # masked-statistics path.
    out2, _ = edge_graph_conv_block(
        x, params, edge_function=EDGE_FN, k=K, idx=idx, tile_points=48)
    out2 = jax.block_until_ready(out2)
    assert jnp.allclose(out2, ref_out, atol=3e-3, rtol=3e-3)

    print("KERNEL_OK")
</pallas_src>

<mosaic_0001>
module attributes {stable_mosaic.version = 11 : i64} {
  func.func @_stats1_kernel(%arg0: i32, %arg1: memref<256x8xbf16, #tpu.memory_space<vmem>>, %arg2: memref<32x8xbf16, #tpu.memory_space<vmem>>, %arg3: memref<8x32xbf16, #tpu.memory_space<vmem>>, %arg4: memref<8x32xbf16, #tpu.memory_space<vmem>>, %arg5: memref<1x8x32xf32, #tpu.memory_space<vmem>>, %arg6: memref<1x8x32xf32, #tpu.memory_space<vmem>>) attributes {dimension_semantics = [#tpu.dimension_semantics<parallel>], iteration_bounds = array<i64: 8>, scalar_prefetch = 0 : i64, scratch_operands = 0 : i64, tpu.core_type = #tpu.core_type<tc>, window_params = [{transform_indices = @transform_0, window_bounds = array<i64: 256, 8>}, {transform_indices = @transform_1, window_bounds = array<i64: 32, 8>}, {pipeline_mode = #tpu.pipeline_mode<synchronous>, transform_indices = @transform_2, window_bounds = array<i64: 8, 32>}, {pipeline_mode = #tpu.pipeline_mode<synchronous>, transform_indices = @transform_3, window_bounds = array<i64: 8, 32>}, {transform_indices = @transform_4, window_bounds = array<i64: 1, 8, 32>}, {transform_indices = @transform_5, window_bounds = array<i64: 1, 8, 32>}]} {
    %c0 = arith.constant 0 : index
    %c0_0 = arith.constant 0 : index
    %0 = vector.load %arg1[%c0, %c0_0] : memref<256x8xbf16, #tpu.memory_space<vmem>>, vector<256x8xbf16>
    %c0_1 = arith.constant 0 : index
    %c0_2 = arith.constant 0 : index
    %1 = vector.load %arg3[%c0_1, %c0_2] : memref<8x32xbf16, #tpu.memory_space<vmem>>, vector<8x32xbf16>
    %cst = arith.constant dense<0.000000e+00> : vector<256x32xf32>
    %2 = tpu.matmul %0, %1, %cst {dimension_numbers = #tpu.dot_dimension_numbers<[1], [0], [0], [1], [0, 0, 1, 1], [], []>} : vector<256x8xbf16>, vector<8x32xbf16>, vector<256x32xf32> -> vector<256x32xf32>
    %c0_3 = arith.constant 0 : index
    %c0_4 = arith.constant 0 : index
    %3 = vector.load %arg2[%c0_3, %c0_4] : memref<32x8xbf16, #tpu.memory_space<vmem>>, vector<32x8xbf16>
    %c0_5 = arith.constant 0 : index
    %c0_6 = arith.constant 0 : index
    %4 = vector.load %arg4[%c0_5, %c0_6] : memref<8x32xbf16, #tpu.memory_space<vmem>>, vector<8x32xbf16>
    %cst_7 = arith.constant dense<0.000000e+00> : vector<32x32xf32>
    %5 = tpu.matmul %3, %4, %cst_7 {dimension_numbers = #tpu.dot_dimension_numbers<[1], [0], [0], [1], [0, 0, 1, 1], [], []>} : vector<32x8xbf16>, vector<8x32xbf16>, vector<32x32xf32> -> vector<32x32xf32>
    %6 = vector.shape_cast %2 : vector<256x32xf32> to vector<32x8x32xf32>
    %7 = vector.shape_cast %5 : vector<32x32xf32> to vector<32x1x32xf32>
    %8 = vector.broadcast %7 : vector<32x1x32xf32> to vector<32x8x32xf32>
    %9 = arith.addf %6, %8 : vector<32x8x32xf32>
    %10 = vector.shape_cast %9 : vector<32x8x32xf32> to vector<256x32xf32>
    %11 = vector.shape_cast %10 : vector<256x32xf32> to vector<32x8x32xf32>
    %cst_8 = arith.constant dense<0.000000e+00> : vector<8x32xf32>
    %12 = vector.multi_reduction <add>, %11, %cst_8 [0] : vector<32x8x32xf32> to vector<8x32xf32>
    %13 = vector.shape_cast %12 : vector<8x32xf32> to vector<1x8x32xf32>
    %c0_9 = arith.constant 0 : index
    %c0_10 = arith.constant 0 : index
    %c0_11 = arith.constant 0 : index
    %14 = vector.load %arg5[%c0_9, %c0_10, %c0_11] : memref<1x8x32xf32, #tpu.memory_space<vmem>>, vector<1x8x32xf32>
    tpu.vector_store %arg5[%c0_9, %c0_10, %c0_11], %13 {strides = array<i32>} : memref<1x8x32xf32, #tpu.memory_space<vmem>>, vector<1x8x32xf32>,
    %15 = arith.mulf %11, %11 : vector<32x8x32xf32>
    %cst_12 = arith.constant dense<0.000000e+00> : vector<8x32xf32>
    %16 = vector.multi_reduction <add>, %15, %cst_12 [0] : vector<32x8x32xf32> to vector<8x32xf32>
    %17 = vector.shape_cast %16 : vector<8x32xf32> to vector<1x8x32xf32>
    %c0_13 = arith.constant 0 : index
    %c0_14 = arith.constant 0 : index
    %c0_15 = arith.constant 0 : index
    %18 = vector.load %arg6[%c0_13, %c0_14, %c0_15] : memref<1x8x32xf32, #tpu.memory_space<vmem>>, vector<1x8x32xf32>
    tpu.vector_store %arg6[%c0_13, %c0_14, %c0_15], %17 {strides = array<i32>} : memref<1x8x32xf32, #tpu.memory_space<vmem>>, vector<1x8x32xf32>,
    return
  }
  func.func @transform_0(%arg0: i32) -> (i32, i32) {
    %c0_i32 = arith.constant 0 : i32
    %c0_i32_0 = arith.constant 0 : i32
    return %arg0, %c0_i32 : i32, i32
  }
  func.func @transform_1(%arg0: i32) -> (i32, i32) {
    %c0_i32 = arith.constant 0 : i32
    %c0_i32_0 = arith.constant 0 : i32
    return %arg0, %c0_i32 : i32, i32
  }
  func.func @transform_2(%arg0: i32) -> (i32, i32) {
    %c0_i32 = arith.constant 0 : i32
    %c0_i32_0 = arith.constant 0 : i32
    %c0_i32_1 = arith.constant 0 : i32
    return %c0_i32, %c0_i32_0 : i32, i32
  }
  func.func @transform_3(%arg0: i32) -> (i32, i32) {
    %c0_i32 = arith.constant 0 : i32
    %c0_i32_0 = arith.constant 0 : i32
    %c0_i32_1 = arith.constant 0 : i32
    return %c0_i32, %c0_i32_0 : i32, i32
  }
  func.func @transform_4(%arg0: i32) -> (i32, i32, i32) {
    %c0_i32 = arith.constant 0 : i32
    %c0_i32_0 = arith.constant 0 : i32
    %c0_i32_1 = arith.constant 0 : i32
    return %arg0, %c0_i32, %c0_i32_0 : i32, i32, i32
  }
  func.func @transform_5(%arg0: i32) -> (i32, i32, i32) {
    %c0_i32 = arith.constant 0 : i32
    %c0_i32_0 = arith.constant 0 : i32
    %c0_i32_1 = arith.constant 0 : i32
    return %arg0, %c0_i32, %c0_i32_0 : i32, i32, i32
  }
}

module attributes {stable_mosaic.version = 11 : i64} {
  func.func @_stats2_kernel(%arg0: i32, %arg1: memref<256x8xbf16, #tpu.memory_space<vmem>>, %arg2: memref<32x8xbf16, #tpu.memory_space<vmem>>, %arg3: memref<8x32xbf16, #tpu.memory_space<vmem>>, %arg4: memref<8x32xbf16, #tpu.memory_space<vmem>>, %arg5: memref<1x32xf32, #tpu.memory_space<vmem>>, %arg6: memref<1x32xf32, #tpu.memory_space<vmem>>, %arg7: memref<32x32xbf16, #tpu.memory_space<vmem>>, %arg8: memref<1x8x32xf32, #tpu.memory_space<vmem>>, %arg9: memref<1x8x32xf32, #tpu.memory_space<vmem>>) attributes {dimension_semantics = [#tpu.dimension_semantics<parallel>], iteration_bounds = array<i64: 8>, scalar_prefetch = 0 : i64, scratch_operands = 0 : i64, tpu.core_type = #tpu.core_type<tc>, window_params = [{transform_indices = @transform_0, window_bounds = array<i64: 256, 8>}, {transform_indices = @transform_1, window_bounds = array<i64: 32, 8>}, {pipeline_mode = #tpu.pipeline_mode<synchronous>, transform_indices = @transform_2, window_bounds = array<i64: 8, 32>}, {pipeline_mode = #tpu.pipeline_mode<synchronous>, transform_indices = @transform_3, window_bounds = array<i64: 8, 32>}, {pipeline_mode = #tpu.pipeline_mode<synchronous>, transform_indices = @transform_4, window_bounds = array<i64: 1, 32>}, {pipeline_mode = #tpu.pipeline_mode<synchronous>, transform_indices = @transform_5, window_bounds = array<i64: 1, 32>}, {pipeline_mode = #tpu.pipeline_mode<synchronous>, transform_indices = @transform_6, window_bounds = array<i64: 32, 32>}, {transform_indices = @transform_7, window_bounds = array<i64: 1, 8, 32>}, {transform_indices = @transform_8, window_bounds = array<i64: 1, 8, 32>}]} {
    %c0 = arith.constant 0 : index
    %c0_0 = arith.constant 0 : index
    %0 = vector.load %arg1[%c0, %c0_0] : memref<256x8xbf16, #tpu.memory_space<vmem>>, vector<256x8xbf16>
    %c0_1 = arith.constant 0 : index
    %c0_2 = arith.constant 0 : index
    %1 = vector.load %arg3[%c0_1, %c0_2] : memref<8x32xbf16, #tpu.memory_space<vmem>>, vector<8x32xbf16>
    %cst = arith.constant dense<0.000000e+00> : vector<256x32xf32>
    %2 = tpu.matmul %0, %1, %cst {dimension_numbers = #tpu.dot_dimension_numbers<[1], [0], [0], [1], [0, 0, 1, 1], [], []>} : vector<256x8xbf16>, vector<8x32xbf16>, vector<256x32xf32> -> vector<256x32xf32>
    %c0_3 = arith.constant 0 : index
    %c0_4 = arith.constant 0 : index
    %3 = vector.load %arg2[%c0_3, %c0_4] : memref<32x8xbf16, #tpu.memory_space<vmem>>, vector<32x8xbf16>
    %c0_5 = arith.constant 0 : index
    %c0_6 = arith.constant 0 : index
    %4 = vector.load %arg4[%c0_5, %c0_6] : memref<8x32xbf16, #tpu.memory_space<vmem>>, vector<8x32xbf16>
    %cst_7 = arith.constant dense<0.000000e+00> : vector<32x32xf32>
    %5 = tpu.matmul %3, %4, %cst_7 {dimension_numbers = #tpu.dot_dimension_numbers<[1], [0], [0], [1], [0, 0, 1, 1], [], []>} : vector<32x8xbf16>, vector<8x32xbf16>, vector<32x32xf32> -> vector<32x32xf32>
    %6 = vector.shape_cast %2 : vector<256x32xf32> to vector<32x8x32xf32>
    %7 = vector.shape_cast %5 : vector<32x32xf32> to vector<32x1x32xf32>
    %8 = vector.broadcast %7 : vector<32x1x32xf32> to vector<32x8x32xf32>
    %9 = arith.addf %6, %8 : vector<32x8x32xf32>
    %10 = vector.shape_cast %9 : vector<32x8x32xf32> to vector<256x32xf32>
    %c0_8 = arith.constant 0 : index
    %c0_9 = arith.constant 0 : index
    %11 = vector.load %arg5[%c0_8, %c0_9] : memref<1x32xf32, #tpu.memory_space<vmem>>, vector<1x32xf32>
    %12 = vector.broadcast %11 : vector<1x32xf32> to vector<256x32xf32>
    %13 = arith.mulf %10, %12 : vector<256x32xf32>
    %c0_10 = arith.constant 0 : index
    %c0_11 = arith.constant 0 : index
    %14 = vector.load %arg6[%c0_10, %c0_11] : memref<1x32xf32, #tpu.memory_space<vmem>>, vector<1x32xf32>
    %15 = vector.broadcast %14 : vector<1x32xf32> to vector<256x32xf32>
    %16 = arith.addf %13, %15 : vector<256x32xf32>
    %cst_12 = arith.constant 2.000000e-01 : f32
    %17 = vector.broadcast %cst_12 : f32 to vector<256x32xf32>
    %18 = arith.mulf %17, %16 : vector<256x32xf32>
    %19 = arith.maximumf %16, %18 : vector<256x32xf32>
    %20 = arith.truncf %19 : vector<256x32xf32> to vector<256x32xbf16>
    %c0_13 = arith.constant 0 : index
    %c0_14 = arith.constant 0 : index
    %21 = vector.load %arg7[%c0_13, %c0_14] : memref<32x32xbf16, #tpu.memory_space<vmem>>, vector<32x32xbf16>
    %cst_15 = arith.constant dense<0.000000e+00> : vector<256x32xf32>
    %22 = tpu.matmul %20, %21, %cst_15 {dimension_numbers = #tpu.dot_dimension_numbers<[1], [0], [0], [1], [0, 0, 1, 1], [], []>} : vector<256x32xbf16>, vector<32x32xbf16>, vector<256x32xf32> -> vector<256x32xf32>
    %23 = vector.shape_cast %22 : vector<256x32xf32> to vector<32x8x32xf32>
    %cst_16 = arith.constant dense<0.000000e+00> : vector<8x32xf32>
    %24 = vector.multi_reduction <add>, %23, %cst_16 [0] : vector<32x8x32xf32> to vector<8x32xf32>
    %25 = vector.shape_cast %24 : vector<8x32xf32> to vector<1x8x32xf32>
    %c0_17 = arith.constant 0 : index
    %c0_18 = arith.constant 0 : index
    %c0_19 = arith.constant 0 : index
    %26 = vector.load %arg8[%c0_17, %c0_18, %c0_19] : memref<1x8x32xf32, #tpu.memory_space<vmem>>, vector<1x8x32xf32>
    tpu.vector_store %arg8[%c0_17, %c0_18, %c0_19], %25 {strides = array<i32>} : memref<1x8x32xf32, #tpu.memory_space<vmem>>, vector<1x8x32xf32>,
    %27 = arith.mulf %23, %23 : vector<32x8x32xf32>
    %cst_20 = arith.constant dense<0.000000e+00> : vector<8x32xf32>
    %28 = vector.multi_reduction <add>, %27, %cst_20 [0] : vector<32x8x32xf32> to vector<8x32xf32>
    %29 = vector.shape_cast %28 : vector<8x32xf32> to vector<1x8x32xf32>
    %c0_21 = arith.constant 0 : index
    %c0_22 = arith.constant 0 : index
    %c0_23 = arith.constant 0 : index
    %30 = vector.load %arg9[%c0_21, %c0_22, %c0_23] : memref<1x8x32xf32, #tpu.memory_space<vmem>>, vector<1x8x32xf32>
    tpu.vector_store %arg9[%c0_21, %c0_22, %c0_23], %29 {strides = array<i32>} : memref<1x8x32xf32, #tpu.memory_space<vmem>>, vector<1x8x32xf32>,
    return
  }
  func.func @transform_0(%arg0: i32) -> (i32, i32) {
    %c0_i32 = arith.constant 0 : i32
    %c0_i32_0 = arith.constant 0 : i32
    return %arg0, %c0_i32 : i32, i32
  }
  func.func @transform_1(%arg0: i32) -> (i32, i32) {
    %c0_i32 = arith.constant 0 : i32
    %c0_i32_0 = arith.constant 0 : i32
    return %arg0, %c0_i32 : i32, i32
  }
  func.func @transform_2(%arg0: i32) -> (i32, i32) {
    %c0_i32 = arith.constant 0 : i32
    %c0_i32_0 = arith.constant 0 : i32
    %c0_i32_1 = arith.constant 0 : i32
    return %c0_i32, %c0_i32_0 : i32, i32
  }
  func.func @transform_3(%arg0: i32) -> (i32, i32) {
    %c0_i32 = arith.constant 0 : i32
    %c0_i32_0 = arith.constant 0 : i32
    %c0_i32_1 = arith.constant 0 : i32
    return %c0_i32, %c0_i32_0 : i32, i32
  }
  func.func @transform_4(%arg0: i32) -> (i32, i32) {
    %c0_i32 = arith.constant 0 : i32
    %c0_i32_0 = arith.constant 0 : i32
    %c0_i32_1 = arith.constant 0 : i32
    return %c0_i32, %c0_i32_0 : i32, i32
  }
  func.func @transform_5(%arg0: i32) -> (i32, i32) {
    %c0_i32 = arith.constant 0 : i32
    %c0_i32_0 = arith.constant 0 : i32
    %c0_i32_1 = arith.constant 0 : i32
    return %c0_i32, %c0_i32_0 : i32, i32
  }
  func.func @transform_6(%arg0: i32) -> (i32, i32) {
    %c0_i32 = arith.constant 0 : i32
    %c0_i32_0 = arith.constant 0 : i32
    %c0_i32_1 = arith.constant 0 : i32
    return %c0_i32, %c0_i32_0 : i32, i32
  }
  func.func @transform_7(%arg0: i32) -> (i32, i32, i32) {
    %c0_i32 = arith.constant 0 : i32
    %c0_i32_0 = arith.constant 0 : i32
    %c0_i32_1 = arith.constant 0 : i32
    return %arg0, %c0_i32, %c0_i32_0 : i32, i32, i32
  }
  func.func @transform_8(%arg0: i32) -> (i32, i32, i32) {
    %c0_i32 = arith.constant 0 : i32
    %c0_i32_0 = arith.constant 0 : i32
    %c0_i32_1 = arith.constant 0 : i32
    return %arg0, %c0_i32, %c0_i32_0 : i32, i32, i32
  }
}

module attributes {stable_mosaic.version = 11 : i64} {
  func.func @_final_kernel(%arg0: i32, %arg1: memref<256x8xbf16, #tpu.memory_space<vmem>>, %arg2: memref<32x8xbf16, #tpu.memory_space<vmem>>, %arg3: memref<8x32xbf16, #tpu.memory_space<vmem>>, %arg4: memref<8x32xbf16, #tpu.memory_space<vmem>>, %arg5: memref<1x32xf32, #tpu.memory_space<vmem>>, %arg6: memref<1x32xf32, #tpu.memory_space<vmem>>, %arg7: memref<32x32xbf16, #tpu.memory_space<vmem>>, %arg8: memref<1x32xf32, #tpu.memory_space<vmem>>, %arg9: memref<1x32xf32, #tpu.memory_space<vmem>>, %arg10: memref<32x32xf32, #tpu.memory_space<vmem>>) attributes {dimension_semantics = [#tpu.dimension_semantics<parallel>], iteration_bounds = array<i64: 8>, scalar_prefetch = 0 : i64, scratch_operands = 0 : i64, tpu.core_type = #tpu.core_type<tc>, window_params = [{transform_indices = @transform_0, window_bounds = array<i64: 256, 8>}, {transform_indices = @transform_1, window_bounds = array<i64: 32, 8>}, {pipeline_mode = #tpu.pipeline_mode<synchronous>, transform_indices = @transform_2, window_bounds = array<i64: 8, 32>}, {pipeline_mode = #tpu.pipeline_mode<synchronous>, transform_indices = @transform_3, window_bounds = array<i64: 8, 32>}, {pipeline_mode = #tpu.pipeline_mode<synchronous>, transform_indices = @transform_4, window_bounds = array<i64: 1, 32>}, {pipeline_mode = #tpu.pipeline_mode<synchronous>, transform_indices = @transform_5, window_bounds = array<i64: 1, 32>}, {pipeline_mode = #tpu.pipeline_mode<synchronous>, transform_indices = @transform_6, window_bounds = array<i64: 32, 32>}, {pipeline_mode = #tpu.pipeline_mode<synchronous>, transform_indices = @transform_7, window_bounds = array<i64: 1, 32>}, {pipeline_mode = #tpu.pipeline_mode<synchronous>, transform_indices = @transform_8, window_bounds = array<i64: 1, 32>}, {transform_indices = @transform_9, window_bounds = array<i64: 32, 32>}]} {
    %c0 = arith.constant 0 : index
    %c0_0 = arith.constant 0 : index
    %0 = vector.load %arg1[%c0, %c0_0] : memref<256x8xbf16, #tpu.memory_space<vmem>>, vector<256x8xbf16>
    %c0_1 = arith.constant 0 : index
    %c0_2 = arith.constant 0 : index
    %1 = vector.load %arg3[%c0_1, %c0_2] : memref<8x32xbf16, #tpu.memory_space<vmem>>, vector<8x32xbf16>
    %cst = arith.constant dense<0.000000e+00> : vector<256x32xf32>
    %2 = tpu.matmul %0, %1, %cst {dimension_numbers = #tpu.dot_dimension_numbers<[1], [0], [0], [1], [0, 0, 1, 1], [], []>} : vector<256x8xbf16>, vector<8x32xbf16>, vector<256x32xf32> -> vector<256x32xf32>
    %c0_3 = arith.constant 0 : index
    %c0_4 = arith.constant 0 : index
    %3 = vector.load %arg2[%c0_3, %c0_4] : memref<32x8xbf16, #tpu.memory_space<vmem>>, vector<32x8xbf16>
    %c0_5 = arith.constant 0 : index
    %c0_6 = arith.constant 0 : index
    %4 = vector.load %arg4[%c0_5, %c0_6] : memref<8x32xbf16, #tpu.memory_space<vmem>>, vector<8x32xbf16>
    %cst_7 = arith.constant dense<0.000000e+00> : vector<32x32xf32>
    %5 = tpu.matmul %3, %4, %cst_7 {dimension_numbers = #tpu.dot_dimension_numbers<[1], [0], [0], [1], [0, 0, 1, 1], [], []>} : vector<32x8xbf16>, vector<8x32xbf16>, vector<32x32xf32> -> vector<32x32xf32>
    %6 = vector.shape_cast %2 : vector<256x32xf32> to vector<32x8x32xf32>
    %7 = vector.shape_cast %5 : vector<32x32xf32> to vector<32x1x32xf32>
    %8 = vector.broadcast %7 : vector<32x1x32xf32> to vector<32x8x32xf32>
    %9 = arith.addf %6, %8 : vector<32x8x32xf32>
    %10 = vector.shape_cast %9 : vector<32x8x32xf32> to vector<256x32xf32>
    %c0_8 = arith.constant 0 : index
    %c0_9 = arith.constant 0 : index
    %11 = vector.load %arg5[%c0_8, %c0_9] : memref<1x32xf32, #tpu.memory_space<vmem>>, vector<1x32xf32>
    %12 = vector.broadcast %11 : vector<1x32xf32> to vector<256x32xf32>
    %13 = arith.mulf %10, %12 : vector<256x32xf32>
    %c0_10 = arith.constant 0 : index
    %c0_11 = arith.constant 0 : index
    %14 = vector.load %arg6[%c0_10, %c0_11] : memref<1x32xf32, #tpu.memory_space<vmem>>, vector<1x32xf32>
    %15 = vector.broadcast %14 : vector<1x32xf32> to vector<256x32xf32>
    %16 = arith.addf %13, %15 : vector<256x32xf32>
    %cst_12 = arith.constant 2.000000e-01 : f32
    %17 = vector.broadcast %cst_12 : f32 to vector<256x32xf32>
    %18 = arith.mulf %17, %16 : vector<256x32xf32>
    %19 = arith.maximumf %16, %18 : vector<256x32xf32>
    %20 = arith.truncf %19 : vector<256x32xf32> to vector<256x32xbf16>
    %c0_13 = arith.constant 0 : index
    %c0_14 = arith.constant 0 : index
    %21 = vector.load %arg7[%c0_13, %c0_14] : memref<32x32xbf16, #tpu.memory_space<vmem>>, vector<32x32xbf16>
    %cst_15 = arith.constant dense<0.000000e+00> : vector<256x32xf32>
    %22 = tpu.matmul %20, %21, %cst_15 {dimension_numbers = #tpu.dot_dimension_numbers<[1], [0], [0], [1], [0, 0, 1, 1], [], []>} : vector<256x32xbf16>, vector<32x32xbf16>, vector<256x32xf32> -> vector<256x32xf32>
    %c0_16 = arith.constant 0 : index
    %c0_17 = arith.constant 0 : index
    %23 = vector.load %arg8[%c0_16, %c0_17] : memref<1x32xf32, #tpu.memory_space<vmem>>, vector<1x32xf32>
    %24 = vector.broadcast %23 : vector<1x32xf32> to vector<256x32xf32>
    %25 = arith.mulf %22, %24 : vector<256x32xf32>
    %c0_18 = arith.constant 0 : index
    %c0_19 = arith.constant 0 : index
    %26 = vector.load %arg9[%c0_18, %c0_19] : memref<1x32xf32, #tpu.memory_space<vmem>>, vector<1x32xf32>
    %27 = vector.broadcast %26 : vector<1x32xf32> to vector<256x32xf32>
    %28 = arith.addf %25, %27 : vector<256x32xf32>
    %cst_20 = arith.constant 2.000000e-01 : f32
    %29 = vector.broadcast %cst_20 : f32 to vector<256x32xf32>
    %30 = arith.mulf %29, %28 : vector<256x32xf32>
    %31 = arith.maximumf %28, %30 : vector<256x32xf32>
    %32 = vector.shape_cast %31 : vector<256x32xf32> to vector<32x8x32xf32>
    %cst_21 = arith.constant dense<0xFF800000> : vector<32x32xf32>
    %33 = vector.multi_reduction <maximumf>, %32, %cst_21 [1] : vector<32x8x32xf32> to vector<32x32xf32>
    %c0_22 = arith.constant 0 : index
    %c0_23 = arith.constant 0 : index
    %34 = vector.load %arg10[%c0_22, %c0_23] : memref<32x32xf32, #tpu.memory_space<vmem>>, vector<32x32xf32>
    tpu.vector_store %arg10[%c0_22, %c0_23], %33 {strides = array<i32>} : memref<32x32xf32, #tpu.memory_space<vmem>>, vector<32x32xf32>,
    return
  }
  func.func @transform_0(%arg0: i32) -> (i32, i32) {
    %c0_i32 = arith.constant 0 : i32
    %c0_i32_0 = arith.constant 0 : i32
    return %arg0, %c0_i32 : i32, i32
  }
  func.func @transform_1(%arg0: i32) -> (i32, i32) {
    %c0_i32 = arith.constant 0 : i32
    %c0_i32_0 = arith.constant 0 : i32
    return %arg0, %c0_i32 : i32, i32
  }
  func.func @transform_2(%arg0: i32) -> (i32, i32) {
    %c0_i32 = arith.constant 0 : i32
    %c0_i32_0 = arith.constant 0 : i32
    %c0_i32_1 = arith.constant 0 : i32
    return %c0_i32, %c0_i32_0 : i32, i32
  }
  func.func @transform_3(%arg0: i32) -> (i32, i32) {
    %c0_i32 = arith.constant 0 : i32
    %c0_i32_0 = arith.constant 0 : i32
    %c0_i32_1 = arith.constant 0 : i32
    return %c0_i32, %c0_i32_0 : i32, i32
  }
  func.func @transform_4(%arg0: i32) -> (i32, i32) {
    %c0_i32 = arith.constant 0 : i32
    %c0_i32_0 = arith.constant 0 : i32
    %c0_i32_1 = arith.constant 0 : i32
    return %c0_i32, %c0_i32_0 : i32, i32
  }
  func.func @transform_5(%arg0: i32) -> (i32, i32) {
    %c0_i32 = arith.constant 0 : i32
    %c0_i32_0 = arith.constant 0 : i32
    %c0_i32_1 = arith.constant 0 : i32
    return %c0_i32, %c0_i32_0 : i32, i32
  }
  func.func @transform_6(%arg0: i32) -> (i32, i32) {
    %c0_i32 = arith.constant 0 : i32
    %c0_i32_0 = arith.constant 0 : i32
    %c0_i32_1 = arith.constant 0 : i32
    return %c0_i32, %c0_i32_0 : i32, i32
  }
  func.func @transform_7(%arg0: i32) -> (i32, i32) {
    %c0_i32 = arith.constant 0 : i32
    %c0_i32_0 = arith.constant 0 : i32
    %c0_i32_1 = arith.constant 0 : i32
    return %c0_i32, %c0_i32_0 : i32, i32
  }
  func.func @transform_8(%arg0: i32) -> (i32, i32) {
    %c0_i32 = arith.constant 0 : i32
    %c0_i32_0 = arith.constant 0 : i32
    %c0_i32_1 = arith.constant 0 : i32
    return %c0_i32, %c0_i32_0 : i32, i32
  }
  func.func @transform_9(%arg0: i32) -> (i32, i32) {
    %c0_i32 = arith.constant 0 : i32
    %c0_i32_0 = arith.constant 0 : i32
    return %arg0, %c0_i32 : i32, i32
  }
}

</mosaic_0001>

<llo_original>
// kernel: edge_graph_conv_block.3
$region0: #{edge_graph_conv_block.3}
  #allocation0 [shape = 'u32[]', space=smem, size = 0x4, offset = 0x4, fixed_abs, tag = 'smem constant byte address 0x4 - core index']
  #allocation1 [shape = 'u32[144,128]{1,0:T(1,128)}', space=vmem, size = 0x12000, scoped, tag = 'internal scratch']
  %s0 = inlined_call_operand.vmem [shape: bf16[2048,8], index: 0, kind: input, shape index: {}]
  %s1 = inlined_call_operand.vmem [shape: bf16[256,8], index: 1, kind: input, shape index: {}]
  %s2 = inlined_call_operand.vmem [shape: bf16[8,32], index: 2, kind: input, shape index: {}]
  %s3 = inlined_call_operand.vmem [shape: bf16[8,32], index: 3, kind: input, shape index: {}]
  %s4 = inlined_call_operand.vmem [shape: f32[8,8,32], index: 4, kind: output, shape index: {0}]
  %s5 = inlined_call_operand.vmem [shape: f32[8,8,32], index: 5, kind: output, shape index: {1}]
  %6 = xla_tuple %s4, %s5
  %s7 = sld [smem:[#allocation0]]
  $region57: #{edge_graph_conv_block.3} parent=0
    _
  %s9 = ssub.s32 1, %s7
  %s10 = scalar_select 0, %s9, %s7
  loop: start=0, step=1, limit=10
  $region2: #{edge_graph_conv_block.3} parent=0 // loop_pre_header
    _
  $region3: #{edge_graph_conv_block.3} parent=0 // loop_header
    %s12 = sphi 0, %s16
    %p13 = scmp.ge.s32.totalorder %s12, 10
    %s22 = sphi 0, %s24
    %s25 = sphi 0, %s22
    %s26 = sphi 0, %s25
    %s42 = sphi 0, %s26
    %s48 = sphi 0, %s50
    %s51 = sphi 0, %s48
    %s52 = sphi 0, %s51
    %s68 = sphi 0, %s52
    %s72 = sphi 0, %s72
    %s74 = sphi 0, %s72
    %s75 = sphi 0, %s74
    %s89 = sphi 0, %s75
    %s93 = sphi 0, %s93
    %s95 = sphi 0, %s93
    %s96 = sphi 0, %s95
    %s110 = sphi 0, %s96
    %s116 = sphi 0, %s118
    %s119 = sphi 0, %s116
    %s120 = sphi 0, %s119
    %s136 = sphi 0, %s120
    %s142 = sphi 0, %s144
    %s145 = sphi 0, %s142
    %s146 = sphi 0, %s145
    %s162 = sphi 0, %s146
  $region4: #{edge_graph_conv_block.3} parent=0 // loop_header_branch
    %15 = sbr.rel (%p13) target = $region8
  $region5: #{edge_graph_conv_block.3} parent=0 // loop_body
    %s17 = ssub.s32 %s12, 1
    %s18 = ssub.s32 %s12, 2
    %s19 = sadd.s32 %s12, 1
    %s20 = ssub.s32 %s12, %s19
    %p21 = scmp.eq.s32.totalorder %s20, 0
    %s23 = sadd.s32 %s22, 1
    %s24 = scalar_select %p21, %s22, %s23
    %p27 = pneg %p21
    %p28 = scmp.eq.s32.totalorder %s12, 7
    %p29 = por %p27, %p28
    %p30 = scmp.ne.s32.totalorder %s22, %s25
    %p31 = scmp.eq.s32.totalorder %s12, 0
    %p32 = por %p30, %p31
    %p33 = scmp.ne.s32.totalorder %s22, %s25
    %p34 = scmp.eq.s32.totalorder %s17, 7
    %p35 = por %p33, %p34
    %p36 = scmp.ne.s32.totalorder %s25, %s26
    %p37 = scmp.eq.s32.totalorder %s17, 0
    %p38 = por %p36, %p37
    %p39 = scmp.ne.s32.totalorder %s25, %s26
    %p40 = scmp.eq.s32.totalorder %s18, 7
    %p41 = por %p39, %p40
    %p43 = scmp.ne.s32.totalorder %s26, %s42
    %p44 = scmp.eq.s32.totalorder %s18, 0
    %p45 = por %p43, %p44
    %s46 = ssub.s32 %s12, %s19
    %p47 = scmp.eq.s32.totalorder %s46, 0
    %s49 = sadd.s32 %s48, 1
    %s50 = scalar_select %p47, %s48, %s49
    %p53 = pneg %p47
    %p54 = scmp.eq.s32.totalorder %s12, 7
    %p55 = por %p53, %p54
    %p56 = scmp.ne.s32.totalorder %s48, %s51
    %p57 = scmp.eq.s32.totalorder %s12, 0
    %p58 = por %p56, %p57
    %p59 = scmp.ne.s32.totalorder %s48, %s51
    %p60 = scmp.eq.s32.totalorder %s17, 7
    %p61 = por %p59, %p60
    %p62 = scmp.ne.s32.totalorder %s51, %s52
    %p63 = scmp.eq.s32.totalorder %s17, 0
    %p64 = por %p62, %p63
    %p65 = scmp.ne.s32.totalorder %s51, %s52
    %p66 = scmp.eq.s32.totalorder %s18, 7
    %p67 = por %p65, %p66
    %p69 = scmp.ne.s32.totalorder %s52, %s68
    %p70 = scmp.eq.s32.totalorder %s18, 0
    %p71 = por %p69, %p70
    %s73 = sadd.s32 %s72, 1
    %p76 = scmp.eq.s32.totalorder %s12, 7
    %p77 = scmp.ne.s32.totalorder %s72, %s74
    %p78 = scmp.eq.s32.totalorder %s12, 0
    %p79 = por %p77, %p78
    %p80 = scmp.ne.s32.totalorder %s72, %s74
    %p81 = scmp.eq.s32.totalorder %s17, 7
    %p82 = por %p80, %p81
    %p83 = scmp.ne.s32.totalorder %s74, %s75
    %p84 = scmp.eq.s32.totalorder %s17, 0
    %p85 = por %p83, %p84
    %p86 = scmp.ne.s32.totalorder %s74, %s75
    %p87 = scmp.eq.s32.totalorder %s18, 7
    %p88 = por %p86, %p87
    %p90 = scmp.ne.s32.totalorder %s75, %s89
    %p91 = scmp.eq.s32.totalorder %s18, 0
    %p92 = por %p90, %p91
    %s94 = sadd.s32 %s93, 1
    %p97 = scmp.eq.s32.totalorder %s12, 7
    %p98 = scmp.ne.s32.totalorder %s93, %s95
    %p99 = scmp.eq.s32.totalorder %s12, 0
    %p100 = por %p98, %p99
    %p101 = scmp.ne.s32.totalorder %s93, %s95
    %p102 = scmp.eq.s32.totalorder %s17, 7
    %p103 = por %p101, %p102
    %p104 = scmp.ne.s32.totalorder %s95, %s96
    %p105 = scmp.eq.s32.totalorder %s17, 0
    %p106 = por %p104, %p105
    %p107 = scmp.ne.s32.totalorder %s95, %s96
    %p108 = scmp.eq.s32.totalorder %s18, 7
    %p109 = por %p107, %p108
    %p111 = scmp.ne.s32.totalorder %s96, %s110
    %p112 = scmp.eq.s32.totalorder %s18, 0
    %p113 = por %p111, %p112
    %s114 = ssub.s32 %s12, %s19
    %p115 = scmp.eq.s32.totalorder %s114, 0
    %s117 = sadd.s32 %s116, 1
    %s118 = scalar_select %p115, %s116, %s117
    %p121 = pneg %p115
    %p122 = scmp.eq.s32.totalorder %s12, 7
    %p123 = por %p121, %p122
    %p124 = scmp.ne.s32.totalorder %s116, %s119
    %p125 = scmp.eq.s32.totalorder %s12, 0
    %p126 = por %p124, %p125
    %p127 = scmp.ne.s32.totalorder %s116, %s119
    %p128 = scmp.eq.s32.totalorder %s17, 7
    %p129 = por %p127, %p128
    %p130 = scmp.ne.s32.totalorder %s119, %s120
    %p131 = scmp.eq.s32.totalorder %s17, 0
    %p132 = por %p130, %p131
    %p133 = scmp.ne.s32.totalorder %s119, %s120
    %p134 = scmp.eq.s32.totalorder %s18, 7
    %p135 = por %p133, %p134
    %p137 = scmp.ne.s32.totalorder %s120, %s136
    %p138 = scmp.eq.s32.totalorder %s18, 0
    %p139 = por %p137, %p138
    %s140 = ssub.s32 %s12, %s19
    %p141 = scmp.eq.s32.totalorder %s140, 0
    %s143 = sadd.s32 %s142, 1
    %s144 = scalar_select %p141, %s142, %s143
    %p147 = pneg %p141
    %p148 = scmp.eq.s32.totalorder %s12, 7
    %p149 = por %p147, %p148
    %p150 = scmp.ne.s32.totalorder %s142, %s145
    %p151 = scmp.eq.s32.totalorder %s12, 0
    %p152 = por %p150, %p151
    %p153 = scmp.ne.s32.totalorder %s142, %s145
    %p154 = scmp.eq.s32.totalorder %s17, 7
    %p155 = por %p153, %p154
    %p156 = scmp.ne.s32.totalorder %s145, %s146
    %p157 = scmp.eq.s32.totalorder %s17, 0
    %p158 = por %p156, %p157
    %p159 = scmp.ne.s32.totalorder %s145, %s146
    %p160 = scmp.eq.s32.totalorder %s18, 7
    %p161 = por %p159, %p160
    %p163 = scmp.ne.s32.totalorder %s146, %s162
    %p164 = scmp.eq.s32.totalorder %s18, 0
    %p165 = por %p163, %p164
    %p166 = scmp.le.s32.totalorder 1, %s12
    %p167 = scmp.lt.s32.totalorder %s12, 9
    %p168 = pnand %p166, %p167
    %p169 = pneg %p168
    // Predicated region
    $region9: #{edge_graph_conv_block.3} parent=5 // pred_check
      _
    $region10: #{edge_graph_conv_block.3} parent=5 // pred_check_branch
      %171 = sbr.rel (%p168) target = $region12
    $region11: #{edge_graph_conv_block.3} parent=5 // pred_region
      %s172 = ssub.s32 %s12, 1
      // Predicated region
      $region13: #{edge_graph_conv_block.3} parent=11 // pred_check
        %p173 = pneg %p85
      $region14: #{edge_graph_conv_block.3} parent=11 // pred_check_branch
        %175 = sbr.rel (%p173) target = $region16
      $region15: #{edge_graph_conv_block.3} parent=11 // pred_region
        _
      $region16: #{edge_graph_conv_block.3} parent=11 // pred_fallthru
        _
      // Predicated region
      $region17: #{edge_graph_conv_block.3} parent=11 // pred_check
        %p176 = pneg %p106
      $region18: #{edge_graph_conv_block.3} parent=11 // pred_check_branch
        %178 = sbr.rel (%p176) target = $region20
      $region19: #{edge_graph_conv_block.3} parent=11 // pred_region
        _
      $region20: #{edge_graph_conv_block.3} parent=11 // pred_fallthru
        _
    $region12: #{edge_graph_conv_block.3} parent=5 // pred_fallthru
      _
    %p179 = scmp.lt.s32.totalorder %s12, 8
    // Predicated region
    $region21: #{edge_graph_conv_block.3} parent=5 // pred_check
      %p180 = pneg %p179
    $region22: #{edge_graph_conv_block.3} parent=5 // pred_check_branch
      %182 = sbr.rel (%p180) target = $region24
    $region23: #{edge_graph_conv_block.3} parent=5 // pred_region
      // Predicated region
      $region25: #{edge_graph_conv_block.3} parent=23 // pred_check
        %p183 = pneg %p32
      $region26: #{edge_graph_conv_block.3} parent=23 // pred_check_branch
        %185 = sbr.rel (%p183) target = $region28
      $region27: #{edge_graph_conv_block.3} parent=23 // pred_region
        %s186 = smul.u32 32, %s12
        %p187 = scmp.lt.s32.totalorder %s186, 255
        %s188 = scalar_select %p187, %s186, 255
        %s189 = smul.addr %s188, 4
        %s190 = scalar_lea.vmem %s0, %s189
        %s191 = smul.u32 32, %s12
      $region28: #{edge_graph_conv_block.3} parent=23 // pred_fallthru
        _
      // Predicated region
      $region29: #{edge_graph_conv_block.3} parent=23 // pred_check
        %p192 = pneg %p58
      $region30: #{edge_graph_conv_block.3} parent=23 // pred_check_branch
        %194 = sbr.rel (%p192) target = $region32
      $region31: #{edge_graph_conv_block.3} parent=23 // pred_region
        %s195 = smul.u32 4, %s12
        %p196 = scmp.lt.s32.totalorder %s195, 31
        %s197 = scalar_select %p196, %s195, 31
        %s198 = smul.addr %s197, 4
        %s199 = scalar_lea.vmem %s1, %s198
        %s200 = smul.u32 4, %s12
      $region32: #{edge_graph_conv_block.3} parent=23 // pred_fallthru
        _
    $region24: #{edge_graph_conv_block.3} parent=5 // pred_fallthru
      _
    %p201 = scmp.le.s32.totalorder 1, %s12
    %p202 = scmp.lt.s32.totalorder %s12, 9
    %p203 = pnand %p201, %p202
    %p204 = pneg %p203
    // Predicated region
    $region33: #{edge_graph_conv_block.3} parent=5 // pred_check
      _
    $region34: #{edge_graph_conv_block.3} parent=5 // pred_check_branch
      %206 = sbr.rel (%p203) target = $region36
    $region35: #{edge_graph_conv_block.3} parent=5 // pred_region
      %s207 = ssub.s32 %s12, 1
      %s208 = smul.u32 32, %s17
      %p209 = scmp.lt.s32.totalorder %s208, 255
      %s210 = scalar_select %p209, %s208, 255
      %s211 = smul.addr %s210, 4
      %s212 = scalar_lea.vmem %s0, %s211
      %p213 = pneg %p38
      %p214 = pneg %p35
      %s215 = smul.u32 4, %s17
      %p216 = scmp.lt.s32.totalorder %s215, 31
      %s217 = scalar_select %p216, %s215, 31
      %s218 = smul.addr %s217, 4
      %s219 = scalar_lea.vmem %s1, %s218
      %p220 = pneg %p64
      %p221 = pneg %p61
      %p222 = pneg %p85
      %p223 = pneg %p82
      %p224 = pneg %p106
      %p225 = pneg %p103
      %p226 = pneg %p132
      %p227 = pneg %p129
      %p228 = scmp.lt.s32.totalorder %s17, 7
      %s229 = scalar_select %p228, %s17, 7
      %s230 = smul.addr %s229, 8
      %s231 = scalar_lea.vmem %s4, %s230
      %p232 = pneg %p158
      %p233 = pneg %p155
      %p234 = scmp.lt.s32.totalorder %s17, 7
      %s235 = scalar_select %p234, %s17, 7
      %s236 = smul.addr %s235, 8
      %s237 = scalar_lea.vmem %s5, %s236
      %s238 = smul.u32 32, %s17
      %p239 = scmp.lt.s32.totalorder %s238, 255
      %s240 = scalar_select %p239, %s238, 255
      %s241 = smul.addr %s240, 4
      %s242 = scalar_lea.vmem %s0, %s241
      %s243 = smul.u32 32, %s17
      %s244 = smul.u32 4, %s17
      %p245 = scmp.lt.s32.totalorder %s244, 31
      %s246 = scalar_select %p245, %s244, 31
      %s247 = smul.addr %s246, 4
      %s248 = scalar_lea.vmem %s1, %s247
      %s249 = smul.u32 4, %s17
      %p250 = scmp.lt.s32.totalorder %s17, 7
      %s251 = scalar_select %p250, %s17, 7
      %s252 = smul.addr %s251, 8
      %s253 = scalar_lea.vmem %s4, %s252
      %p254 = scmp.lt.s32.totalorder %s17, 7
      %s255 = scalar_select %p254, %s17, 7
      %s256 = smul.addr %s255, 8
      %s257 = scalar_lea.vmem %s5, %s256
      %v259 = vld [vmem:[%s242] sm:$0xf]
      %v260 = vld [vmem:[%s242 + $0x4] sm:$0xf]
      %v261 = vld [vmem:[%s242 + $0x8] sm:$0xf]
      %v262 = vld [vmem:[%s242 + $0xc] sm:$0xf]
      %v263 = vld [vmem:[%s242 + $0x10] sm:$0xf]
      %v264 = vld [vmem:[%s242 + $0x14] sm:$0xf]
      %v265 = vld [vmem:[%s242 + $0x18] sm:$0xf]
      %v266 = vld [vmem:[%s242 + $0x1c] sm:$0xf]
      %v267 = vld [vmem:[%s242 + $0x20] sm:$0xf]
      %v268 = vld [vmem:[%s242 + $0x24] sm:$0xf]
      %v269 = vld [vmem:[%s242 + $0x28] sm:$0xf]
      %v270 = vld [vmem:[%s242 + $0x2c] sm:$0xf]
      %v271 = vld [vmem:[%s242 + $0x30] sm:$0xf]
      %v272 = vld [vmem:[%s242 + $0x34] sm:$0xf]
      %v273 = vld [vmem:[%s242 + $0x38] sm:$0xf]
      %v274 = vld [vmem:[%s242 + $0x3c] sm:$0xf]
      %v275 = vld [vmem:[%s242 + $0x40] sm:$0xf]
      %v276 = vld [vmem:[%s242 + $0x44] sm:$0xf]
      %v277 = vld [vmem:[%s242 + $0x48] sm:$0xf]
      %v278 = vld [vmem:[%s242 + $0x4c] sm:$0xf]
      %v279 = vld [vmem:[%s242 + $0x50] sm:$0xf]
      %v280 = vld [vmem:[%s242 + $0x54] sm:$0xf]
      %v281 = vld [vmem:[%s242 + $0x58] sm:$0xf]
      %v282 = vld [vmem:[%s242 + $0x5c] sm:$0xf]
      %v283 = vld [vmem:[%s242 + $0x60] sm:$0xf]
      %v284 = vld [vmem:[%s242 + $0x64] sm:$0xf]
      %v285 = vld [vmem:[%s242 + $0x68] sm:$0xf]
      %v286 = vld [vmem:[%s242 + $0x6c] sm:$0xf]
      %v287 = vld [vmem:[%s242 + $0x70] sm:$0xf]
      %v288 = vld [vmem:[%s242 + $0x74] sm:$0xf]
      %v289 = vld [vmem:[%s242 + $0x78] sm:$0xf]
      %v290 = vld [vmem:[%s242 + $0x7c] sm:$0xf]
      %v291 = vld [vmem:[%s2] sm:$0xf]
      %v324 = vunpack.c.l.b16 %v259
      %v325 = vunpack.c.l.b16 %v260
      %v326 = vunpack.c.l.b16 %v261
      %v327 = vunpack.c.l.b16 %v262
      %v328 = vunpack.c.l.b16 %v263
      %v329 = vunpack.c.l.b16 %v264
      %v330 = vunpack.c.l.b16 %v265
      %v331 = vunpack.c.l.b16 %v266
      %v332 = vunpack.c.l.b16 %v267
      %v333 = vunpack.c.l.b16 %v268
      %v334 = vunpack.c.l.b16 %v269
      %v335 = vunpack.c.l.b16 %v270
      %v336 = vunpack.c.l.b16 %v271
      %v337 = vunpack.c.l.b16 %v272
      %v338 = vunpack.c.l.b16 %v273
      %v339 = vunpack.c.l.b16 %v274
      %v340 = vunpack.c.l.b16 %v275
      %v341 = vunpack.c.l.b16 %v276
      %v342 = vunpack.c.l.b16 %v277
      %v343 = vunpack.c.l.b16 %v278
      %v344 = vunpack.c.l.b16 %v279
      %v345 = vunpack.c.l.b16 %v280
      %v346 = vunpack.c.l.b16 %v281
      %v347 = vunpack.c.l.b16 %v282
      %v348 = vunpack.c.l.b16 %v283
      %v349 = vunpack.c.l.b16 %v284
      %v350 = vunpack.c.l.b16 %v285
      %v351 = vunpack.c.l.b16 %v286
      %v352 = vunpack.c.l.b16 %v287
      %v353 = vunpack.c.l.b16 %v288
      %v354 = vunpack.c.l.b16 %v289
      %v355 = vunpack.c.l.b16 %v290
      %v356 = vpack.c.b16 %v325, %v324
      %v357 = vpack.c.b16 %v327, %v326
      %v358 = vpack.c.b16 %v329, %v328
      %v359 = vpack.c.b16 %v331, %v330
      %v360 = vpack.c.b16 %v333, %v332
      %v361 = vpack.c.b16 %v335, %v334
      %v362 = vpack.c.b16 %v337, %v336
      %v363 = vpack.c.b16 %v339, %v338
      %v364 = vpack.c.b16 %v341, %v340
      %v365 = vpack.c.b16 %v343, %v342
      %v366 = vpack.c.b16 %v345, %v344
      %v367 = vpack.c.b16 %v347, %v346
      %v368 = vpack.c.b16 %v349, %v348
      %v369 = vpack.c.b16 %v351, %v350
      %v370 = vpack.c.b16 %v353, %v352
      %v371 = vpack.c.b16 %v355, %v354
      %vm372 = vcmask 64512
      %v374 = vsel %vm372, %v356, 0
      %v377 = vsel %vm372, %v357, 0
      %v380 = vsel %vm372, %v358, 0
      %v383 = vsel %vm372, %v359, 0
      %v386 = vsel %vm372, %v360, 0
      %v389 = vsel %vm372, %v361, 0
      %v392 = vsel %vm372, %v362, 0
      %v395 = vsel %vm372, %v363, 0
      %v398 = vsel %vm372, %v364, 0
      %v401 = vsel %vm372, %v365, 0
      %v404 = vsel %vm372, %v366, 0
      %v407 = vsel %vm372, %v367, 0
      %v410 = vsel %vm372, %v368, 0
      %v413 = vsel %vm372, %v369, 0
      %v416 = vsel %vm372, %v370, 0
      %v419 = vsel %vm372, %v371, 0
      %vm421 = vcmask 1043456
      %v423 = vsel %vm421, %v291, 0
      %425 = vmatprep.subr.bf16.mxu0 0
      %426 = vmatpush1.bf16.msra.mxu0 %v423
      %427 = vmatprep.subr.bf16.mxu0 0
      %428 = vmatpush1.bf16.msra.mxu0 0
      %429 = vmatprep.subr.bf16.mxu0 0
      %430 = vmatpush1.bf16.msra.mxu0 0
      %431 = vmatprep.subr.bf16.mxu0 0
      %432 = vmatpush1.bf16.msra.mxu0 0
      %433 = vmatprep.subr.bf16.mxu0 0
      %434 = vmatpush1.bf16.msra.mxu0 0
      %435 = vmatprep.subr.bf16.mxu0 0
      %436 = vmatpush1.bf16.msra.mxu0 0
      %437 = vmatprep.subr.bf16.mxu0 0
      %438 = vmatpush1.bf16.msra.mxu0 0
      %439 = vmatprep.subr.bf16.mxu0 0
      %440 = vmatpush1.bf16.msra.mxu0 0
      %441 = vmatprep.subr.bf16.mxu0 0
      %442 = vmatpush1.bf16.msra.mxu0 0
      %443 = vmatprep.subr.bf16.mxu0 0
      %444 = vmatpush1.bf16.msra.mxu0 0
      %445 = vmatprep.subr.bf16.mxu0 0
      %446 = vmatpush1.bf16.msra.mxu0 0
      %447 = vmatprep.subr.bf16.mxu0 0
      %448 = vmatpush1.bf16.msra.mxu0 0
      %449 = vmatprep.subr.bf16.mxu0 0
      %450 = vmatpush1.bf16.msra.mxu0 0
      %451 = vmatprep.subr.bf16.mxu0 0
      %452 = vmatpush1.bf16.msra.mxu0 0
      %453 = vmatprep.subr.bf16.mxu0 0
      %454 = vmatpush1.bf16.msra.mxu0 0
      %455 = vmatprep.subr.bf16.mxu0 0
      %456 = vmatpush1.bf16.msra.mxu0 0
      %457 = vmatprep.mubr.bf16.mxu0 0
      %458 = vmatmul.mubr.bf16.gmra.mrb[0].mxu0 %v374
      %v459 = vpop.f32.mrb[0].mxu0
      %v460 = vadd.f32 0.0, %v459
      %v461 = vpop.f32.mrb[0].mxu0
      %v462 = vpop.f32.mrb[0].mxu0
      %v463 = vadd.f32 0.0, %v462
      %v464 = vpop.f32.mrb[0].mxu0
      %465 = vmatprep.mubr.bf16.mxu0 0
      %466 = vmatmul.mubr.bf16.gmra.mrb[0].mxu0 %v377
      %v467 = vpop.f32.mrb[0].mxu0
      %v468 = vadd.f32 0.0, %v467
      %v469 = vpop.f32.mrb[0].mxu0
      %v470 = vpop.f32.mrb[0].mxu0
      %v471 = vadd.f32 0.0, %v470
      %v472 = vpop.f32.mrb[0].mxu0
      %473 = vmatprep.mubr.bf16.mxu0 0
      %474 = vmatmul.mubr.bf16.gmra.mrb[0].mxu0 %v380
      %v475 = vpop.f32.mrb[0].mxu0
      %v476 = vadd.f32 0.0, %v475
      %v477 = vpop.f32.mrb[0].mxu0
      %v478 = vpop.f32.mrb[0].mxu0
      %v479 = vadd.f32 0.0, %v478
      %v480 = vpop.f32.mrb[0].mxu0
      %481 = vmatprep.mubr.bf16.mxu0 0
      %482 = vmatmul.mubr.bf16.gmra.mrb[0].mxu0 %v383
      %v483 = vpop.f32.mrb[0].mxu0
      %v484 = vadd.f32 0.0, %v483
      %v485 = vpop.f32.mrb[0].mxu0
      %v486 = vpop.f32.mrb[0].mxu0
      %v487 = vadd.f32 0.0, %v486
      %v488 = vpop.f32.mrb[0].mxu0
      %489 = vmatprep.mubr.bf16.mxu0 0
      %490 = vmatmul.mubr.bf16.gmra.mrb[0].mxu0 %v386
      %v491 = vpop.f32.mrb[0].mxu0
      %v492 = vadd.f32 0.0, %v491
      %v493 = vpop.f32.mrb[0].mxu0
      %v494 = vpop.f32.mrb[0].mxu0
      %v495 = vadd.f32 0.0, %v494
      %v496 = vpop.f32.mrb[0].mxu0
      %497 = vmatprep.mubr.bf16.mxu0 0
      %498 = vmatmul.mubr.bf16.gmra.mrb[0].mxu0 %v389
      %v499 = vpop.f32.mrb[0].mxu0
      %v500 = vadd.f32 0.0, %v499
      %v501 = vpop.f32.mrb[0].mxu0
      %v502 = vpop.f32.mrb[0].mxu0
      %v503 = vadd.f32 0.0, %v502
      %v504 = vpop.f32.mrb[0].mxu0
      %505 = vmatprep.mubr.bf16.mxu0 0
      %506 = vmatmul.mubr.bf16.gmra.mrb[0].mxu0 %v392
      %v507 = vpop.f32.mrb[0].mxu0
      %v508 = vadd.f32 0.0, %v507
      %v509 = vpop.f32.mrb[0].mxu0
      %v510 = vpop.f32.mrb[0].mxu0
      %v511 = vadd.f32 0.0, %v510
      %v512 = vpop.f32.mrb[0].mxu0
      %513 = vmatprep.mubr.bf16.mxu0 0
      %514 = vmatmul.mubr.bf16.gmra.mrb[0].mxu0 %v395
      %v515 = vpop.f32.mrb[0].mxu0
      %v516 = vadd.f32 0.0, %v515
      %v517 = vpop.f32.mrb[0].mxu0
      %v518 = vpop.f32.mrb[0].mxu0
      %v519 = vadd.f32 0.0, %v518
      %v520 = vpop.f32.mrb[0].mxu0
      %521 = vmatprep.mubr.bf16.mxu0 0
      %522 = vmatmul.mubr.bf16.gmra.mrb[0].mxu0 %v398
      %v523 = vpop.f32.mrb[0].mxu0
      %v524 = vadd.f32 0.0, %v523
      %v525 = vpop.f32.mrb[0].mxu0
      %v526 = vpop.f32.mrb[0].mxu0
      %v527 = vadd.f32 0.0, %v526
      %v528 = vpop.f32.mrb[0].mxu0
      %529 = vmatprep.mubr.bf16.mxu0 0
      %530 = vmatmul.mubr.bf16.gmra.mrb[0].mxu0 %v401
      %v531 = vpop.f32.mrb[0].mxu0
      %v532 = vadd.f32 0.0, %v531
      %v533 = vpop.f32.mrb[0].mxu0
      %v534 = vpop.f32.mrb[0].mxu0
      %v535 = vadd.f32 0.0, %v534
      %v536 = vpop.f32.mrb[0].mxu0
      %537 = vmatprep.mubr.bf16.mxu0 0
      %538 = vmatmul.mubr.bf16.gmra.mrb[0].mxu0 %v404
      %v539 = vpop.f32.mrb[0].mxu0
      %v540 = vadd.f32 0.0, %v539
      %v541 = vpop.f32.mrb[0].mxu0
      %v542 = vpop.f32.mrb[0].mxu0
      %v543 = vadd.f32 0.0, %v542
      %v544 = vpop.f32.mrb[0].mxu0
      %545 = vmatprep.mubr.bf16.mxu0 0
      %546 = vmatmul.mubr.bf16.gmra.mrb[0].mxu0 %v407
      %v547 = vpop.f32.mrb[0].mxu0
      %v548 = vadd.f32 0.0, %v547
      %v549 = vpop.f32.mrb[0].mxu0
      %v550 = vpop.f32.mrb[0].mxu0
      %v551 = vadd.f32 0.0, %v550
      %v552 = vpop.f32.mrb[0].mxu0
      %553 = vmatprep.mubr.bf16.mxu0 0
      %554 = vmatmul.mubr.bf16.gmra.mrb[0].mxu0 %v410
      %v555 = vpop.f32.mrb[0].mxu0
      %v556 = vadd.f32 0.0, %v555
      %v557 = vpop.f32.mrb[0].mxu0
      %v558 = vpop.f32.mrb[0].mxu0
      %v559 = vadd.f32 0.0, %v558
      %v560 = vpop.f32.mrb[0].mxu0
      %561 = vmatprep.mubr.bf16.mxu0 0
      %562 = vmatmul.mubr.bf16.gmra.mrb[0].mxu0 %v413
      %v563 = vpop.f32.mrb[0].mxu0
      %v564 = vadd.f32 0.0, %v563
      %v565 = vpop.f32.mrb[0].mxu0
      %v566 = vpop.f32.mrb[0].mxu0
      %v567 = vadd.f32 0.0, %v566
      %v568 = vpop.f32.mrb[0].mxu0
      %569 = vmatprep.mubr.bf16.mxu0 0
      %570 = vmatmul.mubr.bf16.gmra.mrb[0].mxu0 %v416
      %v571 = vpop.f32.mrb[0].mxu0
      %v572 = vadd.f32 0.0, %v571
      %v573 = vpop.f32.mrb[0].mxu0
      %v574 = vpop.f32.mrb[0].mxu0
      %v575 = vadd.f32 0.0, %v574
      %v576 = vpop.f32.mrb[0].mxu0
      %577 = vmatprep.mubr.bf16.mxu0 0
      %578 = vmatmul.mubr.bf16.gmra.mrb[0].mxu0 %v419
      %v579 = vpop.f32.mrb[0].mxu0
      %v580 = vadd.f32 0.0, %v579
      %v581 = vpop.f32.mrb[0].mxu0
      %v582 = vpop.f32.mrb[0].mxu0
      %v583 = vadd.f32 0.0, %v582
      %v584 = vpop.f32.mrb[0].mxu0
      %585 = vdwg.mxu0
      %v586 = vld [vmem:[%s248] sm:$0xf]
      %v587 = vld [vmem:[%s248 + $0x4] sm:$0xf]
      %v588 = vld [vmem:[%s248 + $0x8] sm:$0xf]
      %v589 = vld [vmem:[%s248 + $0xc] sm:$0xf]
      %v590 = vld [vmem:[%s3] sm:$0xf]
      %v595 = vunpack.c.l.b16 %v586
      %v596 = vunpack.c.l.b16 %v587
      %v597 = vunpack.c.l.b16 %v588
      %v598 = vunpack.c.l.b16 %v589
      %v599 = vpack.c.b16 %v596, %v595
      %v600 = vpack.c.b16 %v598, %v597
      %v602 = vsel %vm372, %v599, 0
      %v605 = vsel %vm372, %v600, 0
      %v608 = vsel %vm421, %v590, 0
      %610 = vmatprep.subr.bf16.mxu0 0
      %611 = vmatpush1.bf16.msra.mxu0 %v608
      %612 = vmatprep.subr.bf16.mxu0 0
      %613 = vmatpush1.bf16.msra.mxu0 0
      %614 = vmatprep.subr.bf16.mxu0 0
      %615 = vmatpush1.bf16.msra.mxu0 0
      %616 = vmatprep.subr.bf16.mxu0 0
      %617 = vmatpush1.bf16.msra.mxu0 0
      %618 = vmatprep.subr.bf16.mxu0 0
      %619 = vmatpush1.bf16.msra.mxu0 0
      %620 = vmatprep.subr.bf16.mxu0 0
      %621 = vmatpush1.bf16.msra.mxu0 0
      %622 = vmatprep.subr.bf16.mxu0 0
      %623 = vmatpush1.bf16.msra.mxu0 0
      %624 = vmatprep.subr.bf16.mxu0 0
      %625 = vmatpush1.bf16.msra.mxu0 0
      %626 = vmatprep.subr.bf16.mxu0 0
      %627 = vmatpush1.bf16.msra.mxu0 0
      %628 = vmatprep.subr.bf16.mxu0 0
      %629 = vmatpush1.bf16.msra.mxu0 0
      %630 = vmatprep.subr.bf16.mxu0 0
      %631 = vmatpush1.bf16.msra.mxu0 0
      %632 = vmatprep.subr.bf16.mxu0 0
      %633 = vmatpush1.bf16.msra.mxu0 0
      %634 = vmatprep.subr.bf16.mxu0 0
      %635 = vmatpush1.bf16.msra.mxu0 0
      %636 = vmatprep.subr.bf16.mxu0 0
      %637 = vmatpush1.bf16.msra.mxu0 0
      %638 = vmatprep.subr.bf16.mxu0 0
      %639 = vmatpush1.bf16.msra.mxu0 0
      %640 = vmatprep.subr.bf16.mxu0 0
      %641 = vmatpush1.bf16.msra.mxu0 0
      %642 = vmatprep.mubr.bf16.mxu0 0
      %643 = vmatmul.mubr.bf16.gmra.mrb[0].mxu0 %v602
      %v644 = vpop.f32.mrb[0].mxu0
      %v645 = vadd.f32 0.0, %v644
      %v646 = vpop.f32.mrb[0].mxu0
      %v647 = vpop.f32.mrb[0].mxu0
      %v648 = vadd.f32 0.0, %v647
      %v649 = vpop.f32.mrb[0].mxu0
      %650 = vmatprep.mubr.bf16.mxu0 0
      %651 = vmatmul.mubr.bf16.gmra.mrb[0].mxu0 %v605
      %v652 = vpop.f32.mrb[0].mxu0
      %v653 = vadd.f32 0.0, %v652
      %v654 = vpop.f32.mrb[0].mxu0
      %v655 = vpop.f32.mrb[0].mxu0
      %v656 = vadd.f32 0.0, %v655
      %v657 = vpop.f32.mrb[0].mxu0
      %658 = vdwg.mxu0
      %v663 = vcombine.high %v645, %v645
      %v665 = vunpack.c.l.s4 1966171168
      %v666 = vunpack.c.0.s8 %v665
      %v667 = vlaneseq
      %v668 = vshrl.u32 %v667, 7
      %v669 = vsub.s32 %v666, %v668
      %v670 = vrot.slane %v645, %v669
      %v672 = vunpack.c.l.s4 1966171168
      %v673 = vunpack.c.0.s8 %v672
      %v674 = vlaneseq
      %v675 = vshrl.u32 %v674, 7
      %v676 = vsub.s32 %v673, %v675
      %v677 = vrot.slane %v663, %v676
      %v678 = vcombine.high %v670, %v670
      %v679 = vcombine.high %v677, %v677
      %v681 = vunpack.c.l.s4 1966171168
      %v682 = vunpack.c.0.s8 %v681
      %v683 = vlaneseq
      %v684 = vshrl.u32 %v683, 7
      %v685 = vsub.s32 %v682, %v684
      %v686 = vrot.slane %v670, %v685
      %v688 = vunpack.c.l.s4 1966171168
      %v689 = vunpack.c.0.s8 %v688
      %v690 = vlaneseq
      %v691 = vshrl.u32 %v690, 7
      %v692 = vsub.s32 %v689, %v691
      %v693 = vrot.slane %v677, %v692
      %v695 = vunpack.c.l.s4 1966171168
      %v696 = vunpack.c.0.s8 %v695
      %v697 = vlaneseq
      %v698 = vshrl.u32 %v697, 7
      %v699 = vsub.s32 %v696, %v698
      %v700 = vrot.slane %v678, %v699
      %v702 = vunpack.c.l.s4 1966171168
      %v703 = vunpack.c.0.s8 %v702
      %v704 = vlaneseq
      %v705 = vshrl.u32 %v704, 7
      %v706 = vsub.s32 %v703, %v705
      %v707 = vrot.slane %v679, %v706
      %v708 = vcombine.high %v686, %v686
      %v709 = vcombine.high %v693, %v693
      %v710 = vcombine.high %v700, %v700
      %v711 = vcombine.high %v707, %v707
      %v712 = vcombine.high %v648, %v648
      %v714 = vunpack.c.l.s4 1966171168
      %v715 = vunpack.c.0.s8 %v714
      %v716 = vlaneseq
      %v717 = vshrl.u32 %v716, 7
      %v718 = vsub.s32 %v715, %v717
      %v719 = vrot.slane %v648, %v718
      %v721 = vunpack.c.l.s4 1966171168
      %v722 = vunpack.c.0.s8 %v721
      %v723 = vlaneseq
      %v724 = vshrl.u32 %v723, 7
      %v725 = vsub.s32 %v722, %v724
      %v726 = vrot.slane %v712, %v725
      %v727 = vcombine.high %v719, %v719
      %v728 = vcombine.high %v726, %v726
      %v730 = vunpack.c.l.s4 1966171168
      %v731 = vunpack.c.0.s8 %v730
      %v732 = vlaneseq
      %v733 = vshrl.u32 %v732, 7
      %v734 = vsub.s32 %v731, %v733
      %v735 = vrot.slane %v719, %v734
      %v737 = vunpack.c.l.s4 1966171168
      %v738 = vunpack.c.0.s8 %v737
      %v739 = vlaneseq
      %v740 = vshrl.u32 %v739, 7
      %v741 = vsub.s32 %v738, %v740
      %v742 = vrot.slane %v726, %v741
      %v744 = vunpack.c.l.s4 1966171168
      %v745 = vunpack.c.0.s8 %v744
      %v746 = vlaneseq
      %v747 = vshrl.u32 %v746, 7
      %v748 = vsub.s32 %v745, %v747
      %v749 = vrot.slane %v727, %v748
      %v751 = vunpack.c.l.s4 1966171168
      %v752 = vunpack.c.0.s8 %v751
      %v753 = vlaneseq
      %v754 = vshrl.u32 %v753, 7
      %v755 = vsub.s32 %v752, %v754
      %v756 = vrot.slane %v728, %v755
      %v757 = vcombine.high %v735, %v735
      %v758 = vcombine.high %v742, %v742
      %v759 = vcombine.high %v749, %v749
      %v760 = vcombine.high %v756, %v756
      %v761 = vcombine.high %v653, %v653
      %v763 = vunpack.c.l.s4 1966171168
      %v764 = vunpack.c.0.s8 %v763
      %v765 = vlaneseq
      %v766 = vshrl.u32 %v765, 7
      %v767 = vsub.s32 %v764, %v766
      %v768 = vrot.slane %v653, %v767
      %v770 = vunpack.c.l.s4 1966171168
      %v771 = vunpack.c.0.s8 %v770
      %v772 = vlaneseq
      %v773 = vshrl.u32 %v772, 7
      %v774 = vsub.s32 %v771, %v773
      %v775 = vrot.slane %v761, %v774
      %v776 = vcombine.high %v768, %v768
      %v777 = vcombine.high %v775, %v775
      %v779 = vunpack.c.l.s4 1966171168
      %v780 = vunpack.c.0.s8 %v779
      %v781 = vlaneseq
      %v782 = vshrl.u32 %v781, 7
      %v783 = vsub.s32 %v780, %v782
      %v784 = vrot.slane %v768, %v783
      %v786 = vunpack.c.l.s4 1966171168
      %v787 = vunpack.c.0.s8 %v786
      %v788 = vlaneseq
      %v789 = vshrl.u32 %v788, 7
      %v790 = vsub.s32 %v787, %v789
      %v791 = vrot.slane %v775, %v790
      %v793 = vunpack.c.l.s4 1966171168
      %v794 = vunpack.c.0.s8 %v793
      %v795 = vlaneseq
      %v796 = vshrl.u32 %v795, 7
      %v797 = vsub.s32 %v794, %v796
      %v798 = vrot.slane %v776, %v797
      %v800 = vunpack.c.l.s4 1966171168
      %v801 = vunpack.c.0.s8 %v800
      %v802 = vlaneseq
      %v803 = vshrl.u32 %v802, 7
      %v804 = vsub.s32 %v801, %v803
      %v805 = vrot.slane %v777, %v804
      %v806 = vcombine.high %v784, %v784
      %v807 = vcombine.high %v791, %v791
      %v808 = vcombine.high %v798, %v798
      %v809 = vcombine.high %v805, %v805
      %v810 = vcombine.high %v656, %v656
      %v812 = vunpack.c.l.s4 1966171168
      %v813 = vunpack.c.0.s8 %v812
      %v814 = vlaneseq
      %v815 = vshrl.u32 %v814, 7
      %v816 = vsub.s32 %v813, %v815
      %v817 = vrot.slane %v656, %v816
      %v819 = vunpack.c.l.s4 1966171168
      %v820 = vunpack.c.0.s8 %v819
      %v821 = vlaneseq
      %v822 = vshrl.u32 %v821, 7
      %v823 = vsub.s32 %v820, %v822
      %v824 = vrot.slane %v810, %v823
      %v825 = vcombine.high %v817, %v817
      %v826 = vcombine.high %v824, %v824
      %v828 = vunpack.c.l.s4 1966171168
      %v829 = vunpack.c.0.s8 %v828
      %v830 = vlaneseq
      %v831 = vshrl.u32 %v830, 7
      %v832 = vsub.s32 %v829, %v831
      %v833 = vrot.slane %v817, %v832
      %v835 = vunpack.c.l.s4 1966171168
      %v836 = vunpack.c.0.s8 %v835
      %v837 = vlaneseq
      %v838 = vshrl.u32 %v837, 7
      %v839 = vsub.s32 %v836, %v838
      %v840 = vrot.slane %v824, %v839
      %v842 = vunpack.c.l.s4 1966171168
      %v843 = vunpack.c.0.s8 %v842
      %v844 = vlaneseq
      %v845 = vshrl.u32 %v844, 7
      %v846 = vsub.s32 %v843, %v845
      %v847 = vrot.slane %v825, %v846
      %v849 = vunpack.c.l.s4 1966171168
      %v850 = vunpack.c.0.s8 %v849
      %v851 = vlaneseq
      %v852 = vshrl.u32 %v851, 7
      %v853 = vsub.s32 %v850, %v852
      %v854 = vrot.slane %v826, %v853
      %v855 = vcombine.high %v833, %v833
      %v856 = vcombine.high %v840, %v840
      %v857 = vcombine.high %v847, %v847
      %v858 = vcombine.high %v854, %v854
      %v859 = vlaneseq
      %v860 = vshrl.u32 %v859, 7
      %v861 = vsub.s32 0, %v860
      %v862 = vrot.slane %v686, %v861
      %v863 = vlaneseq
      %v864 = vshrl.u32 %v863, 7
      %v865 = vsub.s32 0, %v864
      %v866 = vrot.slane %v700, %v865
      %v867 = vlaneseq
      %v868 = vshrl.u32 %v867, 7
      %v869 = vsub.s32 0, %v868
      %v870 = vrot.slane %v708, %v869
      %v871 = vlaneseq
      %v872 = vshrl.u32 %v871, 7
      %v873 = vsub.s32 0, %v872
      %v874 = vrot.slane %v710, %v873
      %v875 = vlaneseq
      %v876 = vshrl.u32 %v875, 7
      %v877 = vsub.s32 0, %v876
      %v878 = vrot.slane %v693, %v877
      %v879 = vlaneseq
      %v880 = vshrl.u32 %v879, 7
      %v881 = vsub.s32 0, %v880
      %v882 = vrot.slane %v707, %v881
      %v883 = vlaneseq
      %v884 = vshrl.u32 %v883, 7
      %v885 = vsub.s32 0, %v884
      %v886 = vrot.slane %v709, %v885
      %v887 = vlaneseq
      %v888 = vshrl.u32 %v887, 7
      %v889 = vsub.s32 0, %v888
      %v890 = vrot.slane %v711, %v889
      %v891 = vlaneseq
      %v892 = vshrl.u32 %v891, 7
      %v893 = vsub.s32 0, %v892
      %v894 = vrot.slane %v735, %v893
      %v895 = vlaneseq
      %v896 = vshrl.u32 %v895, 7
      %v897 = vsub.s32 0, %v896
      %v898 = vrot.slane %v749, %v897
      %v899 = vlaneseq
      %v900 = vshrl.u32 %v899, 7
      %v901 = vsub.s32 0, %v900
      %v902 = vrot.slane %v757, %v901
      %v903 = vlaneseq
      %v904 = vshrl.u32 %v903, 7
      %v905 = vsub.s32 0, %v904
      %v906 = vrot.slane %v759, %v905
      %v907 = vlaneseq
      %v908 = vshrl.u32 %v907, 7
      %v909 = vsub.s32 0, %v908
      %v910 = vrot.slane %v742, %v909
      %v911 = vlaneseq
      %v912 = vshrl.u32 %v911, 7
      %v913 = vsub.s32 0, %v912
      %v914 = vrot.slane %v756, %v913
      %v915 = vlaneseq
      %v916 = vshrl.u32 %v915, 7
      %v917 = vsub.s32 0, %v916
      %v918 = vrot.slane %v758, %v917
      %v919 = vlaneseq
      %v920 = vshrl.u32 %v919, 7
      %v921 = vsub.s32 0, %v920
      %v922 = vrot.slane %v760, %v921
      %v923 = vlaneseq
      %v924 = vshrl.u32 %v923, 7
      %v925 = vsub.s32 0, %v924
      %v926 = vrot.slane %v784, %v925
      %v927 = vlaneseq
      %v928 = vshrl.u32 %v927, 7
      %v929 = vsub.s32 0, %v928
      %v930 = vrot.slane %v798, %v929
      %v931 = vlaneseq
      %v932 = vshrl.u32 %v931, 7
      %v933 = vsub.s32 0, %v932
      %v934 = vrot.slane %v806, %v933
      %v935 = vlaneseq
      %v936 = vshrl.u32 %v935, 7
      %v937 = vsub.s32 0, %v936
      %v938 = vrot.slane %v808, %v937
      %v939 = vlaneseq
      %v940 = vshrl.u32 %v939, 7
      %v941 = vsub.s32 0, %v940
      %v942 = vrot.slane %v791, %v941
      %v943 = vlaneseq
      %v944 = vshrl.u32 %v943, 7
      %v945 = vsub.s32 0, %v944
      %v946 = vrot.slane %v805, %v945
      %v947 = vlaneseq
      %v948 = vshrl.u32 %v947, 7
      %v949 = vsub.s32 0, %v948
      %v950 = vrot.slane %v807, %v949
      %v951 = vlaneseq
      %v952 = vshrl.u32 %v951, 7
      %v953 = vsub.s32 0, %v952
      %v954 = vrot.slane %v809, %v953
      %v955 = vlaneseq
      %v956 = vshrl.u32 %v955, 7
      %v957 = vsub.s32 0, %v956
      %v958 = vrot.slane %v833, %v957
      %v959 = vlaneseq
      %v960 = vshrl.u32 %v959, 7
      %v961 = vsub.s32 0, %v960
      %v962 = vrot.slane %v847, %v961
      %v963 = vlaneseq
      %v964 = vshrl.u32 %v963, 7
      %v965 = vsub.s32 0, %v964
      %v966 = vrot.slane %v855, %v965
      %v967 = vlaneseq
      %v968 = vshrl.u32 %v967, 7
      %v969 = vsub.s32 0, %v968
      %v970 = vrot.slane %v857, %v969
      %v971 = vlaneseq
      %v972 = vshrl.u32 %v971, 7
      %v973 = vsub.s32 0, %v972
      %v974 = vrot.slane %v840, %v973
      %v975 = vlaneseq
      %v976 = vshrl.u32 %v975, 7
      %v977 = vsub.s32 0, %v976
      %v978 = vrot.slane %v854, %v977
      %v979 = vlaneseq
      %v980 = vshrl.u32 %v979, 7
      %v981 = vsub.s32 0, %v980
      %v982 = vrot.slane %v856, %v981
      %v983 = vlaneseq
      %v984 = vshrl.u32 %v983, 7
      %v985 = vsub.s32 0, %v984
      %v986 = vrot.slane %v858, %v985
      %v1019 = vadd.f32 %v460, %v862
      %v1020 = vadd.f32 %v463, %v866
      %v1021 = vadd.f32 %v468, %v870
      %v1022 = vadd.f32 %v471, %v874
      %v1023 = vadd.f32 %v476, %v878
      %v1024 = vadd.f32 %v479, %v882
      %v1025 = vadd.f32 %v484, %v886
      %v1026 = vadd.f32 %v487, %v890
      %v1027 = vadd.f32 %v492, %v894
      %v1028 = vadd.f32 %v495, %v898
      %v1029 = vadd.f32 %v500, %v902
      %v1030 = vadd.f32 %v503, %v906
      %v1031 = vadd.f32 %v508, %v910
      %v1032 = vadd.f32 %v511, %v914
      %v1033 = vadd.f32 %v516, %v918
      %v1034 = vadd.f32 %v519, %v922
      %v1035 = vadd.f32 %v524, %v926
      %v1036 = vadd.f32 %v527, %v930
      %v1037 = vadd.f32 %v532, %v934
      %v1038 = vadd.f32 %v535, %v938
      %v1039 = vadd.f32 %v540, %v942
      %v1040 = vadd.f32 %v543, %v946
      %v1041 = vadd.f32 %v548, %v950
      %v1042 = vadd.f32 %v551, %v954
      %v1043 = vadd.f32 %v556, %v958
      %v1044 = vadd.f32 %v559, %v962
      %v1045 = vadd.f32 %v564, %v966
      %v1046 = vadd.f32 %v567, %v970
      %v1047 = vadd.f32 %v572, %v974
      %v1048 = vadd.f32 %v575, %v978
      %v1049 = vadd.f32 %v580, %v982
      %v1050 = vadd.f32 %v583, %v986
      %vm1051 = vcmask 261120
      %v1052 = vsel %vm1051, %v1019, 0.0
      %v1053 = vsel %vm1051, %v1020, 0.0
      %v1054 = vadd.f32 %v1052, %v1053
      %v1055 = vsel %vm1051, %v1021, 0.0
      %v1056 = vadd.f32 %v1054, %v1055
      %v1057 = vsel %vm1051, %v1022, 0.0
      %v1058 = vadd.f32 %v1056, %v1057
      %v1059 = vsel %vm1051, %v1023, 0.0
      %v1060 = vadd.f32 %v1058, %v1059
      %v1061 = vsel %vm1051, %v1024, 0.0
      %v1062 = vadd.f32 %v1060, %v1061
      %v1063 = vsel %vm1051, %v1025, 0.0
      %v1064 = vadd.f32 %v1062, %v1063
      %v1065 = vsel %vm1051, %v1026, 0.0
      %v1066 = vadd.f32 %v1064, %v1065
      %v1067 = vsel %vm1051, %v1027, 0.0
      %v1068 = vadd.f32 %v1066, %v1067
      %v1069 = vsel %vm1051, %v1028, 0.0
      %v1070 = vadd.f32 %v1068, %v1069
      %v1071 = vsel %vm1051, %v1029, 0.0
      %v1072 = vadd.f32 %v1070, %v1071
      %v1073 = vsel %vm1051, %v1030, 0.0
      %v1074 = vadd.f32 %v1072, %v1073
      %v1075 = vsel %vm1051, %v1031, 0.0
      %v1076 = vadd.f32 %v1074, %v1075
      %v1077 = vsel %vm1051, %v1032, 0.0
      %v1078 = vadd.f32 %v1076, %v1077
      %v1079 = vsel %vm1051, %v1033, 0.0
      %v1080 = vadd.f32 %v1078, %v1079
      %v1081 = vsel %vm1051, %v1034, 0.0
      %v1082 = vadd.f32 %v1080, %v1081
      %v1083 = vsel %vm1051, %v1035, 0.0
      %v1084 = vadd.f32 %v1082, %v1083
      %v1085 = vsel %vm1051, %v1036, 0.0
      %v1086 = vadd.f32 %v1084, %v1085
      %v1087 = vsel %vm1051, %v1037, 0.0
      %v1088 = vadd.f32 %v1086, %v1087
      %v1089 = vsel %vm1051, %v1038, 0.0
      %v1090 = vadd.f32 %v1088, %v1089
      %v1091 = vsel %vm1051, %v1039, 0.0
      %v1092 = vadd.f32 %v1090, %v1091
      %v1093 = vsel %vm1051, %v1040, 0.0
      %v1094 = vadd.f32 %v1092, %v1093
      %v1095 = vsel %vm1051, %v1041, 0.0
      %v1096 = vadd.f32 %v1094, %v1095
      %v1097 = vsel %vm1051, %v1042, 0.0
      %v1098 = vadd.f32 %v1096, %v1097
      %v1099 = vsel %vm1051, %v1043, 0.0
      %v1100 = vadd.f32 %v1098, %v1099
      %v1101 = vsel %vm1051, %v1044, 0.0
      %v1102 = vadd.f32 %v1100, %v1101
      %v1103 = vsel %vm1051, %v1045, 0.0
      %v1104 = vadd.f32 %v1102, %v1103
      %v1105 = vsel %vm1051, %v1046, 0.0
      %v1106 = vadd.f32 %v1104, %v1105
      %v1107 = vsel %vm1051, %v1047, 0.0
      %v1108 = vadd.f32 %v1106, %v1107
      %v1109 = vsel %vm1051, %v1048, 0.0
      %v1110 = vadd.f32 %v1108, %v1109
      %v1111 = vsel %vm1051, %v1049, 0.0
      %v1112 = vadd.f32 %v1110, %v1111
      %v1113 = vsel %vm1051, %v1050, 0.0
      %v1114 = vadd.f32 %v1112, %v1113
      %1115 = vst.msk [vmem:[%s253] sm:$0xff] %vm1051, %v1114
      %v1116 = vmul.f32 %v1019, %v1019
      %v1117 = vmul.f32 %v1020, %v1020
      %v1118 = vmul.f32 %v1021, %v1021
      %v1119 = vmul.f32 %v1022, %v1022
      %v1120 = vmul.f32 %v1023, %v1023
      %v1121 = vmul.f32 %v1024, %v1024
      %v1122 = vmul.f32 %v1025, %v1025
      %v1123 = vmul.f32 %v1026, %v1026
      %v1124 = vmul.f32 %v1027, %v1027
      %v1125 = vmul.f32 %v1028, %v1028
      %v1126 = vmul.f32 %v1029, %v1029
      %v1127 = vmul.f32 %v1030, %v1030
      %v1128 = vmul.f32 %v1031, %v1031
      %v1129 = vmul.f32 %v1032, %v1032
      %v1130 = vmul.f32 %v1033, %v1033
      %v1131 = vmul.f32 %v1034, %v1034
      %v1132 = vmul.f32 %v1035, %v1035
      %v1133 = vmul.f32 %v1036, %v1036
      %v1134 = vmul.f32 %v1037, %v1037
      %v1135 = vmul.f32 %v1038, %v1038
      %v1136 = vmul.f32 %v1039, %v1039
      %v1137 = vmul.f32 %v1040, %v1040
      %v1138 = vmul.f32 %v1041, %v1041
      %v1139 = vmul.f32 %v1042, %v1042
      %v1140 = vmul.f32 %v1043, %v1043
      %v1141 = vmul.f32 %v1044, %v1044
      %v1142 = vmul.f32 %v1045, %v1045
      %v1143 = vmul.f32 %v1046, %v1046
      %v1144 = vmul.f32 %v1047, %v1047
      %v1145 = vmul.f32 %v1048, %v1048
      %v1146 = vmul.f32 %v1049, %v1049
      %v1147 = vmul.f32 %v1050, %v1050
      %v1148 = vsel %vm1051, %v1116, 0.0
      %v1149 = vsel %vm1051, %v1117, 0.0
      %v1150 = vadd.f32 %v1148, %v1149
      %v1151 = vsel %vm1051, %v1118, 0.0
      %v1152 = vadd.f32 %v1150, %v1151
      %v1153 = vsel %vm1051, %v1119, 0.0
      %v1154 = vadd.f32 %v1152, %v1153
      %v1155 = vsel %vm1051, %v1120, 0.0
      %v1156 = vadd.f32 %v1154, %v1155
      %v1157 = vsel %vm1051, %v1121, 0.0
      %v1158 = vadd.f32 %v1156, %v1157
      %v1159 = vsel %vm1051, %v1122, 0.0
      %v1160 = vadd.f32 %v1158, %v1159
      %v1161 = vsel %vm1051, %v1123, 0.0
      %v1162 = vadd.f32 %v1160, %v1161
      %v1163 = vsel %vm1051, %v1124, 0.0
      %v1164 = vadd.f32 %v1162, %v1163
      %v1165 = vsel %vm1051, %v1125, 0.0
      %v1166 = vadd.f32 %v1164, %v1165
      %v1167 = vsel %vm1051, %v1126, 0.0
      %v1168 = vadd.f32 %v1166, %v1167
      %v1169 = vsel %vm1051, %v1127, 0.0
      %v1170 = vadd.f32 %v1168, %v1169
      %v1171 = vsel %vm1051, %v1128, 0.0
      %v1172 = vadd.f32 %v1170, %v1171
      %v1173 = vsel %vm1051, %v1129, 0.0
      %v1174 = vadd.f32 %v1172, %v1173
      %v1175 = vsel %vm1051, %v1130, 0.0
      %v1176 = vadd.f32 %v1174, %v1175
      %v1177 = vsel %vm1051, %v1131, 0.0
      %v1178 = vadd.f32 %v1176, %v1177
      %v1179 = vsel %vm1051, %v1132, 0.0
      %v1180 = vadd.f32 %v1178, %v1179
      %v1181 = vsel %vm1051, %v1133, 0.0
      %v1182 = vadd.f32 %v1180, %v1181
      %v1183 = vsel %vm1051, %v1134, 0.0
      %v1184 = vadd.f32 %v1182, %v1183
      %v1185 = vsel %vm1051, %v1135, 0.0
      %v1186 = vadd.f32 %v1184, %v1185
      %v1187 = vsel %vm1051, %v1136, 0.0
      %v1188 = vadd.f32 %v1186, %v1187
      %v1189 = vsel %vm1051, %v1137, 0.0
      %v1190 = vadd.f32 %v1188, %v1189
      %v1191 = vsel %vm1051, %v1138, 0.0
      %v1192 = vadd.f32 %v1190, %v1191
      %v1193 = vsel %vm1051, %v1139, 0.0
      %v1194 = vadd.f32 %v1192, %v1193
      %v1195 = vsel %vm1051, %v1140, 0.0
      %v1196 = vadd.f32 %v1194, %v1195
      %v1197 = vsel %vm1051, %v1141, 0.0
      %v1198 = vadd.f32 %v1196, %v1197
      %v1199 = vsel %vm1051, %v1142, 0.0
      %v1200 = vadd.f32 %v1198, %v1199
      %v1201 = vsel %vm1051, %v1143, 0.0
      %v1202 = vadd.f32 %v1200, %v1201
      %v1203 = vsel %vm1051, %v1144, 0.0
      %v1204 = vadd.f32 %v1202, %v1203
      %v1205 = vsel %vm1051, %v1145, 0.0
      %v1206 = vadd.f32 %v1204, %v1205
      %v1207 = vsel %vm1051, %v1146, 0.0
      %v1208 = vadd.f32 %v1206, %v1207
      %v1209 = vsel %vm1051, %v1147, 0.0
      %v1210 = vadd.f32 %v1208, %v1209
      %1211 = vst.msk [vmem:[%s257] sm:$0xff] %vm1051, %v1210
      %p1212 = scmp.lt.s32.totalorder %s17, 7
      %s1213 = scalar_select %p1212, %s17, 7
      %s1214 = smul.addr %s1213, 8
      %s1215 = scalar_lea.vmem %s4, %s1214
      %p1216 = scmp.lt.s32.totalorder %s17, 7
      %s1217 = scalar_select %p1216, %s17, 7
      %s1218 = smul.addr %s1217, 8
      %s1219 = scalar_lea.vmem %s5, %s1218
      // Predicated region
      $region37: #{edge_graph_conv_block.3} parent=35 // pred_check
        %p1220 = pneg %p129
      $region38: #{edge_graph_conv_block.3} parent=35 // pred_check_branch
        %1222 = sbr.rel (%p1220) target = $region40
      $region39: #{edge_graph_conv_block.3} parent=35 // pred_region
        _
      $region40: #{edge_graph_conv_block.3} parent=35 // pred_fallthru
        _
      // Predicated region
      $region41: #{edge_graph_conv_block.3} parent=35 // pred_check
        %p1223 = pneg %p155
      $region42: #{edge_graph_conv_block.3} parent=35 // pred_check_branch
        %1225 = sbr.rel (%p1223) target = $region44
      $region43: #{edge_graph_conv_block.3} parent=35 // pred_region
        _
      $region44: #{edge_graph_conv_block.3} parent=35 // pred_fallthru
        _
    $region36: #{edge_graph_conv_block.3} parent=5 // pred_fallthru
      _
    %p1226 = scmp.le.s32.totalorder 2, %s12
    // Predicated region
    $region45: #{edge_graph_conv_block.3} parent=5 // pred_check
      %p1227 = pneg %p1226
    $region46: #{edge_graph_conv_block.3} parent=5 // pred_check_branch
      %1229 = sbr.rel (%p1227) target = $region48
    $region47: #{edge_graph_conv_block.3} parent=5 // pred_region
      %s1230 = ssub.s32 %s12, 2
      // Predicated region
      $region49: #{edge_graph_conv_block.3} parent=47 // pred_check
        %p1231 = pneg %p135
      $region50: #{edge_graph_conv_block.3} parent=47 // pred_check_branch
        %1233 = sbr.rel (%p1231) target = $region52
      $region51: #{edge_graph_conv_block.3} parent=47 // pred_region
        %p1234 = scmp.lt.s32.totalorder %s18, 7
        %s1235 = scalar_select %p1234, %s18, 7
        %s1236 = smul.addr %s1235, 8
        %s1237 = scalar_lea.vmem %s4, %s1236
      $region52: #{edge_graph_conv_block.3} parent=47 // pred_fallthru
        _
      // Predicated region
      $region53: #{edge_graph_conv_block.3} parent=47 // pred_check
        %p1238 = pneg %p161
      $region54: #{edge_graph_conv_block.3} parent=47 // pred_check_branch
        %1240 = sbr.rel (%p1238) target = $region56
      $region55: #{edge_graph_conv_block.3} parent=47 // pred_region
        %p1241 = scmp.lt.s32.totalorder %s18, 7
        %s1242 = scalar_select %p1241, %s18, 7
        %s1243 = smul.addr %s1242, 8
        %s1244 = scalar_lea.vmem %s5, %s1243
      $region56: #{edge_graph_conv_block.3} parent=47 // pred_fallthru
        _
    $region48: #{edge_graph_conv_block.3} parent=5 // pred_fallthru
      _
  $region6: #{edge_graph_conv_block.3} parent=0 // loop_footer
    %s16 = sadd.s32 1, %s12
  $region7: #{edge_graph_conv_block.3} parent=0 // loop_footer_branch
    %11 = sbr.rel target = $region3
  $region8: #{edge_graph_conv_block.3} parent=0 // loop_exit
    _

// kernel: edge_graph_conv_block.4
$region0: #{edge_graph_conv_block.4}
  #allocation0 [shape = 'u32[]', space=smem, size = 0x4, offset = 0x4, fixed_abs, tag = 'smem constant byte address 0x4 - core index']
  #allocation1 [shape = 'u32[144,128]{1,0:T(1,128)}', space=vmem, size = 0x12000, scoped, tag = 'internal scratch']
  %s0 = inlined_call_operand.vmem [shape: bf16[2048,8], index: 0, kind: input, shape index: {}]
  %s1 = inlined_call_operand.vmem [shape: bf16[256,8], index: 1, kind: input, shape index: {}]
  %s2 = inlined_call_operand.vmem [shape: bf16[8,32], index: 2, kind: input, shape index: {}]
  %s3 = inlined_call_operand.vmem [shape: bf16[8,32], index: 3, kind: input, shape index: {}]
  %s4 = inlined_call_operand.vmem [shape: f32[1,32], index: 4, kind: input, shape index: {}]
  %s5 = inlined_call_operand.vmem [shape: f32[1,32], index: 5, kind: input, shape index: {}]
  %s6 = inlined_call_operand.vmem [shape: bf16[32,32], index: 6, kind: input, shape index: {}]
  %s7 = inlined_call_operand.vmem [shape: f32[8,8,32], index: 7, kind: output, shape index: {0}]
  %s8 = inlined_call_operand.vmem [shape: f32[8,8,32], index: 8, kind: output, shape index: {1}]
  %9 = xla_tuple %s7, %s8
  %s10 = sld [smem:[#allocation0]]
  $region69: #{edge_graph_conv_block.4} parent=0
    _
  %s12 = ssub.s32 1, %s10
  %s13 = scalar_select 0, %s12, %s10
  loop: start=0, step=1, limit=10
  $region2: #{edge_graph_conv_block.4} parent=0 // loop_pre_header
    _
  $region3: #{edge_graph_conv_block.4} parent=0 // loop_header
    %s15 = sphi 0, %s19
    %p16 = scmp.ge.s32.totalorder %s15, 10
    %s25 = sphi 0, %s27
    %s28 = sphi 0, %s25
    %s29 = sphi 0, %s28
    %s45 = sphi 0, %s29
    %s51 = sphi 0, %s53
    %s54 = sphi 0, %s51
    %s55 = sphi 0, %s54
    %s71 = sphi 0, %s55
    %s75 = sphi 0, %s75
    %s77 = sphi 0, %s75
    %s78 = sphi 0, %s77
    %s92 = sphi 0, %s78
    %s96 = sphi 0, %s96
    %s98 = sphi 0, %s96
    %s99 = sphi 0, %s98
    %s113 = sphi 0, %s99
    %s117 = sphi 0, %s117
    %s119 = sphi 0, %s117
    %s120 = sphi 0, %s119
    %s134 = sphi 0, %s120
    %s138 = sphi 0, %s138
    %s140 = sphi 0, %s138
    %s141 = sphi 0, %s140
    %s155 = sphi 0, %s141
    %s159 = sphi 0, %s159
    %s161 = sphi 0, %s159
    %s162 = sphi 0, %s161
    %s176 = sphi 0, %s162
    %s182 = sphi 0, %s184
    %s185 = sphi 0, %s182
    %s186 = sphi 0, %s185
    %s202 = sphi 0, %s186
    %s208 = sphi 0, %s210
    %s211 = sphi 0, %s208
    %s212 = sphi 0, %s211
    %s228 = sphi 0, %s212
  $region4: #{edge_graph_conv_block.4} parent=0 // loop_header_branch
    %18 = sbr.rel (%p16) target = $region8
  $region5: #{edge_graph_conv_block.4} parent=0 // loop_body
    %s20 = ssub.s32 %s15, 1
    %s21 = ssub.s32 %s15, 2
    %s22 = sadd.s32 %s15, 1
    %s23 = ssub.s32 %s15, %s22
    %p24 = scmp.eq.s32.totalorder %s23, 0
    %s26 = sadd.s32 %s25, 1
    %s27 = scalar_select %p24, %s25, %s26
    %p30 = pneg %p24
    %p31 = scmp.eq.s32.totalorder %s15, 7
    %p32 = por %p30, %p31
    %p33 = scmp.ne.s32.totalorder %s25, %s28
    %p34 = scmp.eq.s32.totalorder %s15, 0
    %p35 = por %p33, %p34
    %p36 = scmp.ne.s32.totalorder %s25, %s28
    %p37 = scmp.eq.s32.totalorder %s20, 7
    %p38 = por %p36, %p37
    %p39 = scmp.ne.s32.totalorder %s28, %s29
    %p40 = scmp.eq.s32.totalorder %s20, 0
    %p41 = por %p39, %p40
    %p42 = scmp.ne.s32.totalorder %s28, %s29
    %p43 = scmp.eq.s32.totalorder %s21, 7
    %p44 = por %p42, %p43
    %p46 = scmp.ne.s32.totalorder %s29, %s45
    %p47 = scmp.eq.s32.totalorder %s21, 0
    %p48 = por %p46, %p47
    %s49 = ssub.s32 %s15, %s22
    %p50 = scmp.eq.s32.totalorder %s49, 0
    %s52 = sadd.s32 %s51, 1
    %s53 = scalar_select %p50, %s51, %s52
    %p56 = pneg %p50
    %p57 = scmp.eq.s32.totalorder %s15, 7
    %p58 = por %p56, %p57
    %p59 = scmp.ne.s32.totalorder %s51, %s54
    %p60 = scmp.eq.s32.totalorder %s15, 0
    %p61 = por %p59, %p60
    %p62 = scmp.ne.s32.totalorder %s51, %s54
    %p63 = scmp.eq.s32.totalorder %s20, 7
    %p64 = por %p62, %p63
    %p65 = scmp.ne.s32.totalorder %s54, %s55
    %p66 = scmp.eq.s32.totalorder %s20, 0
    %p67 = por %p65, %p66
    %p68 = scmp.ne.s32.totalorder %s54, %s55
    %p69 = scmp.eq.s32.totalorder %s21, 7
    %p70 = por %p68, %p69
    %p72 = scmp.ne.s32.totalorder %s55, %s71
    %p73 = scmp.eq.s32.totalorder %s21, 0
    %p74 = por %p72, %p73
    %s76 = sadd.s32 %s75, 1
    %p79 = scmp.eq.s32.totalorder %s15, 7
    %p80 = scmp.ne.s32.totalorder %s75, %s77
    %p81 = scmp.eq.s32.totalorder %s15, 0
    %p82 = por %p80, %p81
    %p83 = scmp.ne.s32.totalorder %s75, %s77
    %p84 = scmp.eq.s32.totalorder %s20, 7
    %p85 = por %p83, %p84
    %p86 = scmp.ne.s32.totalorder %s77, %s78
    %p87 = scmp.eq.s32.totalorder %s20, 0
    %p88 = por %p86, %p87
    %p89 = scmp.ne.s32.totalorder %s77, %s78
    %p90 = scmp.eq.s32.totalorder %s21, 7
    %p91 = por %p89, %p90
    %p93 = scmp.ne.s32.totalorder %s78, %s92
    %p94 = scmp.eq.s32.totalorder %s21, 0
    %p95 = por %p93, %p94
    %s97 = sadd.s32 %s96, 1
    %p100 = scmp.eq.s32.totalorder %s15, 7
    %p101 = scmp.ne.s32.totalorder %s96, %s98
    %p102 = scmp.eq.s32.totalorder %s15, 0
    %p103 = por %p101, %p102
    %p104 = scmp.ne.s32.totalorder %s96, %s98
    %p105 = scmp.eq.s32.totalorder %s20, 7
    %p106 = por %p104, %p105
    %p107 = scmp.ne.s32.totalorder %s98, %s99
    %p108 = scmp.eq.s32.totalorder %s20, 0
    %p109 = por %p107, %p108
    %p110 = scmp.ne.s32.totalorder %s98, %s99
    %p111 = scmp.eq.s32.totalorder %s21, 7
    %p112 = por %p110, %p111
    %p114 = scmp.ne.s32.totalorder %s99, %s113
    %p115 = scmp.eq.s32.totalorder %s21, 0
    %p116 = por %p114, %p115
    %s118 = sadd.s32 %s117, 1
    %p121 = scmp.eq.s32.totalorder %s15, 7
    %p122 = scmp.ne.s32.totalorder %s117, %s119
    %p123 = scmp.eq.s32.totalorder %s15, 0
    %p124 = por %p122, %p123
    %p125 = scmp.ne.s32.totalorder %s117, %s119
    %p126 = scmp.eq.s32.totalorder %s20, 7
    %p127 = por %p125, %p126
    %p128 = scmp.ne.s32.totalorder %s119, %s120
    %p129 = scmp.eq.s32.totalorder %s20, 0
    %p130 = por %p128, %p129
    %p131 = scmp.ne.s32.totalorder %s119, %s120
    %p132 = scmp.eq.s32.totalorder %s21, 7
    %p133 = por %p131, %p132
    %p135 = scmp.ne.s32.totalorder %s120, %s134
    %p136 = scmp.eq.s32.totalorder %s21, 0
    %p137 = por %p135, %p136
    %s139 = sadd.s32 %s138, 1
    %p142 = scmp.eq.s32.totalorder %s15, 7
    %p143 = scmp.ne.s32.totalorder %s138, %s140
    %p144 = scmp.eq.s32.totalorder %s15, 0
    %p145 = por %p143, %p144
    %p146 = scmp.ne.s32.totalorder %s138, %s140
    %p147 = scmp.eq.s32.totalorder %s20, 7
    %p148 = por %p146, %p147
    %p149 = scmp.ne.s32.totalorder %s140, %s141
    %p150 = scmp.eq.s32.totalorder %s20, 0
    %p151 = por %p149, %p150
    %p152 = scmp.ne.s32.totalorder %s140, %s141
    %p153 = scmp.eq.s32.totalorder %s21, 7
    %p154 = por %p152, %p153
    %p156 = scmp.ne.s32.totalorder %s141, %s155
    %p157 = scmp.eq.s32.totalorder %s21, 0
    %p158 = por %p156, %p157
    %s160 = sadd.s32 %s159, 1
    %p163 = scmp.eq.s32.totalorder %s15, 7
    %p164 = scmp.ne.s32.totalorder %s159, %s161
    %p165 = scmp.eq.s32.totalorder %s15, 0
    %p166 = por %p164, %p165
    %p167 = scmp.ne.s32.totalorder %s159, %s161
    %p168 = scmp.eq.s32.totalorder %s20, 7
    %p169 = por %p167, %p168
    %p170 = scmp.ne.s32.totalorder %s161, %s162
    %p171 = scmp.eq.s32.totalorder %s20, 0
    %p172 = por %p170, %p171
    %p173 = scmp.ne.s32.totalorder %s161, %s162
    %p174 = scmp.eq.s32.totalorder %s21, 7
    %p175 = por %p173, %p174
    %p177 = scmp.ne.s32.totalorder %s162, %s176
    %p178 = scmp.eq.s32.totalorder %s21, 0
    %p179 = por %p177, %p178
    %s180 = ssub.s32 %s15, %s22
    %p181 = scmp.eq.s32.totalorder %s180, 0
    %s183 = sadd.s32 %s182, 1
    %s184 = scalar_select %p181, %s182, %s183
    %p187 = pneg %p181
    %p188 = scmp.eq.s32.totalorder %s15, 7
    %p189 = por %p187, %p188
    %p190 = scmp.ne.s32.totalorder %s182, %s185
    %p191 = scmp.eq.s32.totalorder %s15, 0
    %p192 = por %p190, %p191
    %p193 = scmp.ne.s32.totalorder %s182, %s185
    %p194 = scmp.eq.s32.totalorder %s20, 7
    %p195 = por %p193, %p194
    %p196 = scmp.ne.s32.totalorder %s185, %s186
    %p197 = scmp.eq.s32.totalorder %s20, 0
    %p198 = por %p196, %p197
    %p199 = scmp.ne.s32.totalorder %s185, %s186
    %p200 = scmp.eq.s32.totalorder %s21, 7
    %p201 = por %p199, %p200
    %p203 = scmp.ne.s32.totalorder %s186, %s202
    %p204 = scmp.eq.s32.totalorder %s21, 0
    %p205 = por %p203, %p204
    %s206 = ssub.s32 %s15, %s22
    %p207 = scmp.eq.s32.totalorder %s206, 0
    %s209 = sadd.s32 %s208, 1
    %s210 = scalar_select %p207, %s208, %s209
    %p213 = pneg %p207
    %p214 = scmp.eq.s32.totalorder %s15, 7
    %p215 = por %p213, %p214
    %p216 = scmp.ne.s32.totalorder %s208, %s211
    %p217 = scmp.eq.s32.totalorder %s15, 0
    %p218 = por %p216, %p217
    %p219 = scmp.ne.s32.totalorder %s208, %s211
    %p220 = scmp.eq.s32.totalorder %s20, 7
    %p221 = por %p219, %p220
    %p222 = scmp.ne.s32.totalorder %s211, %s212
    %p223 = scmp.eq.s32.totalorder %s20, 0
    %p224 = por %p222, %p223
    %p225 = scmp.ne.s32.totalorder %s211, %s212
    %p226 = scmp.eq.s32.totalorder %s21, 7
    %p227 = por %p225, %p226
    %p229 = scmp.ne.s32.totalorder %s212, %s228
    %p230 = scmp.eq.s32.totalorder %s21, 0
    %p231 = por %p229, %p230
    %p232 = scmp.le.s32.totalorder 1, %s15
    %p233 = scmp.lt.s32.totalorder %s15, 9
    %p234 = pnand %p232, %p233
    %p235 = pneg %p234
    // Predicated region
    $region9: #{edge_graph_conv_block.4} parent=5 // pred_check
      _
    $region10: #{edge_graph_conv_block.4} parent=5 // pred_check_branch
      %237 = sbr.rel (%p234) target = $region12
    $region11: #{edge_graph_conv_block.4} parent=5 // pred_region
      %s238 = ssub.s32 %s15, 1
      // Predicated region
      $region13: #{edge_graph_conv_block.4} parent=11 // pred_check
        %p239 = pneg %p88
      $region14: #{edge_graph_conv_block.4} parent=11 // pred_check_branch
        %241 = sbr.rel (%p239) target = $region16
      $region15: #{edge_graph_conv_block.4} parent=11 // pred_region
        _
      $region16: #{edge_graph_conv_block.4} parent=11 // pred_fallthru
        _
      // Predicated region
      $region17: #{edge_graph_conv_block.4} parent=11 // pred_check
        %p242 = pneg %p109
      $region18: #{edge_graph_conv_block.4} parent=11 // pred_check_branch
        %244 = sbr.rel (%p242) target = $region20
      $region19: #{edge_graph_conv_block.4} parent=11 // pred_region
        _
      $region20: #{edge_graph_conv_block.4} parent=11 // pred_fallthru
        _
      // Predicated region
      $region21: #{edge_graph_conv_block.4} parent=11 // pred_check
        %p245 = pneg %p130
      $region22: #{edge_graph_conv_block.4} parent=11 // pred_check_branch
        %247 = sbr.rel (%p245) target = $region24
      $region23: #{edge_graph_conv_block.4} parent=11 // pred_region
        _
      $region24: #{edge_graph_conv_block.4} parent=11 // pred_fallthru
        _
      // Predicated region
      $region25: #{edge_graph_conv_block.4} parent=11 // pred_check
        %p248 = pneg %p151
      $region26: #{edge_graph_conv_block.4} parent=11 // pred_check_branch
        %250 = sbr.rel (%p248) target = $region28
      $region27: #{edge_graph_conv_block.4} parent=11 // pred_region
        _
      $region28: #{edge_graph_conv_block.4} parent=11 // pred_fallthru
        _
      // Predicated region
      $region29: #{edge_graph_conv_block.4} parent=11 // pred_check
        %p251 = pneg %p172
      $region30: #{edge_graph_conv_block.4} parent=11 // pred_check_branch
        %253 = sbr.rel (%p251) target = $region32
      $region31: #{edge_graph_conv_block.4} parent=11 // pred_region
        _
      $region32: #{edge_graph_conv_block.4} parent=11 // pred_fallthru
        _
    $region12: #{edge_graph_conv_block.4} parent=5 // pred_fallthru
      _
    %p254 = scmp.lt.s32.totalorder %s15, 8
    // Predicated region
    $region33: #{edge_graph_conv_block.4} parent=5 // pred_check
      %p255 = pneg %p254
    $region34: #{edge_graph_conv_block.4} parent=5 // pred_check_branch
      %257 = sbr.rel (%p255) target = $region36
    $region35: #{edge_graph_conv_block.4} parent=5 // pred_region
      // Predicated region
      $region37: #{edge_graph_conv_block.4} parent=35 // pred_check
        %p258 = pneg %p35
      $region38: #{edge_graph_conv_block.4} parent=35 // pred_check_branch
        %260 = sbr.rel (%p258) target = $region40
      $region39: #{edge_graph_conv_block.4} parent=35 // pred_region
        %s261 = smul.u32 32, %s15
        %p262 = scmp.lt.s32.totalorder %s261, 255
        %s263 = scalar_select %p262, %s261, 255
        %s264 = smul.addr %s263, 4
        %s265 = scalar_lea.vmem %s0, %s264
        %s266 = smul.u32 32, %s15
      $region40: #{edge_graph_conv_block.4} parent=35 // pred_fallthru
        _
      // Predicated region
      $region41: #{edge_graph_conv_block.4} parent=35 // pred_check
        %p267 = pneg %p61
      $region42: #{edge_graph_conv_block.4} parent=35 // pred_check_branch
        %269 = sbr.rel (%p267) target = $region44
      $region43: #{edge_graph_conv_block.4} parent=35 // pred_region
        %s270 = smul.u32 4, %s15
        %p271 = scmp.lt.s32.totalorder %s270, 31
        %s272 = scalar_select %p271, %s270, 31
        %s273 = smul.addr %s272, 4
        %s274 = scalar_lea.vmem %s1, %s273
        %s275 = smul.u32 4, %s15
      $region44: #{edge_graph_conv_block.4} parent=35 // pred_fallthru
        _
    $region36: #{edge_graph_conv_block.4} parent=5 // pred_fallthru
      _
    %p276 = scmp.le.s32.totalorder 1, %s15
    %p277 = scmp.lt.s32.totalorder %s15, 9
    %p278 = pnand %p276, %p277
    %p279 = pneg %p278
    // Predicated region
    $region45: #{edge_graph_conv_block.4} parent=5 // pred_check
      _
    $region46: #{edge_graph_conv_block.4} parent=5 // pred_check_branch
      %281 = sbr.rel (%p278) target = $region48
    $region47: #{edge_graph_conv_block.4} parent=5 // pred_region
      %s282 = ssub.s32 %s15, 1
      %s283 = smul.u32 32, %s20
      %p284 = scmp.lt.s32.totalorder %s283, 255
      %s285 = scalar_select %p284, %s283, 255
      %s286 = smul.addr %s285, 4
      %s287 = scalar_lea.vmem %s0, %s286
      %p288 = pneg %p41
      %p289 = pneg %p38
      %s290 = smul.u32 4, %s20
      %p291 = scmp.lt.s32.totalorder %s290, 31
      %s292 = scalar_select %p291, %s290, 31
      %s293 = smul.addr %s292, 4
      %s294 = scalar_lea.vmem %s1, %s293
      %p295 = pneg %p67
      %p296 = pneg %p64
      %p297 = pneg %p88
      %p298 = pneg %p85
      %p299 = pneg %p109
      %p300 = pneg %p106
      %p301 = pneg %p130
      %p302 = pneg %p127
      %p303 = pneg %p151
      %p304 = pneg %p148
      %p305 = pneg %p172
      %p306 = pneg %p169
      %p307 = pneg %p198
      %p308 = pneg %p195
      %p309 = scmp.lt.s32.totalorder %s20, 7
      %s310 = scalar_select %p309, %s20, 7
      %s311 = smul.addr %s310, 8
      %s312 = scalar_lea.vmem %s7, %s311
      %p313 = pneg %p224
      %p314 = pneg %p221
      %p315 = scmp.lt.s32.totalorder %s20, 7
      %s316 = scalar_select %p315, %s20, 7
      %s317 = smul.addr %s316, 8
      %s318 = scalar_lea.vmem %s8, %s317
      %s319 = smul.u32 32, %s20
      %p320 = scmp.lt.s32.totalorder %s319, 255
      %s321 = scalar_select %p320, %s319, 255
      %s322 = smul.addr %s321, 4
      %s323 = scalar_lea.vmem %s0, %s322
      %s324 = smul.u32 32, %s20
      %s325 = smul.u32 4, %s20
      %p326 = scmp.lt.s32.totalorder %s325, 31
      %s327 = scalar_select %p326, %s325, 31
      %s328 = smul.addr %s327, 4
      %s329 = scalar_lea.vmem %s1, %s328
      %s330 = smul.u32 4, %s20
      %p331 = scmp.lt.s32.totalorder %s20, 7
      %s332 = scalar_select %p331, %s20, 7
      %s333 = smul.addr %s332, 8
      %s334 = scalar_lea.vmem %s7, %s333
      %p335 = scmp.lt.s32.totalorder %s20, 7
      %s336 = scalar_select %p335, %s20, 7
      %s337 = smul.addr %s336, 8
      %s338 = scalar_lea.vmem %s8, %s337
      %v340 = vld [vmem:[%s323] sm:$0xf]
      %v341 = vld [vmem:[%s323 + $0x4] sm:$0xf]
      %v342 = vld [vmem:[%s323 + $0x8] sm:$0xf]
      %v343 = vld [vmem:[%s323 + $0xc] sm:$0xf]
      %v344 = vld [vmem:[%s323 + $0x10] sm:$0xf]
      %v345 = vld [vmem:[%s323 + $0x14] sm:$0xf]
      %v346 = vld [vmem:[%s323 + $0x18] sm:$0xf]
      %v347 = vld [vmem:[%s323 + $0x1c] sm:$0xf]
      %v348 = vld [vmem:[%s323 + $0x20] sm:$0xf]
      %v349 = vld [vmem:[%s323 + $0x24] sm:$0xf]
      %v350 = vld [vmem:[%s323 + $0x28] sm:$0xf]
      %v351 = vld [vmem:[%s323 + $0x2c] sm:$0xf]
      %v352 = vld [vmem:[%s323 + $0x30] sm:$0xf]
      %v353 = vld [vmem:[%s323 + $0x34] sm:$0xf]
      %v354 = vld [vmem:[%s323 + $0x38] sm:$0xf]
      %v355 = vld [vmem:[%s323 + $0x3c] sm:$0xf]
      %v356 = vld [vmem:[%s323 + $0x40] sm:$0xf]
      %v357 = vld [vmem:[%s323 + $0x44] sm:$0xf]
      %v358 = vld [vmem:[%s323 + $0x48] sm:$0xf]
      %v359 = vld [vmem:[%s323 + $0x4c] sm:$0xf]
      %v360 = vld [vmem:[%s323 + $0x50] sm:$0xf]
      %v361 = vld [vmem:[%s323 + $0x54] sm:$0xf]
      %v362 = vld [vmem:[%s323 + $0x58] sm:$0xf]
      %v363 = vld [vmem:[%s323 + $0x5c] sm:$0xf]
      %v364 = vld [vmem:[%s323 + $0x60] sm:$0xf]
      %v365 = vld [vmem:[%s323 + $0x64] sm:$0xf]
      %v366 = vld [vmem:[%s323 + $0x68] sm:$0xf]
      %v367 = vld [vmem:[%s323 + $0x6c] sm:$0xf]
      %v368 = vld [vmem:[%s323 + $0x70] sm:$0xf]
      %v369 = vld [vmem:[%s323 + $0x74] sm:$0xf]
      %v370 = vld [vmem:[%s323 + $0x78] sm:$0xf]
      %v371 = vld [vmem:[%s323 + $0x7c] sm:$0xf]
      %v372 = vld [vmem:[%s2] sm:$0xf]
      %v405 = vunpack.c.l.b16 %v340
      %v406 = vunpack.c.l.b16 %v341
      %v407 = vunpack.c.l.b16 %v342
      %v408 = vunpack.c.l.b16 %v343
      %v409 = vunpack.c.l.b16 %v344
      %v410 = vunpack.c.l.b16 %v345
      %v411 = vunpack.c.l.b16 %v346
      %v412 = vunpack.c.l.b16 %v347
      %v413 = vunpack.c.l.b16 %v348
      %v414 = vunpack.c.l.b16 %v349
      %v415 = vunpack.c.l.b16 %v350
      %v416 = vunpack.c.l.b16 %v351
      %v417 = vunpack.c.l.b16 %v352
      %v418 = vunpack.c.l.b16 %v353
      %v419 = vunpack.c.l.b16 %v354
      %v420 = vunpack.c.l.b16 %v355
      %v421 = vunpack.c.l.b16 %v356
      %v422 = vunpack.c.l.b16 %v357
      %v423 = vunpack.c.l.b16 %v358
      %v424 = vunpack.c.l.b16 %v359
      %v425 = vunpack.c.l.b16 %v360
      %v426 = vunpack.c.l.b16 %v361
      %v427 = vunpack.c.l.b16 %v362
      %v428 = vunpack.c.l.b16 %v363
      %v429 = vunpack.c.l.b16 %v364
      %v430 = vunpack.c.l.b16 %v365
      %v431 = vunpack.c.l.b16 %v366
      %v432 = vunpack.c.l.b16 %v367
      %v433 = vunpack.c.l.b16 %v368
      %v434 = vunpack.c.l.b16 %v369
      %v435 = vunpack.c.l.b16 %v370
      %v436 = vunpack.c.l.b16 %v371
      %v437 = vpack.c.b16 %v406, %v405
      %v438 = vpack.c.b16 %v408, %v407
      %v439 = vpack.c.b16 %v410, %v409
      %v440 = vpack.c.b16 %v412, %v411
      %v441 = vpack.c.b16 %v414, %v413
      %v442 = vpack.c.b16 %v416, %v415
      %v443 = vpack.c.b16 %v418, %v417
      %v444 = vpack.c.b16 %v420, %v419
      %v445 = vpack.c.b16 %v422, %v421
      %v446 = vpack.c.b16 %v424, %v423
      %v447 = vpack.c.b16 %v426, %v425
      %v448 = vpack.c.b16 %v428, %v427
      %v449 = vpack.c.b16 %v430, %v429
      %v450 = vpack.c.b16 %v432, %v431
      %v451 = vpack.c.b16 %v434, %v433
      %v452 = vpack.c.b16 %v436, %v435
      %vm453 = vcmask 64512
      %v455 = vsel %vm453, %v437, 0
      %v458 = vsel %vm453, %v438, 0
      %v461 = vsel %vm453, %v439, 0
      %v464 = vsel %vm453, %v440, 0
      %v467 = vsel %vm453, %v441, 0
      %v470 = vsel %vm453, %v442, 0
      %v473 = vsel %vm453, %v443, 0
      %v476 = vsel %vm453, %v444, 0
      %v479 = vsel %vm453, %v445, 0
      %v482 = vsel %vm453, %v446, 0
      %v485 = vsel %vm453, %v447, 0
      %v488 = vsel %vm453, %v448, 0
      %v491 = vsel %vm453, %v449, 0
      %v494 = vsel %vm453, %v450, 0
      %v497 = vsel %vm453, %v451, 0
      %v500 = vsel %vm453, %v452, 0
      %vm502 = vcmask 1043456
      %v504 = vsel %vm502, %v372, 0
      %506 = vmatprep.subr.bf16.mxu0 0
      %507 = vmatpush1.bf16.msra.mxu0 %v504
      %508 = vmatprep.subr.bf16.mxu0 0
      %509 = vmatpush1.bf16.msra.mxu0 0
      %510 = vmatprep.subr.bf16.mxu0 0
      %511 = vmatpush1.bf16.msra.mxu0 0
      %512 = vmatprep.subr.bf16.mxu0 0
      %513 = vmatpush1.bf16.msra.mxu0 0
      %514 = vmatprep.subr.bf16.mxu0 0
      %515 = vmatpush1.bf16.msra.mxu0 0
      %516 = vmatprep.subr.bf16.mxu0 0
      %517 = vmatpush1.bf16.msra.mxu0 0
      %518 = vmatprep.subr.bf16.mxu0 0
      %519 = vmatpush1.bf16.msra.mxu0 0
      %520 = vmatprep.subr.bf16.mxu0 0
      %521 = vmatpush1.bf16.msra.mxu0 0
      %522 = vmatprep.subr.bf16.mxu0 0
      %523 = vmatpush1.bf16.msra.mxu0 0
      %524 = vmatprep.subr.bf16.mxu0 0
      %525 = vmatpush1.bf16.msra.mxu0 0
      %526 = vmatprep.subr.bf16.mxu0 0
      %527 = vmatpush1.bf16.msra.mxu0 0
      %528 = vmatprep.subr.bf16.mxu0 0
      %529 = vmatpush1.bf16.msra.mxu0 0
      %530 = vmatprep.subr.bf16.mxu0 0
      %531 = vmatpush1.bf16.msra.mxu0 0
      %532 = vmatprep.subr.bf16.mxu0 0
      %533 = vmatpush1.bf16.msra.mxu0 0
      %534 = vmatprep.subr.bf16.mxu0 0
      %535 = vmatpush1.bf16.msra.mxu0 0
      %536 = vmatprep.subr.bf16.mxu0 0
      %537 = vmatpush1.bf16.msra.mxu0 0
      %538 = vmatprep.mubr.bf16.mxu0 0
      %539 = vmatmul.mubr.bf16.gmra.mrb[0].mxu0 %v455
      %v540 = vpop.f32.mrb[0].mxu0
      %v541 = vadd.f32 0.0, %v540
      %v542 = vpop.f32.mrb[0].mxu0
      %v543 = vpop.f32.mrb[0].mxu0
      %v544 = vadd.f32 0.0, %v543
      %v545 = vpop.f32.mrb[0].mxu0
      %546 = vmatprep.mubr.bf16.mxu0 0
      %547 = vmatmul.mubr.bf16.gmra.mrb[0].mxu0 %v458
      %v548 = vpop.f32.mrb[0].mxu0
      %v549 = vadd.f32 0.0, %v548
      %v550 = vpop.f32.mrb[0].mxu0
      %v551 = vpop.f32.mrb[0].mxu0
      %v552 = vadd.f32 0.0, %v551
      %v553 = vpop.f32.mrb[0].mxu0
      %554 = vmatprep.mubr.bf16.mxu0 0
      %555 = vmatmul.mubr.bf16.gmra.mrb[0].mxu0 %v461
      %v556 = vpop.f32.mrb[0].mxu0
      %v557 = vadd.f32 0.0, %v556
      %v558 = vpop.f32.mrb[0].mxu0
      %v559 = vpop.f32.mrb[0].mxu0
      %v560 = vadd.f32 0.0, %v559
      %v561 = vpop.f32.mrb[0].mxu0
      %562 = vmatprep.mubr.bf16.mxu0 0
      %563 = vmatmul.mubr.bf16.gmra.mrb[0].mxu0 %v464
      %v564 = vpop.f32.mrb[0].mxu0
      %v565 = vadd.f32 0.0, %v564
      %v566 = vpop.f32.mrb[0].mxu0
      %v567 = vpop.f32.mrb[0].mxu0
      %v568 = vadd.f32 0.0, %v567
      %v569 = vpop.f32.mrb[0].mxu0
      %570 = vmatprep.mubr.bf16.mxu0 0
      %571 = vmatmul.mubr.bf16.gmra.mrb[0].mxu0 %v467
      %v572 = vpop.f32.mrb[0].mxu0
      %v573 = vadd.f32 0.0, %v572
      %v574 = vpop.f32.mrb[0].mxu0
      %v575 = vpop.f32.mrb[0].mxu0
      %v576 = vadd.f32 0.0, %v575
      %v577 = vpop.f32.mrb[0].mxu0
      %578 = vmatprep.mubr.bf16.mxu0 0
      %579 = vmatmul.mubr.bf16.gmra.mrb[0].mxu0 %v470
      %v580 = vpop.f32.mrb[0].mxu0
      %v581 = vadd.f32 0.0, %v580
      %v582 = vpop.f32.mrb[0].mxu0
      %v583 = vpop.f32.mrb[0].mxu0
      %v584 = vadd.f32 0.0, %v583
      %v585 = vpop.f32.mrb[0].mxu0
      %586 = vmatprep.mubr.bf16.mxu0 0
      %587 = vmatmul.mubr.bf16.gmra.mrb[0].mxu0 %v473
      %v588 = vpop.f32.mrb[0].mxu0
      %v589 = vadd.f32 0.0, %v588
      %v590 = vpop.f32.mrb[0].mxu0
      %v591 = vpop.f32.mrb[0].mxu0
      %v592 = vadd.f32 0.0, %v591
      %v593 = vpop.f32.mrb[0].mxu0
      %594 = vmatprep.mubr.bf16.mxu0 0
      %595 = vmatmul.mubr.bf16.gmra.mrb[0].mxu0 %v476
      %v596 = vpop.f32.mrb[0].mxu0
      %v597 = vadd.f32 0.0, %v596
      %v598 = vpop.f32.mrb[0].mxu0
      %v599 = vpop.f32.mrb[0].mxu0
      %v600 = vadd.f32 0.0, %v599
      %v601 = vpop.f32.mrb[0].mxu0
      %602 = vmatprep.mubr.bf16.mxu0 0
      %603 = vmatmul.mubr.bf16.gmra.mrb[0].mxu0 %v479
      %v604 = vpop.f32.mrb[0].mxu0
      %v605 = vadd.f32 0.0, %v604
      %v606 = vpop.f32.mrb[0].mxu0
      %v607 = vpop.f32.mrb[0].mxu0
      %v608 = vadd.f32 0.0, %v607
      %v609 = vpop.f32.mrb[0].mxu0
      %610 = vmatprep.mubr.bf16.mxu0 0
      %611 = vmatmul.mubr.bf16.gmra.mrb[0].mxu0 %v482
      %v612 = vpop.f32.mrb[0].mxu0
      %v613 = vadd.f32 0.0, %v612
      %v614 = vpop.f32.mrb[0].mxu0
      %v615 = vpop.f32.mrb[0].mxu0
      %v616 = vadd.f32 0.0, %v615
      %v617 = vpop.f32.mrb[0].mxu0
      %618 = vmatprep.mubr.bf16.mxu0 0
      %619 = vmatmul.mubr.bf16.gmra.mrb[0].mxu0 %v485
      %v620 = vpop.f32.mrb[0].mxu0
      %v621 = vadd.f32 0.0, %v620
      %v622 = vpop.f32.mrb[0].mxu0
      %v623 = vpop.f32.mrb[0].mxu0
      %v624 = vadd.f32 0.0, %v623
      %v625 = vpop.f32.mrb[0].mxu0
      %626 = vmatprep.mubr.bf16.mxu0 0
      %627 = vmatmul.mubr.bf16.gmra.mrb[0].mxu0 %v488
      %v628 = vpop.f32.mrb[0].mxu0
      %v629 = vadd.f32 0.0, %v628
      %v630 = vpop.f32.mrb[0].mxu0
      %v631 = vpop.f32.mrb[0].mxu0
      %v632 = vadd.f32 0.0, %v631
      %v633 = vpop.f32.mrb[0].mxu0
      %634 = vmatprep.mubr.bf16.mxu0 0
      %635 = vmatmul.mubr.bf16.gmra.mrb[0].mxu0 %v491
      %v636 = vpop.f32.mrb[0].mxu0
      %v637 = vadd.f32 0.0, %v636
      %v638 = vpop.f32.mrb[0].mxu0
      %v639 = vpop.f32.mrb[0].mxu0
      %v640 = vadd.f32 0.0, %v639
      %v641 = vpop.f32.mrb[0].mxu0
      %642 = vmatprep.mubr.bf16.mxu0 0
      %643 = vmatmul.mubr.bf16.gmra.mrb[0].mxu0 %v494
      %v644 = vpop.f32.mrb[0].mxu0
      %v645 = vadd.f32 0.0, %v644
      %v646 = vpop.f32.mrb[0].mxu0
      %v647 = vpop.f32.mrb[0].mxu0
      %v648 = vadd.f32 0.0, %v647
      %v649 = vpop.f32.mrb[0].mxu0
      %650 = vmatprep.mubr.bf16.mxu0 0
      %651 = vmatmul.mubr.bf16.gmra.mrb[0].mxu0 %v497
      %v652 = vpop.f32.mrb[0].mxu0
      %v653 = vadd.f32 0.0, %v652
      %v654 = vpop.f32.mrb[0].mxu0
      %v655 = vpop.f32.mrb[0].mxu0
      %v656 = vadd.f32 0.0, %v655
      %v657 = vpop.f32.mrb[0].mxu0
      %658 = vmatprep.mubr.bf16.mxu0 0
      %659 = vmatmul.mubr.bf16.gmra.mrb[0].mxu0 %v500
      %v660 = vpop.f32.mrb[0].mxu0
      %v661 = vadd.f32 0.0, %v660
      %v662 = vpop.f32.mrb[0].mxu0
      %v663 = vpop.f32.mrb[0].mxu0
      %v664 = vadd.f32 0.0, %v663
      %v665 = vpop.f32.mrb[0].mxu0
      %666 = vdwg.mxu0
      %v667 = vld [vmem:[%s329] sm:$0xf]
      %v668 = vld [vmem:[%s329 + $0x4] sm:$0xf]
      %v669 = vld [vmem:[%s329 + $0x8] sm:$0xf]
      %v670 = vld [vmem:[%s329 + $0xc] sm:$0xf]
      %v671 = vld [vmem:[%s3] sm:$0xf]
      %v676 = vunpack.c.l.b16 %v667
      %v677 = vunpack.c.l.b16 %v668
      %v678 = vunpack.c.l.b16 %v669
      %v679 = vunpack.c.l.b16 %v670
      %v680 = vpack.c.b16 %v677, %v676
      %v681 = vpack.c.b16 %v679, %v678
      %v683 = vsel %vm453, %v680, 0
      %v686 = vsel %vm453, %v681, 0
      %v689 = vsel %vm502, %v671, 0
      %691 = vmatprep.subr.bf16.mxu0 0
      %692 = vmatpush1.bf16.msra.mxu0 %v689
      %693 = vmatprep.subr.bf16.mxu0 0
      %694 = vmatpush1.bf16.msra.mxu0 0
      %695 = vmatprep.subr.bf16.mxu0 0
      %696 = vmatpush1.bf16.msra.mxu0 0
      %697 = vmatprep.subr.bf16.mxu0 0
      %698 = vmatpush1.bf16.msra.mxu0 0
      %699 = vmatprep.subr.bf16.mxu0 0
      %700 = vmatpush1.bf16.msra.mxu0 0
      %701 = vmatprep.subr.bf16.mxu0 0
      %702 = vmatpush1.bf16.msra.mxu0 0
      %703 = vmatprep.subr.bf16.mxu0 0
      %704 = vmatpush1.bf16.msra.mxu0 0
      %705 = vmatprep.subr.bf16.mxu0 0
      %706 = vmatpush1.bf16.msra.mxu0 0
      %707 = vmatprep.subr.bf16.mxu0 0
      %708 = vmatpush1.bf16.msra.mxu0 0
      %709 = vmatprep.subr.bf16.mxu0 0
      %710 = vmatpush1.bf16.msra.mxu0 0
      %711 = vmatprep.subr.bf16.mxu0 0
      %712 = vmatpush1.bf16.msra.mxu0 0
      %713 = vmatprep.subr.bf16.mxu0 0
      %714 = vmatpush1.bf16.msra.mxu0 0
      %715 = vmatprep.subr.bf16.mxu0 0
      %716 = vmatpush1.bf16.msra.mxu0 0
      %717 = vmatprep.subr.bf16.mxu0 0
      %718 = vmatpush1.bf16.msra.mxu0 0
      %719 = vmatprep.subr.bf16.mxu0 0
      %720 = vmatpush1.bf16.msra.mxu0 0
      %721 = vmatprep.subr.bf16.mxu0 0
      %722 = vmatpush1.bf16.msra.mxu0 0
      %723 = vmatprep.mubr.bf16.mxu0 0
      %724 = vmatmul.mubr.bf16.gmra.mrb[0].mxu0 %v683
      %v725 = vpop.f32.mrb[0].mxu0
      %v726 = vadd.f32 0.0, %v725
      %v727 = vpop.f32.mrb[0].mxu0
      %v728 = vpop.f32.mrb[0].mxu0
      %v729 = vadd.f32 0.0, %v728
      %v730 = vpop.f32.mrb[0].mxu0
      %731 = vmatprep.mubr.bf16.mxu0 0
      %732 = vmatmul.mubr.bf16.gmra.mrb[0].mxu0 %v686
      %v733 = vpop.f32.mrb[0].mxu0
      %v734 = vadd.f32 0.0, %v733
      %v735 = vpop.f32.mrb[0].mxu0
      %v736 = vpop.f32.mrb[0].mxu0
      %v737 = vadd.f32 0.0, %v736
      %v738 = vpop.f32.mrb[0].mxu0
      %739 = vdwg.mxu0
      %v744 = vcombine.high %v726, %v726
      %v746 = vunpack.c.l.s4 1966171168
      %v747 = vunpack.c.0.s8 %v746
      %v748 = vlaneseq
      %v749 = vshrl.u32 %v748, 7
      %v750 = vsub.s32 %v747, %v749
      %v751 = vrot.slane %v726, %v750
      %v753 = vunpack.c.l.s4 1966171168
      %v754 = vunpack.c.0.s8 %v753
      %v755 = vlaneseq
      %v756 = vshrl.u32 %v755, 7
      %v757 = vsub.s32 %v754, %v756
      %v758 = vrot.slane %v744, %v757
      %v759 = vcombine.high %v751, %v751
      %v760 = vcombine.high %v758, %v758
      %v762 = vunpack.c.l.s4 1966171168
      %v763 = vunpack.c.0.s8 %v762
      %v764 = vlaneseq
      %v765 = vshrl.u32 %v764, 7
      %v766 = vsub.s32 %v763, %v765
      %v767 = vrot.slane %v751, %v766
      %v769 = vunpack.c.l.s4 1966171168
      %v770 = vunpack.c.0.s8 %v769
      %v771 = vlaneseq
      %v772 = vshrl.u32 %v771, 7
      %v773 = vsub.s32 %v770, %v772
      %v774 = vrot.slane %v758, %v773
      %v776 = vunpack.c.l.s4 1966171168
      %v777 = vunpack.c.0.s8 %v776
      %v778 = vlaneseq
      %v779 = vshrl.u32 %v778, 7
      %v780 = vsub.s32 %v777, %v779
      %v781 = vrot.slane %v759, %v780
      %v783 = vunpack.c.l.s4 1966171168
      %v784 = vunpack.c.0.s8 %v783
      %v785 = vlaneseq
      %v786 = vshrl.u32 %v785, 7
      %v787 = vsub.s32 %v784, %v786
      %v788 = vrot.slane %v760, %v787
      %v789 = vcombine.high %v767, %v767
      %v790 = vcombine.high %v774, %v774
      %v791 = vcombine.high %v781, %v781
      %v792 = vcombine.high %v788, %v788
      %v793 = vcombine.high %v729, %v729
      %v795 = vunpack.c.l.s4 1966171168
      %v796 = vunpack.c.0.s8 %v795
      %v797 = vlaneseq
      %v798 = vshrl.u32 %v797, 7
      %v799 = vsub.s32 %v796, %v798
      %v800 = vrot.slane %v729, %v799
      %v802 = vunpack.c.l.s4 1966171168
      %v803 = vunpack.c.0.s8 %v802
      %v804 = vlaneseq
      %v805 = vshrl.u32 %v804, 7
      %v806 = vsub.s32 %v803, %v805
      %v807 = vrot.slane %v793, %v806
      %v808 = vcombine.high %v800, %v800
      %v809 = vcombine.high %v807, %v807
      %v811 = vunpack.c.l.s4 1966171168
      %v812 = vunpack.c.0.s8 %v811
      %v813 = vlaneseq
      %v814 = vshrl.u32 %v813, 7
      %v815 = vsub.s32 %v812, %v814
      %v816 = vrot.slane %v800, %v815
      %v818 = vunpack.c.l.s4 1966171168
      %v819 = vunpack.c.0.s8 %v818
      %v820 = vlaneseq
      %v821 = vshrl.u32 %v820, 7
      %v822 = vsub.s32 %v819, %v821
      %v823 = vrot.slane %v807, %v822
      %v825 = vunpack.c.l.s4 1966171168
      %v826 = vunpack.c.0.s8 %v825
      %v827 = vlaneseq
      %v828 = vshrl.u32 %v827, 7
      %v829 = vsub.s32 %v826, %v828
      %v830 = vrot.slane %v808, %v829
      %v832 = vunpack.c.l.s4 1966171168
      %v833 = vunpack.c.0.s8 %v832
      %v834 = vlaneseq
      %v835 = vshrl.u32 %v834, 7
      %v836 = vsub.s32 %v833, %v835
      %v837 = vrot.slane %v809, %v836
      %v838 = vcombine.high %v816, %v816
      %v839 = vcombine.high %v823, %v823
      %v840 = vcombine.high %v830, %v830
      %v841 = vcombine.high %v837, %v837
      %v842 = vcombine.high %v734, %v734
      %v844 = vunpack.c.l.s4 1966171168
      %v845 = vunpack.c.0.s8 %v844
      %v846 = vlaneseq
      %v847 = vshrl.u32 %v846, 7
      %v848 = vsub.s32 %v845, %v847
      %v849 = vrot.slane %v734, %v848
      %v851 = vunpack.c.l.s4 1966171168
      %v852 = vunpack.c.0.s8 %v851
      %v853 = vlaneseq
      %v854 = vshrl.u32 %v853, 7
      %v855 = vsub.s32 %v852, %v854
      %v856 = vrot.slane %v842, %v855
      %v857 = vcombine.high %v849, %v849
      %v858 = vcombine.high %v856, %v856
      %v860 = vunpack.c.l.s4 1966171168
      %v861 = vunpack.c.0.s8 %v860
      %v862 = vlaneseq
      %v863 = vshrl.u32 %v862, 7
      %v864 = vsub.s32 %v861, %v863
      %v865 = vrot.slane %v849, %v864
      %v867 = vunpack.c.l.s4 1966171168
      %v868 = vunpack.c.0.s8 %v867
      %v869 = vlaneseq
      %v870 = vshrl.u32 %v869, 7
      %v871 = vsub.s32 %v868, %v870
      %v872 = vrot.slane %v856, %v871
      %v874 = vunpack.c.l.s4 1966171168
      %v875 = vunpack.c.0.s8 %v874
      %v876 = vlaneseq
      %v877 = vshrl.u32 %v876, 7
      %v878 = vsub.s32 %v875, %v877
      %v879 = vrot.slane %v857, %v878
      %v881 = vunpack.c.l.s4 1966171168
      %v882 = vunpack.c.0.s8 %v881
      %v883 = vlaneseq
      %v884 = vshrl.u32 %v883, 7
      %v885 = vsub.s32 %v882, %v884
      %v886 = vrot.slane %v858, %v885
      %v887 = vcombine.high %v865, %v865
      %v888 = vcombine.high %v872, %v872
      %v889 = vcombine.high %v879, %v879
      %v890 = vcombine.high %v886, %v886
      %v891 = vcombine.high %v737, %v737
      %v893 = vunpack.c.l.s4 1966171168
      %v894 = vunpack.c.0.s8 %v893
      %v895 = vlaneseq
      %v896 = vshrl.u32 %v895, 7
      %v897 = vsub.s32 %v894, %v896
      %v898 = vrot.slane %v737, %v897
      %v900 = vunpack.c.l.s4 1966171168
      %v901 = vunpack.c.0.s8 %v900
      %v902 = vlaneseq
      %v903 = vshrl.u32 %v902, 7
      %v904 = vsub.s32 %v901, %v903
      %v905 = vrot.slane %v891, %v904
      %v906 = vcombine.high %v898, %v898
      %v907 = vcombine.high %v905, %v905
      %v909 = vunpack.c.l.s4 1966171168
      %v910 = vunpack.c.0.s8 %v909
      %v911 = vlaneseq
      %v912 = vshrl.u32 %v911, 7
      %v913 = vsub.s32 %v910, %v912
      %v914 = vrot.slane %v898, %v913
      %v916 = vunpack.c.l.s4 1966171168
      %v917 = vunpack.c.0.s8 %v916
      %v918 = vlaneseq
      %v919 = vshrl.u32 %v918, 7
      %v920 = vsub.s32 %v917, %v919
      %v921 = vrot.slane %v905, %v920
      %v923 = vunpack.c.l.s4 1966171168
      %v924 = vunpack.c.0.s8 %v923
      %v925 = vlaneseq
      %v926 = vshrl.u32 %v925, 7
      %v927 = vsub.s32 %v924, %v926
      %v928 = vrot.slane %v906, %v927
      %v930 = vunpack.c.l.s4 1966171168
      %v931 = vunpack.c.0.s8 %v930
      %v932 = vlaneseq
      %v933 = vshrl.u32 %v932, 7
      %v934 = vsub.s32 %v931, %v933
      %v935 = vrot.slane %v907, %v934
      %v936 = vcombine.high %v914, %v914
      %v937 = vcombine.high %v921, %v921
      %v938 = vcombine.high %v928, %v928
      %v939 = vcombine.high %v935, %v935
      %v940 = vlaneseq
      %v941 = vshrl.u32 %v940, 7
      %v942 = vsub.s32 0, %v941
      %v943 = vrot.slane %v767, %v942
      %v944 = vlaneseq
      %v945 = vshrl.u32 %v944, 7
      %v946 = vsub.s32 0, %v945
      %v947 = vrot.slane %v781, %v946
      %v948 = vlaneseq
      %v949 = vshrl.u32 %v948, 7
      %v950 = vsub.s32 0, %v949
      %v951 = vrot.slane %v789, %v950
      %v952 = vlaneseq
      %v953 = vshrl.u32 %v952, 7
      %v954 = vsub.s32 0, %v953
      %v955 = vrot.slane %v791, %v954
      %v956 = vlaneseq
      %v957 = vshrl.u32 %v956, 7
      %v958 = vsub.s32 0, %v957
      %v959 = vrot.slane %v774, %v958
      %v960 = vlaneseq
      %v961 = vshrl.u32 %v960, 7
      %v962 = vsub.s32 0, %v961
      %v963 = vrot.slane %v788, %v962
      %v964 = vlaneseq
      %v965 = vshrl.u32 %v964, 7
      %v966 = vsub.s32 0, %v965
      %v967 = vrot.slane %v790, %v966
      %v968 = vlaneseq
      %v969 = vshrl.u32 %v968, 7
      %v970 = vsub.s32 0, %v969
      %v971 = vrot.slane %v792, %v970
      %v972 = vlaneseq
      %v973 = vshrl.u32 %v972, 7
      %v974 = vsub.s32 0, %v973
      %v975 = vrot.slane %v816, %v974
      %v976 = vlaneseq
      %v977 = vshrl.u32 %v976, 7
      %v978 = vsub.s32 0, %v977
      %v979 = vrot.slane %v830, %v978
      %v980 = vlaneseq
      %v981 = vshrl.u32 %v980, 7
      %v982 = vsub.s32 0, %v981
      %v983 = vrot.slane %v838, %v982
      %v984 = vlaneseq
      %v985 = vshrl.u32 %v984, 7
      %v986 = vsub.s32 0, %v985
      %v987 = vrot.slane %v840, %v986
      %v988 = vlaneseq
      %v989 = vshrl.u32 %v988, 7
      %v990 = vsub.s32 0, %v989
      %v991 = vrot.slane %v823, %v990
      %v992 = vlaneseq
      %v993 = vshrl.u32 %v992, 7
      %v994 = vsub.s32 0, %v993
      %v995 = vrot.slane %v837, %v994
      %v996 = vlaneseq
      %v997 = vshrl.u32 %v996, 7
      %v998 = vsub.s32 0, %v997
      %v999 = vrot.slane %v839, %v998
      %v1000 = vlaneseq
      %v1001 = vshrl.u32 %v1000, 7
      %v1002 = vsub.s32 0, %v1001
      %v1003 = vrot.slane %v841, %v1002
      %v1004 = vlaneseq
      %v1005 = vshrl.u32 %v1004, 7
      %v1006 = vsub.s32 0, %v1005
      %v1007 = vrot.slane %v865, %v1006
      %v1008 = vlaneseq
      %v1009 = vshrl.u32 %v1008, 7
      %v1010 = vsub.s32 0, %v1009
      %v1011 = vrot.slane %v879, %v1010
      %v1012 = vlaneseq
      %v1013 = vshrl.u32 %v1012, 7
      %v1014 = vsub.s32 0, %v1013
      %v1015 = vrot.slane %v887, %v1014
      %v1016 = vlaneseq
      %v1017 = vshrl.u32 %v1016, 7
      %v1018 = vsub.s32 0, %v1017
      %v1019 = vrot.slane %v889, %v1018
      %v1020 = vlaneseq
      %v1021 = vshrl.u32 %v1020, 7
      %v1022 = vsub.s32 0, %v1021
      %v1023 = vrot.slane %v872, %v1022
      %v1024 = vlaneseq
      %v1025 = vshrl.u32 %v1024, 7
      %v1026 = vsub.s32 0, %v1025
      %v1027 = vrot.slane %v886, %v1026
      %v1028 = vlaneseq
      %v1029 = vshrl.u32 %v1028, 7
      %v1030 = vsub.s32 0, %v1029
      %v1031 = vrot.slane %v888, %v1030
      %v1032 = vlaneseq
      %v1033 = vshrl.u32 %v1032, 7
      %v1034 = vsub.s32 0, %v1033
      %v1035 = vrot.slane %v890, %v1034
      %v1036 = vlaneseq
      %v1037 = vshrl.u32 %v1036, 7
      %v1038 = vsub.s32 0, %v1037
      %v1039 = vrot.slane %v914, %v1038
      %v1040 = vlaneseq
      %v1041 = vshrl.u32 %v1040, 7
      %v1042 = vsub.s32 0, %v1041
      %v1043 = vrot.slane %v928, %v1042
      %v1044 = vlaneseq
      %v1045 = vshrl.u32 %v1044, 7
      %v1046 = vsub.s32 0, %v1045
      %v1047 = vrot.slane %v936, %v1046
      %v1048 = vlaneseq
      %v1049 = vshrl.u32 %v1048, 7
      %v1050 = vsub.s32 0, %v1049
      %v1051 = vrot.slane %v938, %v1050
      %v1052 = vlaneseq
      %v1053 = vshrl.u32 %v1052, 7
      %v1054 = vsub.s32 0, %v1053
      %v1055 = vrot.slane %v921, %v1054
      %v1056 = vlaneseq
      %v1057 = vshrl.u32 %v1056, 7
      %v1058 = vsub.s32 0, %v1057
      %v1059 = vrot.slane %v935, %v1058
      %v1060 = vlaneseq
      %v1061 = vshrl.u32 %v1060, 7
      %v1062 = vsub.s32 0, %v1061
      %v1063 = vrot.slane %v937, %v1062
      %v1064 = vlaneseq
      %v1065 = vshrl.u32 %v1064, 7
      %v1066 = vsub.s32 0, %v1065
      %v1067 = vrot.slane %v939, %v1066
      %v1100 = vadd.f32 %v541, %v943
      %v1101 = vadd.f32 %v544, %v947
      %v1102 = vadd.f32 %v549, %v951
      %v1103 = vadd.f32 %v552, %v955
      %v1104 = vadd.f32 %v557, %v959
      %v1105 = vadd.f32 %v560, %v963
      %v1106 = vadd.f32 %v565, %v967
      %v1107 = vadd.f32 %v568, %v971
      %v1108 = vadd.f32 %v573, %v975
      %v1109 = vadd.f32 %v576, %v979
      %v1110 = vadd.f32 %v581, %v983
      %v1111 = vadd.f32 %v584, %v987
      %v1112 = vadd.f32 %v589, %v991
      %v1113 = vadd.f32 %v592, %v995
      %v1114 = vadd.f32 %v597, %v999
      %v1115 = vadd.f32 %v600, %v1003
      %v1116 = vadd.f32 %v605, %v1007
      %v1117 = vadd.f32 %v608, %v1011
      %v1118 = vadd.f32 %v613, %v1015
      %v1119 = vadd.f32 %v616, %v1019
      %v1120 = vadd.f32 %v621, %v1023
      %v1121 = vadd.f32 %v624, %v1027
      %v1122 = vadd.f32 %v629, %v1031
      %v1123 = vadd.f32 %v632, %v1035
      %v1124 = vadd.f32 %v637, %v1039
      %v1125 = vadd.f32 %v640, %v1043
      %v1126 = vadd.f32 %v645, %v1047
      %v1127 = vadd.f32 %v648, %v1051
      %v1128 = vadd.f32 %v653, %v1055
      %v1129 = vadd.f32 %v656, %v1059
      %v1130 = vadd.f32 %v661, %v1063
      %v1131 = vadd.f32 %v664, %v1067
      %v1132 = vld [vmem:[%s4] sm:$0x1]
      %v1134 = vlaneseq
      %v1135 = vshrl.u32 %v1134, 7
      %v1136 = vsub.s32 0, %v1135
      %v1137 = vrot.slane %v1132, %v1136
      %v1139 = vmul.f32 %v1100, %v1137
      %v1140 = vmul.f32 %v1101, %v1137
      %v1141 = vmul.f32 %v1102, %v1137
      %v1142 = vmul.f32 %v1103, %v1137
      %v1143 = vmul.f32 %v1104, %v1137
      %v1144 = vmul.f32 %v1105, %v1137
      %v1145 = vmul.f32 %v1106, %v1137
      %v1146 = vmul.f32 %v1107, %v1137
      %v1147 = vmul.f32 %v1108, %v1137
      %v1148 = vmul.f32 %v1109, %v1137
      %v1149 = vmul.f32 %v1110, %v1137
      %v1150 = vmul.f32 %v1111, %v1137
      %v1151 = vmul.f32 %v1112, %v1137
      %v1152 = vmul.f32 %v1113, %v1137
      %v1153 = vmul.f32 %v1114, %v1137
      %v1154 = vmul.f32 %v1115, %v1137
      %v1155 = vmul.f32 %v1116, %v1137
      %v1156 = vmul.f32 %v1117, %v1137
      %v1157 = vmul.f32 %v1118, %v1137
      %v1158 = vmul.f32 %v1119, %v1137
      %v1159 = vmul.f32 %v1120, %v1137
      %v1160 = vmul.f32 %v1121, %v1137
      %v1161 = vmul.f32 %v1122, %v1137
      %v1162 = vmul.f32 %v1123, %v1137
      %v1163 = vmul.f32 %v1124, %v1137
      %v1164 = vmul.f32 %v1125, %v1137
      %v1165 = vmul.f32 %v1126, %v1137
      %v1166 = vmul.f32 %v1127, %v1137
      %v1167 = vmul.f32 %v1128, %v1137
      %v1168 = vmul.f32 %v1129, %v1137
      %v1169 = vmul.f32 %v1130, %v1137
      %v1170 = vmul.f32 %v1131, %v1137
      %v1171 = vld [vmem:[%s5] sm:$0x1]
      %v1173 = vlaneseq
      %v1174 = vshrl.u32 %v1173, 7
      %v1175 = vsub.s32 0, %v1174
      %v1176 = vrot.slane %v1171, %v1175
      %v1178 = vadd.f32 %v1139, %v1176
      %v1179 = vadd.f32 %v1140, %v1176
      %v1180 = vadd.f32 %v1141, %v1176
      %v1181 = vadd.f32 %v1142, %v1176
      %v1182 = vadd.f32 %v1143, %v1176
      %v1183 = vadd.f32 %v1144, %v1176
      %v1184 = vadd.f32 %v1145, %v1176
      %v1185 = vadd.f32 %v1146, %v1176
      %v1186 = vadd.f32 %v1147, %v1176
      %v1187 = vadd.f32 %v1148, %v1176
      %v1188 = vadd.f32 %v1149, %v1176
      %v1189 = vadd.f32 %v1150, %v1176
      %v1190 = vadd.f32 %v1151, %v1176
      %v1191 = vadd.f32 %v1152, %v1176
      %v1192 = vadd.f32 %v1153, %v1176
      %v1193 = vadd.f32 %v1154, %v1176
      %v1194 = vadd.f32 %v1155, %v1176
      %v1195 = vadd.f32 %v1156, %v1176
      %v1196 = vadd.f32 %v1157, %v1176
      %v1197 = vadd.f32 %v1158, %v1176
      %v1198 = vadd.f32 %v1159, %v1176
      %v1199 = vadd.f32 %v1160, %v1176
      %v1200 = vadd.f32 %v1161, %v1176
      %v1201 = vadd.f32 %v1162, %v1176
      %v1202 = vadd.f32 %v1163, %v1176
      %v1203 = vadd.f32 %v1164, %v1176
      %v1204 = vadd.f32 %v1165, %v1176
      %v1205 = vadd.f32 %v1166, %v1176
      %v1206 = vadd.f32 %v1167, %v1176
      %v1207 = vadd.f32 %v1168, %v1176
      %v1208 = vadd.f32 %v1169, %v1176
      %v1209 = vadd.f32 %v1170, %v1176
      %v1210 = vmul.f32 %v1178, 0.2
      %v1211 = vmul.f32 %v1179, 0.2
      %v1212 = vmul.f32 %v1180, 0.2
      %v1213 = vmul.f32 %v1181, 0.2
      %v1214 = vmul.f32 %v1182, 0.2
      %v1215 = vmul.f32 %v1183, 0.2
      %v1216 = vmul.f32 %v1184, 0.2
      %v1217 = vmul.f32 %v1185, 0.2
      %v1218 = vmul.f32 %v1186, 0.2
      %v1219 = vmul.f32 %v1187, 0.2
      %v1220 = vmul.f32 %v1188, 0.2
      %v1221 = vmul.f32 %v1189, 0.2
      %v1222 = vmul.f32 %v1190, 0.2
      %v1223 = vmul.f32 %v1191, 0.2
      %v1224 = vmul.f32 %v1192, 0.2
      %v1225 = vmul.f32 %v1193, 0.2
      %v1226 = vmul.f32 %v1194, 0.2
      %v1227 = vmul.f32 %v1195, 0.2
      %v1228 = vmul.f32 %v1196, 0.2
      %v1229 = vmul.f32 %v1197, 0.2
      %v1230 = vmul.f32 %v1198, 0.2
      %v1231 = vmul.f32 %v1199, 0.2
      %v1232 = vmul.f32 %v1200, 0.2
      %v1233 = vmul.f32 %v1201, 0.2
      %v1234 = vmul.f32 %v1202, 0.2
      %v1235 = vmul.f32 %v1203, 0.2
      %v1236 = vmul.f32 %v1204, 0.2
      %v1237 = vmul.f32 %v1205, 0.2
      %v1238 = vmul.f32 %v1206, 0.2
      %v1239 = vmul.f32 %v1207, 0.2
      %v1240 = vmul.f32 %v1208, 0.2
      %v1241 = vmul.f32 %v1209, 0.2
      %v1242 = vmax.f32 %v1178, %v1210
      %v1243 = vmax.f32 %v1179, %v1211
      %v1244 = vmax.f32 %v1180, %v1212
      %v1245 = vmax.f32 %v1181, %v1213
      %v1246 = vmax.f32 %v1182, %v1214
      %v1247 = vmax.f32 %v1183, %v1215
      %v1248 = vmax.f32 %v1184, %v1216
      %v1249 = vmax.f32 %v1185, %v1217
      %v1250 = vmax.f32 %v1186, %v1218
      %v1251 = vmax.f32 %v1187, %v1219
      %v1252 = vmax.f32 %v1188, %v1220
      %v1253 = vmax.f32 %v1189, %v1221
      %v1254 = vmax.f32 %v1190, %v1222
      %v1255 = vmax.f32 %v1191, %v1223
      %v1256 = vmax.f32 %v1192, %v1224
      %v1257 = vmax.f32 %v1193, %v1225
      %v1258 = vmax.f32 %v1194, %v1226
      %v1259 = vmax.f32 %v1195, %v1227
      %v1260 = vmax.f32 %v1196, %v1228
      %v1261 = vmax.f32 %v1197, %v1229
      %v1262 = vmax.f32 %v1198, %v1230
      %v1263 = vmax.f32 %v1199, %v1231
      %v1264 = vmax.f32 %v1200, %v1232
      %v1265 = vmax.f32 %v1201, %v1233
      %v1266 = vmax.f32 %v1202, %v1234
      %v1267 = vmax.f32 %v1203, %v1235
      %v1268 = vmax.f32 %v1204, %v1236
      %v1269 = vmax.f32 %v1205, %v1237
      %v1270 = vmax.f32 %v1206, %v1238
      %v1271 = vmax.f32 %v1207, %v1239
      %v1272 = vmax.f32 %v1208, %v1240
      %v1273 = vmax.f32 %v1209, %v1241
      %v1274 = vpack.c.bf16 %v1243, %v1242
      %v1275 = vpack.c.bf16 %v1245, %v1244
      %v1276 = vpack.c.bf16 %v1247, %v1246
      %v1277 = vpack.c.bf16 %v1249, %v1248
      %v1278 = vpack.c.bf16 %v1251, %v1250
      %v1279 = vpack.c.bf16 %v1253, %v1252
      %v1280 = vpack.c.bf16 %v1255, %v1254
      %v1281 = vpack.c.bf16 %v1257, %v1256
      %v1282 = vpack.c.bf16 %v1259, %v1258
      %v1283 = vpack.c.bf16 %v1261, %v1260
      %v1284 = vpack.c.bf16 %v1263, %v1262
      %v1285 = vpack.c.bf16 %v1265, %v1264
      %v1286 = vpack.c.bf16 %v1267, %v1266
      %v1287 = vpack.c.bf16 %v1269, %v1268
      %v1288 = vpack.c.bf16 %v1271, %v1270
      %v1289 = vpack.c.bf16 %v1273, %v1272
      %v1290 = vld [vmem:[%s6] sm:$0xf]
      %v1291 = vld [vmem:[%s6 + $0x4] sm:$0xf]
      %v1292 = vld [vmem:[%s6 + $0x8] sm:$0xf]
      %v1293 = vld [vmem:[%s6 + $0xc] sm:$0xf]
      %v1298 = vunpack.c.l.b16 %v1290
      %v1299 = vunpack.c.l.b16 %v1291
      %v1300 = vunpack.c.l.b16 %v1292
      %v1301 = vunpack.c.l.b16 %v1293
      %v1302 = vpack.c.b16 %v1299, %v1298
      %v1303 = vpack.c.b16 %v1301, %v1300
      %vm1306 = vcmask 261120
      %v1308 = vsel %vm1306, %v1274, 0
      %v1311 = vsel %vm1306, %v1275, 0
      %v1314 = vsel %vm1306, %v1276, 0
      %v1317 = vsel %vm1306, %v1277, 0
      %v1320 = vsel %vm1306, %v1278, 0
      %v1323 = vsel %vm1306, %v1279, 0
      %v1326 = vsel %vm1306, %v1280, 0
      %v1329 = vsel %vm1306, %v1281, 0
      %v1332 = vsel %vm1306, %v1282, 0
      %v1335 = vsel %vm1306, %v1283, 0
      %v1338 = vsel %vm1306, %v1284, 0
      %v1341 = vsel %vm1306, %v1285, 0
      %v1344 = vsel %vm1306, %v1286, 0
      %v1347 = vsel %vm1306, %v1287, 0
      %v1350 = vsel %vm1306, %v1288, 0
      %v1353 = vsel %vm1306, %v1289, 0
      %1355 = vmatprep.subr.bf16.mxu0 0
      %1356 = vmatpush1.bf16.msra.mxu0 %v1302
      %1357 = vmatprep.subr.bf16.mxu0 0
      %1358 = vmatpush1.bf16.msra.mxu0 %v1303
      %1359 = vmatprep.subr.bf16.mxu0 0
      %1360 = vmatpush1.bf16.msra.mxu0 0
      %1361 = vmatprep.subr.bf16.mxu0 0
      %1362 = vmatpush1.bf16.msra.mxu0 0
      %1363 = vmatprep.subr.bf16.mxu0 0
      %1364 = vmatpush1.bf16.msra.mxu0 0
      %1365 = vmatprep.subr.bf16.mxu0 0
      %1366 = vmatpush1.bf16.msra.mxu0 0
      %1367 = vmatprep.subr.bf16.mxu0 0
      %1368 = vmatpush1.bf16.msra.mxu0 0
      %1369 = vmatprep.subr.bf16.mxu0 0
      %1370 = vmatpush1.bf16.msra.mxu0 0
      %1371 = vmatprep.subr.bf16.mxu0 0
      %1372 = vmatpush1.bf16.msra.mxu0 0
      %1373 = vmatprep.subr.bf16.mxu0 0
      %1374 = vmatpush1.bf16.msra.mxu0 0
      %1375 = vmatprep.subr.bf16.mxu0 0
      %1376 = vmatpush1.bf16.msra.mxu0 0
      %1377 = vmatprep.subr.bf16.mxu0 0
      %1378 = vmatpush1.bf16.msra.mxu0 0
      %1379 = vmatprep.subr.bf16.mxu0 0
      %1380 = vmatpush1.bf16.msra.mxu0 0
      %1381 = vmatprep.subr.bf16.mxu0 0
      %1382 = vmatpush1.bf16.msra.mxu0 0
      %1383 = vmatprep.subr.bf16.mxu0 0
      %1384 = vmatpush1.bf16.msra.mxu0 0
      %1385 = vmatprep.subr.bf16.mxu0 0
      %1386 = vmatpush1.bf16.msra.mxu0 0
      %1387 = vmatprep.mubr.bf16.mxu0 0
      %1388 = vmatmul.mubr.bf16.gmra.mrb[0].mxu0 %v1308
      %v1389 = vpop.f32.mrb[0].mxu0
      %v1390 = vadd.f32 0.0, %v1389
      %v1391 = vpop.f32.mrb[0].mxu0
      %v1392 = vpop.f32.mrb[0].mxu0
      %v1393 = vadd.f32 0.0, %v1392
      %v1394 = vpop.f32.mrb[0].mxu0
      %1395 = vmatprep.mubr.bf16.mxu0 0
      %1396 = vmatmul.mubr.bf16.gmra.mrb[0].mxu0 %v1311
      %v1397 = vpop.f32.mrb[0].mxu0
      %v1398 = vadd.f32 0.0, %v1397
      %v1399 = vpop.f32.mrb[0].mxu0
      %v1400 = vpop.f32.mrb[0].mxu0
      %v1401 = vadd.f32 0.0, %v1400
      %v1402 = vpop.f32.mrb[0].mxu0
      %1403 = vmatprep.mubr.bf16.mxu0 0
      %1404 = vmatmul.mubr.bf16.gmra.mrb[0].mxu0 %v1314
      %v1405 = vpop.f32.mrb[0].mxu0
      %v1406 = vadd.f32 0.0, %v1405
      %v1407 = vpop.f32.mrb[0].mxu0
      %v1408 = vpop.f32.mrb[0].mxu0
      %v1409 = vadd.f32 0.0, %v1408
      %v1410 = vpop.f32.mrb[0].mxu0
      %1411 = vmatprep.mubr.bf16.mxu0 0
      %1412 = vmatmul.mubr.bf16.gmra.mrb[0].mxu0 %v1317
      %v1413 = vpop.f32.mrb[0].mxu0
      %v1414 = vadd.f32 0.0, %v1413
      %v1415 = vpop.f32.mrb[0].mxu0
      %v1416 = vpop.f32.mrb[0].mxu0
      %v1417 = vadd.f32 0.0, %v1416
      %v1418 = vpop.f32.mrb[0].mxu0
      %1419 = vmatprep.mubr.bf16.mxu0 0
      %1420 = vmatmul.mubr.bf16.gmra.mrb[0].mxu0 %v1320
      %v1421 = vpop.f32.mrb[0].mxu0
      %v1422 = vadd.f32 0.0, %v1421
      %v1423 = vpop.f32.mrb[0].mxu0
      %v1424 = vpop.f32.mrb[0].mxu0
      %v1425 = vadd.f32 0.0, %v1424
      %v1426 = vpop.f32.mrb[0].mxu0
      %1427 = vmatprep.mubr.bf16.mxu0 0
      %1428 = vmatmul.mubr.bf16.gmra.mrb[0].mxu0 %v1323
      %v1429 = vpop.f32.mrb[0].mxu0
      %v1430 = vadd.f32 0.0, %v1429
      %v1431 = vpop.f32.mrb[0].mxu0
      %v1432 = vpop.f32.mrb[0].mxu0
      %v1433 = vadd.f32 0.0, %v1432
      %v1434 = vpop.f32.mrb[0].mxu0
      %1435 = vmatprep.mubr.bf16.mxu0 0
      %1436 = vmatmul.mubr.bf16.gmra.mrb[0].mxu0 %v1326
      %v1437 = vpop.f32.mrb[0].mxu0
      %v1438 = vadd.f32 0.0, %v1437
      %v1439 = vpop.f32.mrb[0].mxu0
      %v1440 = vpop.f32.mrb[0].mxu0
      %v1441 = vadd.f32 0.0, %v1440
      %v1442 = vpop.f32.mrb[0].mxu0
      %1443 = vmatprep.mubr.bf16.mxu0 0
      %1444 = vmatmul.mubr.bf16.gmra.mrb[0].mxu0 %v1329
      %v1445 = vpop.f32.mrb[0].mxu0
      %v1446 = vadd.f32 0.0, %v1445
      %v1447 = vpop.f32.mrb[0].mxu0
      %v1448 = vpop.f32.mrb[0].mxu0
      %v1449 = vadd.f32 0.0, %v1448
      %v1450 = vpop.f32.mrb[0].mxu0
      %1451 = vmatprep.mubr.bf16.mxu0 0
      %1452 = vmatmul.mubr.bf16.gmra.mrb[0].mxu0 %v1332
      %v1453 = vpop.f32.mrb[0].mxu0
      %v1454 = vadd.f32 0.0, %v1453
      %v1455 = vpop.f32.mrb[0].mxu0
      %v1456 = vpop.f32.mrb[0].mxu0
      %v1457 = vadd.f32 0.0, %v1456
      %v1458 = vpop.f32.mrb[0].mxu0
      %1459 = vmatprep.mubr.bf16.mxu0 0
      %1460 = vmatmul.mubr.bf16.gmra.mrb[0].mxu0 %v1335
      %v1461 = vpop.f32.mrb[0].mxu0
      %v1462 = vadd.f32 0.0, %v1461
      %v1463 = vpop.f32.mrb[0].mxu0
      %v1464 = vpop.f32.mrb[0].mxu0
      %v1465 = vadd.f32 0.0, %v1464
      %v1466 = vpop.f32.mrb[0].mxu0
      %1467 = vmatprep.mubr.bf16.mxu0 0
      %1468 = vmatmul.mubr.bf16.gmra.mrb[0].mxu0 %v1338
      %v1469 = vpop.f32.mrb[0].mxu0
      %v1470 = vadd.f32 0.0, %v1469
      %v1471 = vpop.f32.mrb[0].mxu0
      %v1472 = vpop.f32.mrb[0].mxu0
      %v1473 = vadd.f32 0.0, %v1472
      %v1474 = vpop.f32.mrb[0].mxu0
      %1475 = vmatprep.mubr.bf16.mxu0 0
      %1476 = vmatmul.mubr.bf16.gmra.mrb[0].mxu0 %v1341
      %v1477 = vpop.f32.mrb[0].mxu0
      %v1478 = vadd.f32 0.0, %v1477
      %v1479 = vpop.f32.mrb[0].mxu0
      %v1480 = vpop.f32.mrb[0].mxu0
      %v1481 = vadd.f32 0.0, %v1480
      %v1482 = vpop.f32.mrb[0].mxu0
      %1483 = vmatprep.mubr.bf16.mxu0 0
      %1484 = vmatmul.mubr.bf16.gmra.mrb[0].mxu0 %v1344
      %v1485 = vpop.f32.mrb[0].mxu0
      %v1486 = vadd.f32 0.0, %v1485
      %v1487 = vpop.f32.mrb[0].mxu0
      %v1488 = vpop.f32.mrb[0].mxu0
      %v1489 = vadd.f32 0.0, %v1488
      %v1490 = vpop.f32.mrb[0].mxu0
      %1491 = vmatprep.mubr.bf16.mxu0 0
      %1492 = vmatmul.mubr.bf16.gmra.mrb[0].mxu0 %v1347
      %v1493 = vpop.f32.mrb[0].mxu0
      %v1494 = vadd.f32 0.0, %v1493
      %v1495 = vpop.f32.mrb[0].mxu0
      %v1496 = vpop.f32.mrb[0].mxu0
      %v1497 = vadd.f32 0.0, %v1496
      %v1498 = vpop.f32.mrb[0].mxu0
      %1499 = vmatprep.mubr.bf16.mxu0 0
      %1500 = vmatmul.mubr.bf16.gmra.mrb[0].mxu0 %v1350
      %v1501 = vpop.f32.mrb[0].mxu0
      %v1502 = vadd.f32 0.0, %v1501
      %v1503 = vpop.f32.mrb[0].mxu0
      %v1504 = vpop.f32.mrb[0].mxu0
      %v1505 = vadd.f32 0.0, %v1504
      %v1506 = vpop.f32.mrb[0].mxu0
      %1507 = vmatprep.mubr.bf16.mxu0 0
      %1508 = vmatmul.mubr.bf16.gmra.mrb[0].mxu0 %v1353
      %v1509 = vpop.f32.mrb[0].mxu0
      %v1510 = vadd.f32 0.0, %v1509
      %v1511 = vpop.f32.mrb[0].mxu0
      %v1512 = vpop.f32.mrb[0].mxu0
      %v1513 = vadd.f32 0.0, %v1512
      %v1514 = vpop.f32.mrb[0].mxu0
      %1515 = vdwg.mxu0
      %v1516 = vsel %vm1306, %v1390, 0.0
      %v1517 = vsel %vm1306, %v1393, 0.0
      %v1518 = vadd.f32 %v1516, %v1517
      %v1519 = vsel %vm1306, %v1398, 0.0
      %v1520 = vadd.f32 %v1518, %v1519
      %v1521 = vsel %vm1306, %v1401, 0.0
      %v1522 = vadd.f32 %v1520, %v1521
      %v1523 = vsel %vm1306, %v1406, 0.0
      %v1524 = vadd.f32 %v1522, %v1523
      %v1525 = vsel %vm1306, %v1409, 0.0
      %v1526 = vadd.f32 %v1524, %v1525
      %v1527 = vsel %vm1306, %v1414, 0.0
      %v1528 = vadd.f32 %v1526, %v1527
      %v1529 = vsel %vm1306, %v1417, 0.0
      %v1530 = vadd.f32 %v1528, %v1529
      %v1531 = vsel %vm1306, %v1422, 0.0
      %v1532 = vadd.f32 %v1530, %v1531
      %v1533 = vsel %vm1306, %v1425, 0.0
      %v1534 = vadd.f32 %v1532, %v1533
      %v1535 = vsel %vm1306, %v1430, 0.0
      %v1536 = vadd.f32 %v1534, %v1535
      %v1537 = vsel %vm1306, %v1433, 0.0
      %v1538 = vadd.f32 %v1536, %v1537
      %v1539 = vsel %vm1306, %v1438, 0.0
      %v1540 = vadd.f32 %v1538, %v1539
      %v1541 = vsel %vm1306, %v1441, 0.0
      %v1542 = vadd.f32 %v1540, %v1541
      %v1543 = vsel %vm1306, %v1446, 0.0
      %v1544 = vadd.f32 %v1542, %v1543
      %v1545 = vsel %vm1306, %v1449, 0.0
      %v1546 = vadd.f32 %v1544, %v1545
      %v1547 = vsel %vm1306, %v1454, 0.0
      %v1548 = vadd.f32 %v1546, %v1547
      %v1549 = vsel %vm1306, %v1457, 0.0
      %v1550 = vadd.f32 %v1548, %v1549
      %v1551 = vsel %vm1306, %v1462, 0.0
      %v1552 = vadd.f32 %v1550, %v1551
      %v1553 = vsel %vm1306, %v1465, 0.0
      %v1554 = vadd.f32 %v1552, %v1553
      %v1555 = vsel %vm1306, %v1470, 0.0
      %v1556 = vadd.f32 %v1554, %v1555
      %v1557 = vsel %vm1306, %v1473, 0.0
      %v1558 = vadd.f32 %v1556, %v1557
      %v1559 = vsel %vm1306, %v1478, 0.0
      %v1560 = vadd.f32 %v1558, %v1559
      %v1561 = vsel %vm1306, %v1481, 0.0
      %v1562 = vadd.f32 %v1560, %v1561
      %v1563 = vsel %vm1306, %v1486, 0.0
      %v1564 = vadd.f32 %v1562, %v1563
      %v1565 = vsel %vm1306, %v1489, 0.0
      %v1566 = vadd.f32 %v1564, %v1565
      %v1567 = vsel %vm1306, %v1494, 0.0
      %v1568 = vadd.f32 %v1566, %v1567
      %v1569 = vsel %vm1306, %v1497, 0.0
      %v1570 = vadd.f32 %v1568, %v1569
      %v1571 = vsel %vm1306, %v1502, 0.0
      %v1572 = vadd.f32 %v1570, %v1571
      %v1573 = vsel %vm1306, %v1505, 0.0
      %v1574 = vadd.f32 %v1572, %v1573
      %v1575 = vsel %vm1306, %v1510, 0.0
      %v1576 = vadd.f32 %v1574, %v1575
      %v1577 = vsel %vm1306, %v1513, 0.0
      %v1578 = vadd.f32 %v1576, %v1577
      %1579 = vst.msk [vmem:[%s334] sm:$0xff] %vm1306, %v1578
      %v1580 = vmul.f32 %v1390, %v1390
      %v1581 = vmul.f32 %v1393, %v1393
      %v1582 = vmul.f32 %v1398, %v1398
      %v1583 = vmul.f32 %v1401, %v1401
      %v1584 = vmul.f32 %v1406, %v1406
      %v1585 = vmul.f32 %v1409, %v1409
      %v1586 = vmul.f32 %v1414, %v1414
      %v1587 = vmul.f32 %v1417, %v1417
      %v1588 = vmul.f32 %v1422, %v1422
      %v1589 = vmul.f32 %v1425, %v1425
      %v1590 = vmul.f32 %v1430, %v1430
      %v1591 = vmul.f32 %v1433, %v1433
      %v1592 = vmul.f32 %v1438, %v1438
      %v1593 = vmul.f32 %v1441, %v1441
      %v1594 = vmul.f32 %v1446, %v1446
      %v1595 = vmul.f32 %v1449, %v1449
      %v1596 = vmul.f32 %v1454, %v1454
      %v1597 = vmul.f32 %v1457, %v1457
      %v1598 = vmul.f32 %v1462, %v1462
      %v1599 = vmul.f32 %v1465, %v1465
      %v1600 = vmul.f32 %v1470, %v1470
      %v1601 = vmul.f32 %v1473, %v1473
      %v1602 = vmul.f32 %v1478, %v1478
      %v1603 = vmul.f32 %v1481, %v1481
      %v1604 = vmul.f32 %v1486, %v1486
      %v1605 = vmul.f32 %v1489, %v1489
      %v1606 = vmul.f32 %v1494, %v1494
      %v1607 = vmul.f32 %v1497, %v1497
      %v1608 = vmul.f32 %v1502, %v1502
      %v1609 = vmul.f32 %v1505, %v1505
      %v1610 = vmul.f32 %v1510, %v1510
      %v1611 = vmul.f32 %v1513, %v1513
      %v1612 = vsel %vm1306, %v1580, 0.0
      %v1613 = vsel %vm1306, %v1581, 0.0
      %v1614 = vadd.f32 %v1612, %v1613
      %v1615 = vsel %vm1306, %v1582, 0.0
      %v1616 = vadd.f32 %v1614, %v1615
      %v1617 = vsel %vm1306, %v1583, 0.0
      %v1618 = vadd.f32 %v1616, %v1617
      %v1619 = vsel %vm1306, %v1584, 0.0
      %v1620 = vadd.f32 %v1618, %v1619
      %v1621 = vsel %vm1306, %v1585, 0.0
      %v1622 = vadd.f32 %v1620, %v1621
      %v1623 = vsel %vm1306, %v1586, 0.0
      %v1624 = vadd.f32 %v1622, %v1623
      %v1625 = vsel %vm1306, %v1587, 0.0
      %v1626 = vadd.f32 %v1624, %v1625
      %v1627 = vsel %vm1306, %v1588, 0.0
      %v1628 = vadd.f32 %v1626, %v1627
      %v1629 = vsel %vm1306, %v1589, 0.0
      %v1630 = vadd.f32 %v1628, %v1629
      %v1631 = vsel %vm1306, %v1590, 0.0
      %v1632 = vadd.f32 %v1630, %v1631
      %v1633 = vsel %vm1306, %v1591, 0.0
      %v1634 = vadd.f32 %v1632, %v1633
      %v1635 = vsel %vm1306, %v1592, 0.0
      %v1636 = vadd.f32 %v1634, %v1635
      %v1637 = vsel %vm1306, %v1593, 0.0
      %v1638 = vadd.f32 %v1636, %v1637
      %v1639 = vsel %vm1306, %v1594, 0.0
      %v1640 = vadd.f32 %v1638, %v1639
      %v1641 = vsel %vm1306, %v1595, 0.0
      %v1642 = vadd.f32 %v1640, %v1641
      %v1643 = vsel %vm1306, %v1596, 0.0
      %v1644 = vadd.f32 %v1642, %v1643
      %v1645 = vsel %vm1306, %v1597, 0.0
      %v1646 = vadd.f32 %v1644, %v1645
      %v1647 = vsel %vm1306, %v1598, 0.0
      %v1648 = vadd.f32 %v1646, %v1647
      %v1649 = vsel %vm1306, %v1599, 0.0
      %v1650 = vadd.f32 %v1648, %v1649
      %v1651 = vsel %vm1306, %v1600, 0.0
      %v1652 = vadd.f32 %v1650, %v1651
      %v1653 = vsel %vm1306, %v1601, 0.0
      %v1654 = vadd.f32 %v1652, %v1653
      %v1655 = vsel %vm1306, %v1602, 0.0
      %v1656 = vadd.f32 %v1654, %v1655
      %v1657 = vsel %vm1306, %v1603, 0.0
      %v1658 = vadd.f32 %v1656, %v1657
      %v1659 = vsel %vm1306, %v1604, 0.0
      %v1660 = vadd.f32 %v1658, %v1659
      %v1661 = vsel %vm1306, %v1605, 0.0
      %v1662 = vadd.f32 %v1660, %v1661
      %v1663 = vsel %vm1306, %v1606, 0.0
      %v1664 = vadd.f32 %v1662, %v1663
      %v1665 = vsel %vm1306, %v1607, 0.0
      %v1666 = vadd.f32 %v1664, %v1665
      %v1667 = vsel %vm1306, %v1608, 0.0
      %v1668 = vadd.f32 %v1666, %v1667
      %v1669 = vsel %vm1306, %v1609, 0.0
      %v1670 = vadd.f32 %v1668, %v1669
      %v1671 = vsel %vm1306, %v1610, 0.0
      %v1672 = vadd.f32 %v1670, %v1671
      %v1673 = vsel %vm1306, %v1611, 0.0
      %v1674 = vadd.f32 %v1672, %v1673
      %1675 = vst.msk [vmem:[%s338] sm:$0xff] %vm1306, %v1674
      %p1676 = scmp.lt.s32.totalorder %s20, 7
      %s1677 = scalar_select %p1676, %s20, 7
      %s1678 = smul.addr %s1677, 8
      %s1679 = scalar_lea.vmem %s7, %s1678
      %p1680 = scmp.lt.s32.totalorder %s20, 7
      %s1681 = scalar_select %p1680, %s20, 7
      %s1682 = smul.addr %s1681, 8
      %s1683 = scalar_lea.vmem %s8, %s1682
      // Predicated region
      $region49: #{edge_graph_conv_block.4} parent=47 // pred_check
        %p1684 = pneg %p195
      $region50: #{edge_graph_conv_block.4} parent=47 // pred_check_branch
        %1686 = sbr.rel (%p1684) target = $region52
      $region51: #{edge_graph_conv_block.4} parent=47 // pred_region
        _
      $region52: #{edge_graph_conv_block.4} parent=47 // pred_fallthru
        _
      // Predicated region
      $region53: #{edge_graph_conv_block.4} parent=47 // pred_check
        %p1687 = pneg %p221
      $region54: #{edge_graph_conv_block.4} parent=47 // pred_check_branch
        %1689 = sbr.rel (%p1687) target = $region56
      $region55: #{edge_graph_conv_block.4} parent=47 // pred_region
        _
      $region56: #{edge_graph_conv_block.4} parent=47 // pred_fallthru
        _
    $region48: #{edge_graph_conv_block.4} parent=5 // pred_fallthru
      _
    %p1690 = scmp.le.s32.totalorder 2, %s15
    // Predicated region
    $region57: #{edge_graph_conv_block.4} parent=5 // pred_check
      %p1691 = pneg %p1690
    $region58: #{edge_graph_conv_block.4} parent=5 // pred_check_branch
      %1693 = sbr.rel (%p1691) target = $region60
    $region59: #{edge_graph_conv_block.4} parent=5 // pred_region
      %s1694 = ssub.s32 %s15, 2
      // Predicated region
      $region61: #{edge_graph_conv_block.4} parent=59 // pred_check
        %p1695 = pneg %p201
      $region62: #{edge_graph_conv_block.4} parent=59 // pred_check_branch
        %1697 = sbr.rel (%p1695) target = $region64
      $region63: #{edge_graph_conv_block.4} parent=59 // pred_region
        %p1698 = scmp.lt.s32.totalorder %s21, 7
        %s1699 = scalar_select %p1698, %s21, 7
        %s1700 = smul.addr %s1699, 8
        %s1701 = scalar_lea.vmem %s7, %s1700
      $region64: #{edge_graph_conv_block.4} parent=59 // pred_fallthru
        _
      // Predicated region
      $region65: #{edge_graph_conv_block.4} parent=59 // pred_check
        %p1702 = pneg %p227
      $region66: #{edge_graph_conv_block.4} parent=59 // pred_check_branch
        %1704 = sbr.rel (%p1702) target = $region68
      $region67: #{edge_graph_conv_block.4} parent=59 // pred_region
        %p1705 = scmp.lt.s32.totalorder %s21, 7
        %s1706 = scalar_select %p1705, %s21, 7
        %s1707 = smul.addr %s1706, 8
        %s1708 = scalar_lea.vmem %s8, %s1707
      $region68: #{edge_graph_conv_block.4} parent=59 // pred_fallthru
        _
    $region60: #{edge_graph_conv_block.4} parent=5 // pred_fallthru
      _
  $region6: #{edge_graph_conv_block.4} parent=0 // loop_footer
    %s19 = sadd.s32 1, %s15
  $region7: #{edge_graph_conv_block.4} parent=0 // loop_footer_branch
    %14 = sbr.rel target = $region3
  $region8: #{edge_graph_conv_block.4} parent=0 // loop_exit
    _

// kernel: edge_graph_conv_block.5
$region0: #{edge_graph_conv_block.5}
  #allocation0 [shape = 'u32[]', space=smem, size = 0x4, offset = 0x4, fixed_abs, tag = 'smem constant byte address 0x4 - core index']
  #allocation1 [shape = 'u32[144,128]{1,0:T(1,128)}', space=vmem, size = 0x12000, scoped, tag = 'internal scratch']
  %s0 = inlined_call_operand.vmem [shape: bf16[2048,8], index: 0, kind: input, shape index: {}]
  %s1 = inlined_call_operand.vmem [shape: bf16[256,8], index: 1, kind: input, shape index: {}]
  %s2 = inlined_call_operand.vmem [shape: bf16[8,32], index: 2, kind: input, shape index: {}]
  %s3 = inlined_call_operand.vmem [shape: bf16[8,32], index: 3, kind: input, shape index: {}]
  %s4 = inlined_call_operand.vmem [shape: f32[1,32], index: 4, kind: input, shape index: {}]
  %s5 = inlined_call_operand.vmem [shape: f32[1,32], index: 5, kind: input, shape index: {}]
  %s6 = inlined_call_operand.vmem [shape: bf16[32,32], index: 6, kind: input, shape index: {}]
  %s7 = inlined_call_operand.vmem [shape: f32[1,32], index: 7, kind: input, shape index: {}]
  %s8 = inlined_call_operand.vmem [shape: f32[1,32], index: 8, kind: input, shape index: {}]
  %s9 = inlined_call_operand.vmem [shape: f32[256,32], index: 9, kind: output, shape index: {}]
  %s10 = sld [smem:[#allocation0]]
  $region69: #{edge_graph_conv_block.5} parent=0
    _
  %s12 = ssub.s32 1, %s10
  %s13 = scalar_select 0, %s12, %s10
  loop: start=0, step=1, limit=10
  $region2: #{edge_graph_conv_block.5} parent=0 // loop_pre_header
    _
  $region3: #{edge_graph_conv_block.5} parent=0 // loop_header
    %s15 = sphi 0, %s19
    %p16 = scmp.ge.s32.totalorder %s15, 10
    %s25 = sphi 0, %s27
    %s28 = sphi 0, %s25
    %s29 = sphi 0, %s28
    %s45 = sphi 0, %s29
    %s51 = sphi 0, %s53
    %s54 = sphi 0, %s51
    %s55 = sphi 0, %s54
    %s71 = sphi 0, %s55
    %s75 = sphi 0, %s75
    %s77 = sphi 0, %s75
    %s78 = sphi 0, %s77
    %s92 = sphi 0, %s78
    %s96 = sphi 0, %s96
    %s98 = sphi 0, %s96
    %s99 = sphi 0, %s98
    %s113 = sphi 0, %s99
    %s117 = sphi 0, %s117
    %s119 = sphi 0, %s117
    %s120 = sphi 0, %s119
    %s134 = sphi 0, %s120
    %s138 = sphi 0, %s138
    %s140 = sphi 0, %s138
    %s141 = sphi 0, %s140
    %s155 = sphi 0, %s141
    %s159 = sphi 0, %s159
    %s161 = sphi 0, %s159
    %s162 = sphi 0, %s161
    %s176 = sphi 0, %s162
    %s180 = sphi 0, %s180
    %s182 = sphi 0, %s180
    %s183 = sphi 0, %s182
    %s197 = sphi 0, %s183
    %s201 = sphi 0, %s201
    %s203 = sphi 0, %s201
    %s204 = sphi 0, %s203
    %s218 = sphi 0, %s204
    %s224 = sphi 0, %s226
    %s227 = sphi 0, %s224
    %s228 = sphi 0, %s227
    %s244 = sphi 0, %s228
  $region4: #{edge_graph_conv_block.5} parent=0 // loop_header_branch
    %18 = sbr.rel (%p16) target = $region8
  $region5: #{edge_graph_conv_block.5} parent=0 // loop_body
    %s20 = ssub.s32 %s15, 1
    %s21 = ssub.s32 %s15, 2
    %s22 = sadd.s32 %s15, 1
    %s23 = ssub.s32 %s15, %s22
    %p24 = scmp.eq.s32.totalorder %s23, 0
    %s26 = sadd.s32 %s25, 1
    %s27 = scalar_select %p24, %s25, %s26
    %p30 = pneg %p24
    %p31 = scmp.eq.s32.totalorder %s15, 7
    %p32 = por %p30, %p31
    %p33 = scmp.ne.s32.totalorder %s25, %s28
    %p34 = scmp.eq.s32.totalorder %s15, 0
    %p35 = por %p33, %p34
    %p36 = scmp.ne.s32.totalorder %s25, %s28
    %p37 = scmp.eq.s32.totalorder %s20, 7
    %p38 = por %p36, %p37
    %p39 = scmp.ne.s32.totalorder %s28, %s29
    %p40 = scmp.eq.s32.totalorder %s20, 0
    %p41 = por %p39, %p40
    %p42 = scmp.ne.s32.totalorder %s28, %s29
    %p43 = scmp.eq.s32.totalorder %s21, 7
    %p44 = por %p42, %p43
    %p46 = scmp.ne.s32.totalorder %s29, %s45
    %p47 = scmp.eq.s32.totalorder %s21, 0
    %p48 = por %p46, %p47
    %s49 = ssub.s32 %s15, %s22
    %p50 = scmp.eq.s32.totalorder %s49, 0
    %s52 = sadd.s32 %s51, 1
    %s53 = scalar_select %p50, %s51, %s52
    %p56 = pneg %p50
    %p57 = scmp.eq.s32.totalorder %s15, 7
    %p58 = por %p56, %p57
    %p59 = scmp.ne.s32.totalorder %s51, %s54
    %p60 = scmp.eq.s32.totalorder %s15, 0
    %p61 = por %p59, %p60
    %p62 = scmp.ne.s32.totalorder %s51, %s54
    %p63 = scmp.eq.s32.totalorder %s20, 7
    %p64 = por %p62, %p63
    %p65 = scmp.ne.s32.totalorder %s54, %s55
    %p66 = scmp.eq.s32.totalorder %s20, 0
    %p67 = por %p65, %p66
    %p68 = scmp.ne.s32.totalorder %s54, %s55
    %p69 = scmp.eq.s32.totalorder %s21, 7
    %p70 = por %p68, %p69
    %p72 = scmp.ne.s32.totalorder %s55, %s71
    %p73 = scmp.eq.s32.totalorder %s21, 0
    %p74 = por %p72, %p73
    %s76 = sadd.s32 %s75, 1
    %p79 = scmp.eq.s32.totalorder %s15, 7
    %p80 = scmp.ne.s32.totalorder %s75, %s77
    %p81 = scmp.eq.s32.totalorder %s15, 0
    %p82 = por %p80, %p81
    %p83 = scmp.ne.s32.totalorder %s75, %s77
    %p84 = scmp.eq.s32.totalorder %s20, 7
    %p85 = por %p83, %p84
    %p86 = scmp.ne.s32.totalorder %s77, %s78
    %p87 = scmp.eq.s32.totalorder %s20, 0
    %p88 = por %p86, %p87
    %p89 = scmp.ne.s32.totalorder %s77, %s78
    %p90 = scmp.eq.s32.totalorder %s21, 7
    %p91 = por %p89, %p90
    %p93 = scmp.ne.s32.totalorder %s78, %s92
    %p94 = scmp.eq.s32.totalorder %s21, 0
    %p95 = por %p93, %p94
    %s97 = sadd.s32 %s96, 1
    %p100 = scmp.eq.s32.totalorder %s15, 7
    %p101 = scmp.ne.s32.totalorder %s96, %s98
    %p102 = scmp.eq.s32.totalorder %s15, 0
    %p103 = por %p101, %p102
    %p104 = scmp.ne.s32.totalorder %s96, %s98
    %p105 = scmp.eq.s32.totalorder %s20, 7
    %p106 = por %p104, %p105
    %p107 = scmp.ne.s32.totalorder %s98, %s99
    %p108 = scmp.eq.s32.totalorder %s20, 0
    %p109 = por %p107, %p108
    %p110 = scmp.ne.s32.totalorder %s98, %s99
    %p111 = scmp.eq.s32.totalorder %s21, 7
    %p112 = por %p110, %p111
    %p114 = scmp.ne.s32.totalorder %s99, %s113
    %p115 = scmp.eq.s32.totalorder %s21, 0
    %p116 = por %p114, %p115
    %s118 = sadd.s32 %s117, 1
    %p121 = scmp.eq.s32.totalorder %s15, 7
    %p122 = scmp.ne.s32.totalorder %s117, %s119
    %p123 = scmp.eq.s32.totalorder %s15, 0
    %p124 = por %p122, %p123
    %p125 = scmp.ne.s32.totalorder %s117, %s119
    %p126 = scmp.eq.s32.totalorder %s20, 7
    %p127 = por %p125, %p126
    %p128 = scmp.ne.s32.totalorder %s119, %s120
    %p129 = scmp.eq.s32.totalorder %s20, 0
    %p130 = por %p128, %p129
    %p131 = scmp.ne.s32.totalorder %s119, %s120
    %p132 = scmp.eq.s32.totalorder %s21, 7
    %p133 = por %p131, %p132
    %p135 = scmp.ne.s32.totalorder %s120, %s134
    %p136 = scmp.eq.s32.totalorder %s21, 0
    %p137 = por %p135, %p136
    %s139 = sadd.s32 %s138, 1
    %p142 = scmp.eq.s32.totalorder %s15, 7
    %p143 = scmp.ne.s32.totalorder %s138, %s140
    %p144 = scmp.eq.s32.totalorder %s15, 0
    %p145 = por %p143, %p144
    %p146 = scmp.ne.s32.totalorder %s138, %s140
    %p147 = scmp.eq.s32.totalorder %s20, 7
    %p148 = por %p146, %p147
    %p149 = scmp.ne.s32.totalorder %s140, %s141
    %p150 = scmp.eq.s32.totalorder %s20, 0
    %p151 = por %p149, %p150
    %p152 = scmp.ne.s32.totalorder %s140, %s141
    %p153 = scmp.eq.s32.totalorder %s21, 7
    %p154 = por %p152, %p153
    %p156 = scmp.ne.s32.totalorder %s141, %s155
    %p157 = scmp.eq.s32.totalorder %s21, 0
    %p158 = por %p156, %p157
    %s160 = sadd.s32 %s159, 1
    %p163 = scmp.eq.s32.totalorder %s15, 7
    %p164 = scmp.ne.s32.totalorder %s159, %s161
    %p165 = scmp.eq.s32.totalorder %s15, 0
    %p166 = por %p164, %p165
    %p167 = scmp.ne.s32.totalorder %s159, %s161
    %p168 = scmp.eq.s32.totalorder %s20, 7
    %p169 = por %p167, %p168
    %p170 = scmp.ne.s32.totalorder %s161, %s162
    %p171 = scmp.eq.s32.totalorder %s20, 0
    %p172 = por %p170, %p171
    %p173 = scmp.ne.s32.totalorder %s161, %s162
    %p174 = scmp.eq.s32.totalorder %s21, 7
    %p175 = por %p173, %p174
    %p177 = scmp.ne.s32.totalorder %s162, %s176
    %p178 = scmp.eq.s32.totalorder %s21, 0
    %p179 = por %p177, %p178
    %s181 = sadd.s32 %s180, 1
    %p184 = scmp.eq.s32.totalorder %s15, 7
    %p185 = scmp.ne.s32.totalorder %s180, %s182
    %p186 = scmp.eq.s32.totalorder %s15, 0
    %p187 = por %p185, %p186
    %p188 = scmp.ne.s32.totalorder %s180, %s182
    %p189 = scmp.eq.s32.totalorder %s20, 7
    %p190 = por %p188, %p189
    %p191 = scmp.ne.s32.totalorder %s182, %s183
    %p192 = scmp.eq.s32.totalorder %s20, 0
    %p193 = por %p191, %p192
    %p194 = scmp.ne.s32.totalorder %s182, %s183
    %p195 = scmp.eq.s32.totalorder %s21, 7
    %p196 = por %p194, %p195
    %p198 = scmp.ne.s32.totalorder %s183, %s197
    %p199 = scmp.eq.s32.totalorder %s21, 0
    %p200 = por %p198, %p199
    %s202 = sadd.s32 %s201, 1
    %p205 = scmp.eq.s32.totalorder %s15, 7
    %p206 = scmp.ne.s32.totalorder %s201, %s203
    %p207 = scmp.eq.s32.totalorder %s15, 0
    %p208 = por %p206, %p207
    %p209 = scmp.ne.s32.totalorder %s201, %s203
    %p210 = scmp.eq.s32.totalorder %s20, 7
    %p211 = por %p209, %p210
    %p212 = scmp.ne.s32.totalorder %s203, %s204
    %p213 = scmp.eq.s32.totalorder %s20, 0
    %p214 = por %p212, %p213
    %p215 = scmp.ne.s32.totalorder %s203, %s204
    %p216 = scmp.eq.s32.totalorder %s21, 7
    %p217 = por %p215, %p216
    %p219 = scmp.ne.s32.totalorder %s204, %s218
    %p220 = scmp.eq.s32.totalorder %s21, 0
    %p221 = por %p219, %p220
    %s222 = ssub.s32 %s15, %s22
    %p223 = scmp.eq.s32.totalorder %s222, 0
    %s225 = sadd.s32 %s224, 1
    %s226 = scalar_select %p223, %s224, %s225
    %p229 = pneg %p223
    %p230 = scmp.eq.s32.totalorder %s15, 7
    %p231 = por %p229, %p230
    %p232 = scmp.ne.s32.totalorder %s224, %s227
    %p233 = scmp.eq.s32.totalorder %s15, 0
    %p234 = por %p232, %p233
    %p235 = scmp.ne.s32.totalorder %s224, %s227
    %p236 = scmp.eq.s32.totalorder %s20, 7
    %p237 = por %p235, %p236
    %p238 = scmp.ne.s32.totalorder %s227, %s228
    %p239 = scmp.eq.s32.totalorder %s20, 0
    %p240 = por %p238, %p239
    %p241 = scmp.ne.s32.totalorder %s227, %s228
    %p242 = scmp.eq.s32.totalorder %s21, 7
    %p243 = por %p241, %p242
    %p245 = scmp.ne.s32.totalorder %s228, %s244
    %p246 = scmp.eq.s32.totalorder %s21, 0
    %p247 = por %p245, %p246
    %p248 = scmp.le.s32.totalorder 1, %s15
    %p249 = scmp.lt.s32.totalorder %s15, 9
    %p250 = pnand %p248, %p249
    %p251 = pneg %p250
    // Predicated region
    $region9: #{edge_graph_conv_block.5} parent=5 // pred_check
      _
    $region10: #{edge_graph_conv_block.5} parent=5 // pred_check_branch
      %253 = sbr.rel (%p250) target = $region12
    $region11: #{edge_graph_conv_block.5} parent=5 // pred_region
      %s254 = ssub.s32 %s15, 1
      // Predicated region
      $region13: #{edge_graph_conv_block.5} parent=11 // pred_check
        %p255 = pneg %p88
      $region14: #{edge_graph_conv_block.5} parent=11 // pred_check_branch
        %257 = sbr.rel (%p255) target = $region16
      $region15: #{edge_graph_conv_block.5} parent=11 // pred_region
        _
      $region16: #{edge_graph_conv_block.5} parent=11 // pred_fallthru
        _
      // Predicated region
      $region17: #{edge_graph_conv_block.5} parent=11 // pred_check
        %p258 = pneg %p109
      $region18: #{edge_graph_conv_block.5} parent=11 // pred_check_branch
        %260 = sbr.rel (%p258) target = $region20
      $region19: #{edge_graph_conv_block.5} parent=11 // pred_region
        _
      $region20: #{edge_graph_conv_block.5} parent=11 // pred_fallthru
        _
      // Predicated region
      $region21: #{edge_graph_conv_block.5} parent=11 // pred_check
        %p261 = pneg %p130
      $region22: #{edge_graph_conv_block.5} parent=11 // pred_check_branch
        %263 = sbr.rel (%p261) target = $region24
      $region23: #{edge_graph_conv_block.5} parent=11 // pred_region
        _
      $region24: #{edge_graph_conv_block.5} parent=11 // pred_fallthru
        _
      // Predicated region
      $region25: #{edge_graph_conv_block.5} parent=11 // pred_check
        %p264 = pneg %p151
      $region26: #{edge_graph_conv_block.5} parent=11 // pred_check_branch
        %266 = sbr.rel (%p264) target = $region28
      $region27: #{edge_graph_conv_block.5} parent=11 // pred_region
        _
      $region28: #{edge_graph_conv_block.5} parent=11 // pred_fallthru
        _
      // Predicated region
      $region29: #{edge_graph_conv_block.5} parent=11 // pred_check
        %p267 = pneg %p172
      $region30: #{edge_graph_conv_block.5} parent=11 // pred_check_branch
        %269 = sbr.rel (%p267) target = $region32
      $region31: #{edge_graph_conv_block.5} parent=11 // pred_region
        _
      $region32: #{edge_graph_conv_block.5} parent=11 // pred_fallthru
        _
      // Predicated region
      $region33: #{edge_graph_conv_block.5} parent=11 // pred_check
        %p270 = pneg %p193
      $region34: #{edge_graph_conv_block.5} parent=11 // pred_check_branch
        %272 = sbr.rel (%p270) target = $region36
      $region35: #{edge_graph_conv_block.5} parent=11 // pred_region
        _
      $region36: #{edge_graph_conv_block.5} parent=11 // pred_fallthru
        _
      // Predicated region
      $region37: #{edge_graph_conv_block.5} parent=11 // pred_check
        %p273 = pneg %p214
      $region38: #{edge_graph_conv_block.5} parent=11 // pred_check_branch
        %275 = sbr.rel (%p273) target = $region40
      $region39: #{edge_graph_conv_block.5} parent=11 // pred_region
        _
      $region40: #{edge_graph_conv_block.5} parent=11 // pred_fallthru
        _
    $region12: #{edge_graph_conv_block.5} parent=5 // pred_fallthru
      _
    %p276 = scmp.lt.s32.totalorder %s15, 8
    // Predicated region
    $region41: #{edge_graph_conv_block.5} parent=5 // pred_check
      %p277 = pneg %p276
    $region42: #{edge_graph_conv_block.5} parent=5 // pred_check_branch
      %279 = sbr.rel (%p277) target = $region44
    $region43: #{edge_graph_conv_block.5} parent=5 // pred_region
      // Predicated region
      $region45: #{edge_graph_conv_block.5} parent=43 // pred_check
        %p280 = pneg %p35
      $region46: #{edge_graph_conv_block.5} parent=43 // pred_check_branch
        %282 = sbr.rel (%p280) target = $region48
      $region47: #{edge_graph_conv_block.5} parent=43 // pred_region
        %s283 = smul.u32 32, %s15
        %p284 = scmp.lt.s32.totalorder %s283, 255
        %s285 = scalar_select %p284, %s283, 255
        %s286 = smul.addr %s285, 4
        %s287 = scalar_lea.vmem %s0, %s286
        %s288 = smul.u32 32, %s15
      $region48: #{edge_graph_conv_block.5} parent=43 // pred_fallthru
        _
      // Predicated region
      $region49: #{edge_graph_conv_block.5} parent=43 // pred_check
        %p289 = pneg %p61
      $region50: #{edge_graph_conv_block.5} parent=43 // pred_check_branch
        %291 = sbr.rel (%p289) target = $region52
      $region51: #{edge_graph_conv_block.5} parent=43 // pred_region
        %s292 = smul.u32 4, %s15
        %p293 = scmp.lt.s32.totalorder %s292, 31
        %s294 = scalar_select %p293, %s292, 31
        %s295 = smul.addr %s294, 4
        %s296 = scalar_lea.vmem %s1, %s295
        %s297 = smul.u32 4, %s15
      $region52: #{edge_graph_conv_block.5} parent=43 // pred_fallthru
        _
    $region44: #{edge_graph_conv_block.5} parent=5 // pred_fallthru
      _
    %p298 = scmp.le.s32.totalorder 1, %s15
    %p299 = scmp.lt.s32.totalorder %s15, 9
    %p300 = pnand %p298, %p299
    %p301 = pneg %p300
    // Predicated region
    $region53: #{edge_graph_conv_block.5} parent=5 // pred_check
      _
    $region54: #{edge_graph_conv_block.5} parent=5 // pred_check_branch
      %303 = sbr.rel (%p300) target = $region56
    $region55: #{edge_graph_conv_block.5} parent=5 // pred_region
      %s304 = ssub.s32 %s15, 1
      %s305 = smul.u32 32, %s20
      %p306 = scmp.lt.s32.totalorder %s305, 255
      %s307 = scalar_select %p306, %s305, 255
      %s308 = smul.addr %s307, 4
      %s309 = scalar_lea.vmem %s0, %s308
      %p310 = pneg %p41
      %p311 = pneg %p38
      %s312 = smul.u32 4, %s20
      %p313 = scmp.lt.s32.totalorder %s312, 31
      %s314 = scalar_select %p313, %s312, 31
      %s315 = smul.addr %s314, 4
      %s316 = scalar_lea.vmem %s1, %s315
      %p317 = pneg %p67
      %p318 = pneg %p64
      %p319 = pneg %p88
      %p320 = pneg %p85
      %p321 = pneg %p109
      %p322 = pneg %p106
      %p323 = pneg %p130
      %p324 = pneg %p127
      %p325 = pneg %p151
      %p326 = pneg %p148
      %p327 = pneg %p172
      %p328 = pneg %p169
      %p329 = pneg %p193
      %p330 = pneg %p190
      %p331 = pneg %p214
      %p332 = pneg %p211
      %p333 = pneg %p240
      %p334 = pneg %p237
      %s335 = smul.u32 4, %s20
      %p336 = scmp.lt.s32.totalorder %s335, 31
      %s337 = scalar_select %p336, %s335, 31
      %s338 = smul.addr %s337, 8
      %s339 = scalar_lea.vmem %s9, %s338
      %s340 = smul.u32 32, %s20
      %p341 = scmp.lt.s32.totalorder %s340, 255
      %s342 = scalar_select %p341, %s340, 255
      %s343 = smul.addr %s342, 4
      %s344 = scalar_lea.vmem %s0, %s343
      %s345 = smul.u32 32, %s20
      %s346 = smul.u32 4, %s20
      %p347 = scmp.lt.s32.totalorder %s346, 31
      %s348 = scalar_select %p347, %s346, 31
      %s349 = smul.addr %s348, 4
      %s350 = scalar_lea.vmem %s1, %s349
      %s351 = smul.u32 4, %s20
      %s352 = smul.u32 4, %s20
      %p353 = scmp.lt.s32.totalorder %s352, 31
      %s354 = scalar_select %p353, %s352, 31
      %s355 = smul.addr %s354, 8
      %s356 = scalar_lea.vmem %s9, %s355
      %s357 = smul.u32 4, %s20
      %v359 = vld [vmem:[%s344] sm:$0xf]
      %v360 = vld [vmem:[%s344 + $0x4] sm:$0xf]
      %v361 = vld [vmem:[%s344 + $0x8] sm:$0xf]
      %v362 = vld [vmem:[%s344 + $0xc] sm:$0xf]
      %v363 = vld [vmem:[%s344 + $0x10] sm:$0xf]
      %v364 = vld [vmem:[%s344 + $0x14] sm:$0xf]
      %v365 = vld [vmem:[%s344 + $0x18] sm:$0xf]
      %v366 = vld [vmem:[%s344 + $0x1c] sm:$0xf]
      %v367 = vld [vmem:[%s344 + $0x20] sm:$0xf]
      %v368 = vld [vmem:[%s344 + $0x24] sm:$0xf]
      %v369 = vld [vmem:[%s344 + $0x28] sm:$0xf]
      %v370 = vld [vmem:[%s344 + $0x2c] sm:$0xf]
      %v371 = vld [vmem:[%s344 + $0x30] sm:$0xf]
      %v372 = vld [vmem:[%s344 + $0x34] sm:$0xf]
      %v373 = vld [vmem:[%s344 + $0x38] sm:$0xf]
      %v374 = vld [vmem:[%s344 + $0x3c] sm:$0xf]
      %v375 = vld [vmem:[%s344 + $0x40] sm:$0xf]
      %v376 = vld [vmem:[%s344 + $0x44] sm:$0xf]
      %v377 = vld [vmem:[%s344 + $0x48] sm:$0xf]
      %v378 = vld [vmem:[%s344 + $0x4c] sm:$0xf]
      %v379 = vld [vmem:[%s344 + $0x50] sm:$0xf]
      %v380 = vld [vmem:[%s344 + $0x54] sm:$0xf]
      %v381 = vld [vmem:[%s344 + $0x58] sm:$0xf]
      %v382 = vld [vmem:[%s344 + $0x5c] sm:$0xf]
      %v383 = vld [vmem:[%s344 + $0x60] sm:$0xf]
      %v384 = vld [vmem:[%s344 + $0x64] sm:$0xf]
      %v385 = vld [vmem:[%s344 + $0x68] sm:$0xf]
      %v386 = vld [vmem:[%s344 + $0x6c] sm:$0xf]
      %v387 = vld [vmem:[%s344 + $0x70] sm:$0xf]
      %v388 = vld [vmem:[%s344 + $0x74] sm:$0xf]
      %v389 = vld [vmem:[%s344 + $0x78] sm:$0xf]
      %v390 = vld [vmem:[%s344 + $0x7c] sm:$0xf]
      %v391 = vld [vmem:[%s2] sm:$0xf]
      %v424 = vunpack.c.l.b16 %v359
      %v425 = vunpack.c.l.b16 %v360
      %v426 = vunpack.c.l.b16 %v361
      %v427 = vunpack.c.l.b16 %v362
      %v428 = vunpack.c.l.b16 %v363
      %v429 = vunpack.c.l.b16 %v364
      %v430 = vunpack.c.l.b16 %v365
      %v431 = vunpack.c.l.b16 %v366
      %v432 = vunpack.c.l.b16 %v367
      %v433 = vunpack.c.l.b16 %v368
      %v434 = vunpack.c.l.b16 %v369
      %v435 = vunpack.c.l.b16 %v370
      %v436 = vunpack.c.l.b16 %v371
      %v437 = vunpack.c.l.b16 %v372
      %v438 = vunpack.c.l.b16 %v373
      %v439 = vunpack.c.l.b16 %v374
      %v440 = vunpack.c.l.b16 %v375
      %v441 = vunpack.c.l.b16 %v376
      %v442 = vunpack.c.l.b16 %v377
      %v443 = vunpack.c.l.b16 %v378
      %v444 = vunpack.c.l.b16 %v379
      %v445 = vunpack.c.l.b16 %v380
      %v446 = vunpack.c.l.b16 %v381
      %v447 = vunpack.c.l.b16 %v382
      %v448 = vunpack.c.l.b16 %v383
      %v449 = vunpack.c.l.b16 %v384
      %v450 = vunpack.c.l.b16 %v385
      %v451 = vunpack.c.l.b16 %v386
      %v452 = vunpack.c.l.b16 %v387
      %v453 = vunpack.c.l.b16 %v388
      %v454 = vunpack.c.l.b16 %v389
      %v455 = vunpack.c.l.b16 %v390
      %v456 = vpack.c.b16 %v425, %v424
      %v457 = vpack.c.b16 %v427, %v426
      %v458 = vpack.c.b16 %v429, %v428
      %v459 = vpack.c.b16 %v431, %v430
      %v460 = vpack.c.b16 %v433, %v432
      %v461 = vpack.c.b16 %v435, %v434
      %v462 = vpack.c.b16 %v437, %v436
      %v463 = vpack.c.b16 %v439, %v438
      %v464 = vpack.c.b16 %v441, %v440
      %v465 = vpack.c.b16 %v443, %v442
      %v466 = vpack.c.b16 %v445, %v444
      %v467 = vpack.c.b16 %v447, %v446
      %v468 = vpack.c.b16 %v449, %v448
      %v469 = vpack.c.b16 %v451, %v450
      %v470 = vpack.c.b16 %v453, %v452
      %v471 = vpack.c.b16 %v455, %v454
      %vm472 = vcmask 64512
      %v474 = vsel %vm472, %v456, 0
      %v477 = vsel %vm472, %v457, 0
      %v480 = vsel %vm472, %v458, 0
      %v483 = vsel %vm472, %v459, 0
      %v486 = vsel %vm472, %v460, 0
      %v489 = vsel %vm472, %v461, 0
      %v492 = vsel %vm472, %v462, 0
      %v495 = vsel %vm472, %v463, 0
      %v498 = vsel %vm472, %v464, 0
      %v501 = vsel %vm472, %v465, 0
      %v504 = vsel %vm472, %v466, 0
      %v507 = vsel %vm472, %v467, 0
      %v510 = vsel %vm472, %v468, 0
      %v513 = vsel %vm472, %v469, 0
      %v516 = vsel %vm472, %v470, 0
      %v519 = vsel %vm472, %v471, 0
      %vm521 = vcmask 1043456
      %v523 = vsel %vm521, %v391, 0
      %525 = vmatprep.subr.bf16.mxu0 0
      %526 = vmatpush1.bf16.msra.mxu0 %v523
      %527 = vmatprep.subr.bf16.mxu0 0
      %528 = vmatpush1.bf16.msra.mxu0 0
      %529 = vmatprep.subr.bf16.mxu0 0
      %530 = vmatpush1.bf16.msra.mxu0 0
      %531 = vmatprep.subr.bf16.mxu0 0
      %532 = vmatpush1.bf16.msra.mxu0 0
      %533 = vmatprep.subr.bf16.mxu0 0
      %534 = vmatpush1.bf16.msra.mxu0 0
      %535 = vmatprep.subr.bf16.mxu0 0
      %536 = vmatpush1.bf16.msra.mxu0 0
      %537 = vmatprep.subr.bf16.mxu0 0
      %538 = vmatpush1.bf16.msra.mxu0 0
      %539 = vmatprep.subr.bf16.mxu0 0
      %540 = vmatpush1.bf16.msra.mxu0 0
      %541 = vmatprep.subr.bf16.mxu0 0
      %542 = vmatpush1.bf16.msra.mxu0 0
      %543 = vmatprep.subr.bf16.mxu0 0
      %544 = vmatpush1.bf16.msra.mxu0 0
      %545 = vmatprep.subr.bf16.mxu0 0
      %546 = vmatpush1.bf16.msra.mxu0 0
      %547 = vmatprep.subr.bf16.mxu0 0
      %548 = vmatpush1.bf16.msra.mxu0 0
      %549 = vmatprep.subr.bf16.mxu0 0
      %550 = vmatpush1.bf16.msra.mxu0 0
      %551 = vmatprep.subr.bf16.mxu0 0
      %552 = vmatpush1.bf16.msra.mxu0 0
      %553 = vmatprep.subr.bf16.mxu0 0
      %554 = vmatpush1.bf16.msra.mxu0 0
      %555 = vmatprep.subr.bf16.mxu0 0
      %556 = vmatpush1.bf16.msra.mxu0 0
      %557 = vmatprep.mubr.bf16.mxu0 0
      %558 = vmatmul.mubr.bf16.gmra.mrb[0].mxu0 %v474
      %v559 = vpop.f32.mrb[0].mxu0
      %v560 = vadd.f32 0.0, %v559
      %v561 = vpop.f32.mrb[0].mxu0
      %v562 = vpop.f32.mrb[0].mxu0
      %v563 = vadd.f32 0.0, %v562
      %v564 = vpop.f32.mrb[0].mxu0
      %565 = vmatprep.mubr.bf16.mxu0 0
      %566 = vmatmul.mubr.bf16.gmra.mrb[0].mxu0 %v477
      %v567 = vpop.f32.mrb[0].mxu0
      %v568 = vadd.f32 0.0, %v567
      %v569 = vpop.f32.mrb[0].mxu0
      %v570 = vpop.f32.mrb[0].mxu0
      %v571 = vadd.f32 0.0, %v570
      %v572 = vpop.f32.mrb[0].mxu0
      %573 = vmatprep.mubr.bf16.mxu0 0
      %574 = vmatmul.mubr.bf16.gmra.mrb[0].mxu0 %v480
      %v575 = vpop.f32.mrb[0].mxu0
      %v576 = vadd.f32 0.0, %v575
      %v577 = vpop.f32.mrb[0].mxu0
      %v578 = vpop.f32.mrb[0].mxu0
      %v579 = vadd.f32 0.0, %v578
      %v580 = vpop.f32.mrb[0].mxu0
      %581 = vmatprep.mubr.bf16.mxu0 0
      %582 = vmatmul.mubr.bf16.gmra.mrb[0].mxu0 %v483
      %v583 = vpop.f32.mrb[0].mxu0
      %v584 = vadd.f32 0.0, %v583
      %v585 = vpop.f32.mrb[0].mxu0
      %v586 = vpop.f32.mrb[0].mxu0
      %v587 = vadd.f32 0.0, %v586
      %v588 = vpop.f32.mrb[0].mxu0
      %589 = vmatprep.mubr.bf16.mxu0 0
      %590 = vmatmul.mubr.bf16.gmra.mrb[0].mxu0 %v486
      %v591 = vpop.f32.mrb[0].mxu0
      %v592 = vadd.f32 0.0, %v591
      %v593 = vpop.f32.mrb[0].mxu0
      %v594 = vpop.f32.mrb[0].mxu0
      %v595 = vadd.f32 0.0, %v594
      %v596 = vpop.f32.mrb[0].mxu0
      %597 = vmatprep.mubr.bf16.mxu0 0
      %598 = vmatmul.mubr.bf16.gmra.mrb[0].mxu0 %v489
      %v599 = vpop.f32.mrb[0].mxu0
      %v600 = vadd.f32 0.0, %v599
      %v601 = vpop.f32.mrb[0].mxu0
      %v602 = vpop.f32.mrb[0].mxu0
      %v603 = vadd.f32 0.0, %v602
      %v604 = vpop.f32.mrb[0].mxu0
      %605 = vmatprep.mubr.bf16.mxu0 0
      %606 = vmatmul.mubr.bf16.gmra.mrb[0].mxu0 %v492
      %v607 = vpop.f32.mrb[0].mxu0
      %v608 = vadd.f32 0.0, %v607
      %v609 = vpop.f32.mrb[0].mxu0
      %v610 = vpop.f32.mrb[0].mxu0
      %v611 = vadd.f32 0.0, %v610
      %v612 = vpop.f32.mrb[0].mxu0
      %613 = vmatprep.mubr.bf16.mxu0 0
      %614 = vmatmul.mubr.bf16.gmra.mrb[0].mxu0 %v495
      %v615 = vpop.f32.mrb[0].mxu0
      %v616 = vadd.f32 0.0, %v615
      %v617 = vpop.f32.mrb[0].mxu0
      %v618 = vpop.f32.mrb[0].mxu0
      %v619 = vadd.f32 0.0, %v618
      %v620 = vpop.f32.mrb[0].mxu0
      %621 = vmatprep.mubr.bf16.mxu0 0
      %622 = vmatmul.mubr.bf16.gmra.mrb[0].mxu0 %v498
      %v623 = vpop.f32.mrb[0].mxu0
      %v624 = vadd.f32 0.0, %v623
      %v625 = vpop.f32.mrb[0].mxu0
      %v626 = vpop.f32.mrb[0].mxu0
      %v627 = vadd.f32 0.0, %v626
      %v628 = vpop.f32.mrb[0].mxu0
      %629 = vmatprep.mubr.bf16.mxu0 0
      %630 = vmatmul.mubr.bf16.gmra.mrb[0].mxu0 %v501
      %v631 = vpop.f32.mrb[0].mxu0
      %v632 = vadd.f32 0.0, %v631
      %v633 = vpop.f32.mrb[0].mxu0
      %v634 = vpop.f32.mrb[0].mxu0
      %v635 = vadd.f32 0.0, %v634
      %v636 = vpop.f32.mrb[0].mxu0
      %637 = vmatprep.mubr.bf16.mxu0 0
      %638 = vmatmul.mubr.bf16.gmra.mrb[0].mxu0 %v504
      %v639 = vpop.f32.mrb[0].mxu0
      %v640 = vadd.f32 0.0, %v639
      %v641 = vpop.f32.mrb[0].mxu0
      %v642 = vpop.f32.mrb[0].mxu0
      %v643 = vadd.f32 0.0, %v642
      %v644 = vpop.f32.mrb[0].mxu0
      %645 = vmatprep.mubr.bf16.mxu0 0
      %646 = vmatmul.mubr.bf16.gmra.mrb[0].mxu0 %v507
      %v647 = vpop.f32.mrb[0].mxu0
      %v648 = vadd.f32 0.0, %v647
      %v649 = vpop.f32.mrb[0].mxu0
      %v650 = vpop.f32.mrb[0].mxu0
      %v651 = vadd.f32 0.0, %v650
      %v652 = vpop.f32.mrb[0].mxu0
      %653 = vmatprep.mubr.bf16.mxu0 0
      %654 = vmatmul.mubr.bf16.gmra.mrb[0].mxu0 %v510
      %v655 = vpop.f32.mrb[0].mxu0
      %v656 = vadd.f32 0.0, %v655
      %v657 = vpop.f32.mrb[0].mxu0
      %v658 = vpop.f32.mrb[0].mxu0
      %v659 = vadd.f32 0.0, %v658
      %v660 = vpop.f32.mrb[0].mxu0
      %661 = vmatprep.mubr.bf16.mxu0 0
      %662 = vmatmul.mubr.bf16.gmra.mrb[0].mxu0 %v513
      %v663 = vpop.f32.mrb[0].mxu0
      %v664 = vadd.f32 0.0, %v663
      %v665 = vpop.f32.mrb[0].mxu0
      %v666 = vpop.f32.mrb[0].mxu0
      %v667 = vadd.f32 0.0, %v666
      %v668 = vpop.f32.mrb[0].mxu0
      %669 = vmatprep.mubr.bf16.mxu0 0
      %670 = vmatmul.mubr.bf16.gmra.mrb[0].mxu0 %v516
      %v671 = vpop.f32.mrb[0].mxu0
      %v672 = vadd.f32 0.0, %v671
      %v673 = vpop.f32.mrb[0].mxu0
      %v674 = vpop.f32.mrb[0].mxu0
      %v675 = vadd.f32 0.0, %v674
      %v676 = vpop.f32.mrb[0].mxu0
      %677 = vmatprep.mubr.bf16.mxu0 0
      %678 = vmatmul.mubr.bf16.gmra.mrb[0].mxu0 %v519
      %v679 = vpop.f32.mrb[0].mxu0
      %v680 = vadd.f32 0.0, %v679
      %v681 = vpop.f32.mrb[0].mxu0
      %v682 = vpop.f32.mrb[0].mxu0
      %v683 = vadd.f32 0.0, %v682
      %v684 = vpop.f32.mrb[0].mxu0
      %685 = vdwg.mxu0
      %v686 = vld [vmem:[%s350] sm:$0xf]
      %v687 = vld [vmem:[%s350 + $0x4] sm:$0xf]
      %v688 = vld [vmem:[%s350 + $0x8] sm:$0xf]
      %v689 = vld [vmem:[%s350 + $0xc] sm:$0xf]
      %v690 = vld [vmem:[%s3] sm:$0xf]
      %v695 = vunpack.c.l.b16 %v686
      %v696 = vunpack.c.l.b16 %v687
      %v697 = vunpack.c.l.b16 %v688
      %v698 = vunpack.c.l.b16 %v689
      %v699 = vpack.c.b16 %v696, %v695
      %v700 = vpack.c.b16 %v698, %v697
      %v702 = vsel %vm472, %v699, 0
      %v705 = vsel %vm472, %v700, 0
      %v708 = vsel %vm521, %v690, 0
      %710 = vmatprep.subr.bf16.mxu0 0
      %711 = vmatpush1.bf16.msra.mxu0 %v708
      %712 = vmatprep.subr.bf16.mxu0 0
      %713 = vmatpush1.bf16.msra.mxu0 0
      %714 = vmatprep.subr.bf16.mxu0 0
      %715 = vmatpush1.bf16.msra.mxu0 0
      %716 = vmatprep.subr.bf16.mxu0 0
      %717 = vmatpush1.bf16.msra.mxu0 0
      %718 = vmatprep.subr.bf16.mxu0 0
      %719 = vmatpush1.bf16.msra.mxu0 0
      %720 = vmatprep.subr.bf16.mxu0 0
      %721 = vmatpush1.bf16.msra.mxu0 0
      %722 = vmatprep.subr.bf16.mxu0 0
      %723 = vmatpush1.bf16.msra.mxu0 0
      %724 = vmatprep.subr.bf16.mxu0 0
      %725 = vmatpush1.bf16.msra.mxu0 0
      %726 = vmatprep.subr.bf16.mxu0 0
      %727 = vmatpush1.bf16.msra.mxu0 0
      %728 = vmatprep.subr.bf16.mxu0 0
      %729 = vmatpush1.bf16.msra.mxu0 0
      %730 = vmatprep.subr.bf16.mxu0 0
      %731 = vmatpush1.bf16.msra.mxu0 0
      %732 = vmatprep.subr.bf16.mxu0 0
      %733 = vmatpush1.bf16.msra.mxu0 0
      %734 = vmatprep.subr.bf16.mxu0 0
      %735 = vmatpush1.bf16.msra.mxu0 0
      %736 = vmatprep.subr.bf16.mxu0 0
      %737 = vmatpush1.bf16.msra.mxu0 0
      %738 = vmatprep.subr.bf16.mxu0 0
      %739 = vmatpush1.bf16.msra.mxu0 0
      %740 = vmatprep.subr.bf16.mxu0 0
      %741 = vmatpush1.bf16.msra.mxu0 0
      %742 = vmatprep.mubr.bf16.mxu0 0
      %743 = vmatmul.mubr.bf16.gmra.mrb[0].mxu0 %v702
      %v744 = vpop.f32.mrb[0].mxu0
      %v745 = vadd.f32 0.0, %v744
      %v746 = vpop.f32.mrb[0].mxu0
      %v747 = vpop.f32.mrb[0].mxu0
      %v748 = vadd.f32 0.0, %v747
      %v749 = vpop.f32.mrb[0].mxu0
      %750 = vmatprep.mubr.bf16.mxu0 0
      %751 = vmatmul.mubr.bf16.gmra.mrb[0].mxu0 %v705
      %v752 = vpop.f32.mrb[0].mxu0
      %v753 = vadd.f32 0.0, %v752
      %v754 = vpop.f32.mrb[0].mxu0
      %v755 = vpop.f32.mrb[0].mxu0
      %v756 = vadd.f32 0.0, %v755
      %v757 = vpop.f32.mrb[0].mxu0
      %758 = vdwg.mxu0
      %v763 = vcombine.high %v745, %v745
      %v765 = vunpack.c.l.s4 1966171168
      %v766 = vunpack.c.0.s8 %v765
      %v767 = vlaneseq
      %v768 = vshrl.u32 %v767, 7
      %v769 = vsub.s32 %v766, %v768
      %v770 = vrot.slane %v745, %v769
      %v772 = vunpack.c.l.s4 1966171168
      %v773 = vunpack.c.0.s8 %v772
      %v774 = vlaneseq
      %v775 = vshrl.u32 %v774, 7
      %v776 = vsub.s32 %v773, %v775
      %v777 = vrot.slane %v763, %v776
      %v778 = vcombine.high %v770, %v770
      %v779 = vcombine.high %v777, %v777
      %v781 = vunpack.c.l.s4 1966171168
      %v782 = vunpack.c.0.s8 %v781
      %v783 = vlaneseq
      %v784 = vshrl.u32 %v783, 7
      %v785 = vsub.s32 %v782, %v784
      %v786 = vrot.slane %v770, %v785
      %v788 = vunpack.c.l.s4 1966171168
      %v789 = vunpack.c.0.s8 %v788
      %v790 = vlaneseq
      %v791 = vshrl.u32 %v790, 7
      %v792 = vsub.s32 %v789, %v791
      %v793 = vrot.slane %v777, %v792
      %v795 = vunpack.c.l.s4 1966171168
      %v796 = vunpack.c.0.s8 %v795
      %v797 = vlaneseq
      %v798 = vshrl.u32 %v797, 7
      %v799 = vsub.s32 %v796, %v798
      %v800 = vrot.slane %v778, %v799
      %v802 = vunpack.c.l.s4 1966171168
      %v803 = vunpack.c.0.s8 %v802
      %v804 = vlaneseq
      %v805 = vshrl.u32 %v804, 7
      %v806 = vsub.s32 %v803, %v805
      %v807 = vrot.slane %v779, %v806
      %v808 = vcombine.high %v786, %v786
      %v809 = vcombine.high %v793, %v793
      %v810 = vcombine.high %v800, %v800
      %v811 = vcombine.high %v807, %v807
      %v812 = vcombine.high %v748, %v748
      %v814 = vunpack.c.l.s4 1966171168
      %v815 = vunpack.c.0.s8 %v814
      %v816 = vlaneseq
      %v817 = vshrl.u32 %v816, 7
      %v818 = vsub.s32 %v815, %v817
      %v819 = vrot.slane %v748, %v818
      %v821 = vunpack.c.l.s4 1966171168
      %v822 = vunpack.c.0.s8 %v821
      %v823 = vlaneseq
      %v824 = vshrl.u32 %v823, 7
      %v825 = vsub.s32 %v822, %v824
      %v826 = vrot.slane %v812, %v825
      %v827 = vcombine.high %v819, %v819
      %v828 = vcombine.high %v826, %v826
      %v830 = vunpack.c.l.s4 1966171168
      %v831 = vunpack.c.0.s8 %v830
      %v832 = vlaneseq
      %v833 = vshrl.u32 %v832, 7
      %v834 = vsub.s32 %v831, %v833
      %v835 = vrot.slane %v819, %v834
      %v837 = vunpack.c.l.s4 1966171168
      %v838 = vunpack.c.0.s8 %v837
      %v839 = vlaneseq
      %v840 = vshrl.u32 %v839, 7
      %v841 = vsub.s32 %v838, %v840
      %v842 = vrot.slane %v826, %v841
      %v844 = vunpack.c.l.s4 1966171168
      %v845 = vunpack.c.0.s8 %v844
      %v846 = vlaneseq
      %v847 = vshrl.u32 %v846, 7
      %v848 = vsub.s32 %v845, %v847
      %v849 = vrot.slane %v827, %v848
      %v851 = vunpack.c.l.s4 1966171168
      %v852 = vunpack.c.0.s8 %v851
      %v853 = vlaneseq
      %v854 = vshrl.u32 %v853, 7
      %v855 = vsub.s32 %v852, %v854
      %v856 = vrot.slane %v828, %v855
      %v857 = vcombine.high %v835, %v835
      %v858 = vcombine.high %v842, %v842
      %v859 = vcombine.high %v849, %v849
      %v860 = vcombine.high %v856, %v856
      %v861 = vcombine.high %v753, %v753
      %v863 = vunpack.c.l.s4 1966171168
      %v864 = vunpack.c.0.s8 %v863
      %v865 = vlaneseq
      %v866 = vshrl.u32 %v865, 7
      %v867 = vsub.s32 %v864, %v866
      %v868 = vrot.slane %v753, %v867
      %v870 = vunpack.c.l.s4 1966171168
      %v871 = vunpack.c.0.s8 %v870
      %v872 = vlaneseq
      %v873 = vshrl.u32 %v872, 7
      %v874 = vsub.s32 %v871, %v873
      %v875 = vrot.slane %v861, %v874
      %v876 = vcombine.high %v868, %v868
      %v877 = vcombine.high %v875, %v875
      %v879 = vunpack.c.l.s4 1966171168
      %v880 = vunpack.c.0.s8 %v879
      %v881 = vlaneseq
      %v882 = vshrl.u32 %v881, 7
      %v883 = vsub.s32 %v880, %v882
      %v884 = vrot.slane %v868, %v883
      %v886 = vunpack.c.l.s4 1966171168
      %v887 = vunpack.c.0.s8 %v886
      %v888 = vlaneseq
      %v889 = vshrl.u32 %v888, 7
      %v890 = vsub.s32 %v887, %v889
      %v891 = vrot.slane %v875, %v890
      %v893 = vunpack.c.l.s4 1966171168
      %v894 = vunpack.c.0.s8 %v893
      %v895 = vlaneseq
      %v896 = vshrl.u32 %v895, 7
      %v897 = vsub.s32 %v894, %v896
      %v898 = vrot.slane %v876, %v897
      %v900 = vunpack.c.l.s4 1966171168
      %v901 = vunpack.c.0.s8 %v900
      %v902 = vlaneseq
      %v903 = vshrl.u32 %v902, 7
      %v904 = vsub.s32 %v901, %v903
      %v905 = vrot.slane %v877, %v904
      %v906 = vcombine.high %v884, %v884
      %v907 = vcombine.high %v891, %v891
      %v908 = vcombine.high %v898, %v898
      %v909 = vcombine.high %v905, %v905
      %v910 = vcombine.high %v756, %v756
      %v912 = vunpack.c.l.s4 1966171168
      %v913 = vunpack.c.0.s8 %v912
      %v914 = vlaneseq
      %v915 = vshrl.u32 %v914, 7
      %v916 = vsub.s32 %v913, %v915
      %v917 = vrot.slane %v756, %v916
      %v919 = vunpack.c.l.s4 1966171168
      %v920 = vunpack.c.0.s8 %v919
      %v921 = vlaneseq
      %v922 = vshrl.u32 %v921, 7
      %v923 = vsub.s32 %v920, %v922
      %v924 = vrot.slane %v910, %v923
      %v925 = vcombine.high %v917, %v917
      %v926 = vcombine.high %v924, %v924
      %v928 = vunpack.c.l.s4 1966171168
      %v929 = vunpack.c.0.s8 %v928
      %v930 = vlaneseq
      %v931 = vshrl.u32 %v930, 7
      %v932 = vsub.s32 %v929, %v931
      %v933 = vrot.slane %v917, %v932
      %v935 = vunpack.c.l.s4 1966171168
      %v936 = vunpack.c.0.s8 %v935
      %v937 = vlaneseq
      %v938 = vshrl.u32 %v937, 7
      %v939 = vsub.s32 %v936, %v938
      %v940 = vrot.slane %v924, %v939
      %v942 = vunpack.c.l.s4 1966171168
      %v943 = vunpack.c.0.s8 %v942
      %v944 = vlaneseq
      %v945 = vshrl.u32 %v944, 7
      %v946 = vsub.s32 %v943, %v945
      %v947 = vrot.slane %v925, %v946
      %v949 = vunpack.c.l.s4 1966171168
      %v950 = vunpack.c.0.s8 %v949
      %v951 = vlaneseq
      %v952 = vshrl.u32 %v951, 7
      %v953 = vsub.s32 %v950, %v952
      %v954 = vrot.slane %v926, %v953
      %v955 = vcombine.high %v933, %v933
      %v956 = vcombine.high %v940, %v940
      %v957 = vcombine.high %v947, %v947
      %v958 = vcombine.high %v954, %v954
      %v959 = vlaneseq
      %v960 = vshrl.u32 %v959, 7
      %v961 = vsub.s32 0, %v960
      %v962 = vrot.slane %v786, %v961
      %v963 = vlaneseq
      %v964 = vshrl.u32 %v963, 7
      %v965 = vsub.s32 0, %v964
      %v966 = vrot.slane %v800, %v965
      %v967 = vlaneseq
      %v968 = vshrl.u32 %v967, 7
      %v969 = vsub.s32 0, %v968
      %v970 = vrot.slane %v808, %v969
      %v971 = vlaneseq
      %v972 = vshrl.u32 %v971, 7
      %v973 = vsub.s32 0, %v972
      %v974 = vrot.slane %v810, %v973
      %v975 = vlaneseq
      %v976 = vshrl.u32 %v975, 7
      %v977 = vsub.s32 0, %v976
      %v978 = vrot.slane %v793, %v977
      %v979 = vlaneseq
      %v980 = vshrl.u32 %v979, 7
      %v981 = vsub.s32 0, %v980
      %v982 = vrot.slane %v807, %v981
      %v983 = vlaneseq
      %v984 = vshrl.u32 %v983, 7
      %v985 = vsub.s32 0, %v984
      %v986 = vrot.slane %v809, %v985
      %v987 = vlaneseq
      %v988 = vshrl.u32 %v987, 7
      %v989 = vsub.s32 0, %v988
      %v990 = vrot.slane %v811, %v989
      %v991 = vlaneseq
      %v992 = vshrl.u32 %v991, 7
      %v993 = vsub.s32 0, %v992
      %v994 = vrot.slane %v835, %v993
      %v995 = vlaneseq
      %v996 = vshrl.u32 %v995, 7
      %v997 = vsub.s32 0, %v996
      %v998 = vrot.slane %v849, %v997
      %v999 = vlaneseq
      %v1000 = vshrl.u32 %v999, 7
      %v1001 = vsub.s32 0, %v1000
      %v1002 = vrot.slane %v857, %v1001
      %v1003 = vlaneseq
      %v1004 = vshrl.u32 %v1003, 7
      %v1005 = vsub.s32 0, %v1004
      %v1006 = vrot.slane %v859, %v1005
      %v1007 = vlaneseq
      %v1008 = vshrl.u32 %v1007, 7
      %v1009 = vsub.s32 0, %v1008
      %v1010 = vrot.slane %v842, %v1009
      %v1011 = vlaneseq
      %v1012 = vshrl.u32 %v1011, 7
      %v1013 = vsub.s32 0, %v1012
      %v1014 = vrot.slane %v856, %v1013
      %v1015 = vlaneseq
      %v1016 = vshrl.u32 %v1015, 7
      %v1017 = vsub.s32 0, %v1016
      %v1018 = vrot.slane %v858, %v1017
      %v1019 = vlaneseq
      %v1020 = vshrl.u32 %v1019, 7
      %v1021 = vsub.s32 0, %v1020
      %v1022 = vrot.slane %v860, %v1021
      %v1023 = vlaneseq
      %v1024 = vshrl.u32 %v1023, 7
      %v1025 = vsub.s32 0, %v1024
      %v1026 = vrot.slane %v884, %v1025
      %v1027 = vlaneseq
      %v1028 = vshrl.u32 %v1027, 7
      %v1029 = vsub.s32 0, %v1028
      %v1030 = vrot.slane %v898, %v1029
      %v1031 = vlaneseq
      %v1032 = vshrl.u32 %v1031, 7
      %v1033 = vsub.s32 0, %v1032
      %v1034 = vrot.slane %v906, %v1033
      %v1035 = vlaneseq
      %v1036 = vshrl.u32 %v1035, 7
      %v1037 = vsub.s32 0, %v1036
      %v1038 = vrot.slane %v908, %v1037
      %v1039 = vlaneseq
      %v1040 = vshrl.u32 %v1039, 7
      %v1041 = vsub.s32 0, %v1040
      %v1042 = vrot.slane %v891, %v1041
      %v1043 = vlaneseq
      %v1044 = vshrl.u32 %v1043, 7
      %v1045 = vsub.s32 0, %v1044
      %v1046 = vrot.slane %v905, %v1045
      %v1047 = vlaneseq
      %v1048 = vshrl.u32 %v1047, 7
      %v1049 = vsub.s32 0, %v1048
      %v1050 = vrot.slane %v907, %v1049
      %v1051 = vlaneseq
      %v1052 = vshrl.u32 %v1051, 7
      %v1053 = vsub.s32 0, %v1052
      %v1054 = vrot.slane %v909, %v1053
      %v1055 = vlaneseq
      %v1056 = vshrl.u32 %v1055, 7
      %v1057 = vsub.s32 0, %v1056
      %v1058 = vrot.slane %v933, %v1057
      %v1059 = vlaneseq
      %v1060 = vshrl.u32 %v1059, 7
      %v1061 = vsub.s32 0, %v1060
      %v1062 = vrot.slane %v947, %v1061
      %v1063 = vlaneseq
      %v1064 = vshrl.u32 %v1063, 7
      %v1065 = vsub.s32 0, %v1064
      %v1066 = vrot.slane %v955, %v1065
      %v1067 = vlaneseq
      %v1068 = vshrl.u32 %v1067, 7
      %v1069 = vsub.s32 0, %v1068
      %v1070 = vrot.slane %v957, %v1069
      %v1071 = vlaneseq
      %v1072 = vshrl.u32 %v1071, 7
      %v1073 = vsub.s32 0, %v1072
      %v1074 = vrot.slane %v940, %v1073
      %v1075 = vlaneseq
      %v1076 = vshrl.u32 %v1075, 7
      %v1077 = vsub.s32 0, %v1076
      %v1078 = vrot.slane %v954, %v1077
      %v1079 = vlaneseq
      %v1080 = vshrl.u32 %v1079, 7
      %v1081 = vsub.s32 0, %v1080
      %v1082 = vrot.slane %v956, %v1081
      %v1083 = vlaneseq
      %v1084 = vshrl.u32 %v1083, 7
      %v1085 = vsub.s32 0, %v1084
      %v1086 = vrot.slane %v958, %v1085
      %v1119 = vadd.f32 %v560, %v962
      %v1120 = vadd.f32 %v563, %v966
      %v1121 = vadd.f32 %v568, %v970
      %v1122 = vadd.f32 %v571, %v974
      %v1123 = vadd.f32 %v576, %v978
      %v1124 = vadd.f32 %v579, %v982
      %v1125 = vadd.f32 %v584, %v986
      %v1126 = vadd.f32 %v587, %v990
      %v1127 = vadd.f32 %v592, %v994
      %v1128 = vadd.f32 %v595, %v998
      %v1129 = vadd.f32 %v600, %v1002
      %v1130 = vadd.f32 %v603, %v1006
      %v1131 = vadd.f32 %v608, %v1010
      %v1132 = vadd.f32 %v611, %v1014
      %v1133 = vadd.f32 %v616, %v1018
      %v1134 = vadd.f32 %v619, %v1022
      %v1135 = vadd.f32 %v624, %v1026
      %v1136 = vadd.f32 %v627, %v1030
      %v1137 = vadd.f32 %v632, %v1034
      %v1138 = vadd.f32 %v635, %v1038
      %v1139 = vadd.f32 %v640, %v1042
      %v1140 = vadd.f32 %v643, %v1046
      %v1141 = vadd.f32 %v648, %v1050
      %v1142 = vadd.f32 %v651, %v1054
      %v1143 = vadd.f32 %v656, %v1058
      %v1144 = vadd.f32 %v659, %v1062
      %v1145 = vadd.f32 %v664, %v1066
      %v1146 = vadd.f32 %v667, %v1070
      %v1147 = vadd.f32 %v672, %v1074
      %v1148 = vadd.f32 %v675, %v1078
      %v1149 = vadd.f32 %v680, %v1082
      %v1150 = vadd.f32 %v683, %v1086
      %v1151 = vld [vmem:[%s4] sm:$0x1]
      %v1153 = vlaneseq
      %v1154 = vshrl.u32 %v1153, 7
      %v1155 = vsub.s32 0, %v1154
      %v1156 = vrot.slane %v1151, %v1155
      %v1158 = vmul.f32 %v1119, %v1156
      %v1159 = vmul.f32 %v1120, %v1156
      %v1160 = vmul.f32 %v1121, %v1156
      %v1161 = vmul.f32 %v1122, %v1156
      %v1162 = vmul.f32 %v1123, %v1156
      %v1163 = vmul.f32 %v1124, %v1156
      %v1164 = vmul.f32 %v1125, %v1156
      %v1165 = vmul.f32 %v1126, %v1156
      %v1166 = vmul.f32 %v1127, %v1156
      %v1167 = vmul.f32 %v1128, %v1156
      %v1168 = vmul.f32 %v1129, %v1156
      %v1169 = vmul.f32 %v1130, %v1156
      %v1170 = vmul.f32 %v1131, %v1156
      %v1171 = vmul.f32 %v1132, %v1156
      %v1172 = vmul.f32 %v1133, %v1156
      %v1173 = vmul.f32 %v1134, %v1156
      %v1174 = vmul.f32 %v1135, %v1156
      %v1175 = vmul.f32 %v1136, %v1156
      %v1176 = vmul.f32 %v1137, %v1156
      %v1177 = vmul.f32 %v1138, %v1156
      %v1178 = vmul.f32 %v1139, %v1156
      %v1179 = vmul.f32 %v1140, %v1156
      %v1180 = vmul.f32 %v1141, %v1156
      %v1181 = vmul.f32 %v1142, %v1156
      %v1182 = vmul.f32 %v1143, %v1156
      %v1183 = vmul.f32 %v1144, %v1156
      %v1184 = vmul.f32 %v1145, %v1156
      %v1185 = vmul.f32 %v1146, %v1156
      %v1186 = vmul.f32 %v1147, %v1156
      %v1187 = vmul.f32 %v1148, %v1156
      %v1188 = vmul.f32 %v1149, %v1156
      %v1189 = vmul.f32 %v1150, %v1156
      %v1190 = vld [vmem:[%s5] sm:$0x1]
      %v1192 = vlaneseq
      %v1193 = vshrl.u32 %v1192, 7
      %v1194 = vsub.s32 0, %v1193
      %v1195 = vrot.slane %v1190, %v1194
      %v1197 = vadd.f32 %v1158, %v1195
      %v1198 = vadd.f32 %v1159, %v1195
      %v1199 = vadd.f32 %v1160, %v1195
      %v1200 = vadd.f32 %v1161, %v1195
      %v1201 = vadd.f32 %v1162, %v1195
      %v1202 = vadd.f32 %v1163, %v1195
      %v1203 = vadd.f32 %v1164, %v1195
      %v1204 = vadd.f32 %v1165, %v1195
      %v1205 = vadd.f32 %v1166, %v1195
      %v1206 = vadd.f32 %v1167, %v1195
      %v1207 = vadd.f32 %v1168, %v1195
      %v1208 = vadd.f32 %v1169, %v1195
      %v1209 = vadd.f32 %v1170, %v1195
      %v1210 = vadd.f32 %v1171, %v1195
      %v1211 = vadd.f32 %v1172, %v1195
      %v1212 = vadd.f32 %v1173, %v1195
      %v1213 = vadd.f32 %v1174, %v1195
      %v1214 = vadd.f32 %v1175, %v1195
      %v1215 = vadd.f32 %v1176, %v1195
      %v1216 = vadd.f32 %v1177, %v1195
      %v1217 = vadd.f32 %v1178, %v1195
      %v1218 = vadd.f32 %v1179, %v1195
      %v1219 = vadd.f32 %v1180, %v1195
      %v1220 = vadd.f32 %v1181, %v1195
      %v1221 = vadd.f32 %v1182, %v1195
      %v1222 = vadd.f32 %v1183, %v1195
      %v1223 = vadd.f32 %v1184, %v1195
      %v1224 = vadd.f32 %v1185, %v1195
      %v1225 = vadd.f32 %v1186, %v1195
      %v1226 = vadd.f32 %v1187, %v1195
      %v1227 = vadd.f32 %v1188, %v1195
      %v1228 = vadd.f32 %v1189, %v1195
      %v1229 = vmul.f32 %v1197, 0.2
      %v1230 = vmul.f32 %v1198, 0.2
      %v1231 = vmul.f32 %v1199, 0.2
      %v1232 = vmul.f32 %v1200, 0.2
      %v1233 = vmul.f32 %v1201, 0.2
      %v1234 = vmul.f32 %v1202, 0.2
      %v1235 = vmul.f32 %v1203, 0.2
      %v1236 = vmul.f32 %v1204, 0.2
      %v1237 = vmul.f32 %v1205, 0.2
      %v1238 = vmul.f32 %v1206, 0.2
      %v1239 = vmul.f32 %v1207, 0.2
      %v1240 = vmul.f32 %v1208, 0.2
      %v1241 = vmul.f32 %v1209, 0.2
      %v1242 = vmul.f32 %v1210, 0.2
      %v1243 = vmul.f32 %v1211, 0.2
      %v1244 = vmul.f32 %v1212, 0.2
      %v1245 = vmul.f32 %v1213, 0.2
      %v1246 = vmul.f32 %v1214, 0.2
      %v1247 = vmul.f32 %v1215, 0.2
      %v1248 = vmul.f32 %v1216, 0.2
      %v1249 = vmul.f32 %v1217, 0.2
      %v1250 = vmul.f32 %v1218, 0.2
      %v1251 = vmul.f32 %v1219, 0.2
      %v1252 = vmul.f32 %v1220, 0.2
      %v1253 = vmul.f32 %v1221, 0.2
      %v1254 = vmul.f32 %v1222, 0.2
      %v1255 = vmul.f32 %v1223, 0.2
      %v1256 = vmul.f32 %v1224, 0.2
      %v1257 = vmul.f32 %v1225, 0.2
      %v1258 = vmul.f32 %v1226, 0.2
      %v1259 = vmul.f32 %v1227, 0.2
      %v1260 = vmul.f32 %v1228, 0.2
      %v1261 = vmax.f32 %v1197, %v1229
      %v1262 = vmax.f32 %v1198, %v1230
      %v1263 = vmax.f32 %v1199, %v1231
      %v1264 = vmax.f32 %v1200, %v1232
      %v1265 = vmax.f32 %v1201, %v1233
      %v1266 = vmax.f32 %v1202, %v1234
      %v1267 = vmax.f32 %v1203, %v1235
      %v1268 = vmax.f32 %v1204, %v1236
      %v1269 = vmax.f32 %v1205, %v1237
      %v1270 = vmax.f32 %v1206, %v1238
      %v1271 = vmax.f32 %v1207, %v1239
      %v1272 = vmax.f32 %v1208, %v1240
      %v1273 = vmax.f32 %v1209, %v1241
      %v1274 = vmax.f32 %v1210, %v1242
      %v1275 = vmax.f32 %v1211, %v1243
      %v1276 = vmax.f32 %v1212, %v1244
      %v1277 = vmax.f32 %v1213, %v1245
      %v1278 = vmax.f32 %v1214, %v1246
      %v1279 = vmax.f32 %v1215, %v1247
      %v1280 = vmax.f32 %v1216, %v1248
      %v1281 = vmax.f32 %v1217, %v1249
      %v1282 = vmax.f32 %v1218, %v1250
      %v1283 = vmax.f32 %v1219, %v1251
      %v1284 = vmax.f32 %v1220, %v1252
      %v1285 = vmax.f32 %v1221, %v1253
      %v1286 = vmax.f32 %v1222, %v1254
      %v1287 = vmax.f32 %v1223, %v1255
      %v1288 = vmax.f32 %v1224, %v1256
      %v1289 = vmax.f32 %v1225, %v1257
      %v1290 = vmax.f32 %v1226, %v1258
      %v1291 = vmax.f32 %v1227, %v1259
      %v1292 = vmax.f32 %v1228, %v1260
      %v1293 = vpack.c.bf16 %v1262, %v1261
      %v1294 = vpack.c.bf16 %v1264, %v1263
      %v1295 = vpack.c.bf16 %v1266, %v1265
      %v1296 = vpack.c.bf16 %v1268, %v1267
      %v1297 = vpack.c.bf16 %v1270, %v1269
      %v1298 = vpack.c.bf16 %v1272, %v1271
      %v1299 = vpack.c.bf16 %v1274, %v1273
      %v1300 = vpack.c.bf16 %v1276, %v1275
      %v1301 = vpack.c.bf16 %v1278, %v1277
      %v1302 = vpack.c.bf16 %v1280, %v1279
      %v1303 = vpack.c.bf16 %v1282, %v1281
      %v1304 = vpack.c.bf16 %v1284, %v1283
      %v1305 = vpack.c.bf16 %v1286, %v1285
      %v1306 = vpack.c.bf16 %v1288, %v1287
      %v1307 = vpack.c.bf16 %v1290, %v1289
      %v1308 = vpack.c.bf16 %v1292, %v1291
      %v1309 = vld [vmem:[%s6] sm:$0xf]
      %v1310 = vld [vmem:[%s6 + $0x4] sm:$0xf]
      %v1311 = vld [vmem:[%s6 + $0x8] sm:$0xf]
      %v1312 = vld [vmem:[%s6 + $0xc] sm:$0xf]
      %v1317 = vunpack.c.l.b16 %v1309
      %v1318 = vunpack.c.l.b16 %v1310
      %v1319 = vunpack.c.l.b16 %v1311
      %v1320 = vunpack.c.l.b16 %v1312
      %v1321 = vpack.c.b16 %v1318, %v1317
      %v1322 = vpack.c.b16 %v1320, %v1319
      %vm1325 = vcmask 261120
      %v1327 = vsel %vm1325, %v1293, 0
      %v1330 = vsel %vm1325, %v1294, 0
      %v1333 = vsel %vm1325, %v1295, 0
      %v1336 = vsel %vm1325, %v1296, 0
      %v1339 = vsel %vm1325, %v1297, 0
      %v1342 = vsel %vm1325, %v1298, 0
      %v1345 = vsel %vm1325, %v1299, 0
      %v1348 = vsel %vm1325, %v1300, 0
      %v1351 = vsel %vm1325, %v1301, 0
      %v1354 = vsel %vm1325, %v1302, 0
      %v1357 = vsel %vm1325, %v1303, 0
      %v1360 = vsel %vm1325, %v1304, 0
      %v1363 = vsel %vm1325, %v1305, 0
      %v1366 = vsel %vm1325, %v1306, 0
      %v1369 = vsel %vm1325, %v1307, 0
      %v1372 = vsel %vm1325, %v1308, 0
      %1374 = vmatprep.subr.bf16.mxu0 0
      %1375 = vmatpush1.bf16.msra.mxu0 %v1321
      %1376 = vmatprep.subr.bf16.mxu0 0
      %1377 = vmatpush1.bf16.msra.mxu0 %v1322
      %1378 = vmatprep.subr.bf16.mxu0 0
      %1379 = vmatpush1.bf16.msra.mxu0 0
      %1380 = vmatprep.subr.bf16.mxu0 0
      %1381 = vmatpush1.bf16.msra.mxu0 0
      %1382 = vmatprep.subr.bf16.mxu0 0
      %1383 = vmatpush1.bf16.msra.mxu0 0
      %1384 = vmatprep.subr.bf16.mxu0 0
      %1385 = vmatpush1.bf16.msra.mxu0 0
      %1386 = vmatprep.subr.bf16.mxu0 0
      %1387 = vmatpush1.bf16.msra.mxu0 0
      %1388 = vmatprep.subr.bf16.mxu0 0
      %1389 = vmatpush1.bf16.msra.mxu0 0
      %1390 = vmatprep.subr.bf16.mxu0 0
      %1391 = vmatpush1.bf16.msra.mxu0 0
      %1392 = vmatprep.subr.bf16.mxu0 0
      %1393 = vmatpush1.bf16.msra.mxu0 0
      %1394 = vmatprep.subr.bf16.mxu0 0
      %1395 = vmatpush1.bf16.msra.mxu0 0
      %1396 = vmatprep.subr.bf16.mxu0 0
      %1397 = vmatpush1.bf16.msra.mxu0 0
      %1398 = vmatprep.subr.bf16.mxu0 0
      %1399 = vmatpush1.bf16.msra.mxu0 0
      %1400 = vmatprep.subr.bf16.mxu0 0
      %1401 = vmatpush1.bf16.msra.mxu0 0
      %1402 = vmatprep.subr.bf16.mxu0 0
      %1403 = vmatpush1.bf16.msra.mxu0 0
      %1404 = vmatprep.subr.bf16.mxu0 0
      %1405 = vmatpush1.bf16.msra.mxu0 0
      %1406 = vmatprep.mubr.bf16.mxu0 0
      %1407 = vmatmul.mubr.bf16.gmra.mrb[0].mxu0 %v1327
      %v1408 = vpop.f32.mrb[0].mxu0
      %v1409 = vadd.f32 0.0, %v1408
      %v1410 = vpop.f32.mrb[0].mxu0
      %v1411 = vpop.f32.mrb[0].mxu0
      %v1412 = vadd.f32 0.0, %v1411
      %v1413 = vpop.f32.mrb[0].mxu0
      %1414 = vmatprep.mubr.bf16.mxu0 0
      %1415 = vmatmul.mubr.bf16.gmra.mrb[0].mxu0 %v1330
      %v1416 = vpop.f32.mrb[0].mxu0
      %v1417 = vadd.f32 0.0, %v1416
      %v1418 = vpop.f32.mrb[0].mxu0
      %v1419 = vpop.f32.mrb[0].mxu0
      %v1420 = vadd.f32 0.0, %v1419
      %v1421 = vpop.f32.mrb[0].mxu0
      %1422 = vmatprep.mubr.bf16.mxu0 0
      %1423 = vmatmul.mubr.bf16.gmra.mrb[0].mxu0 %v1333
      %v1424 = vpop.f32.mrb[0].mxu0
      %v1425 = vadd.f32 0.0, %v1424
      %v1426 = vpop.f32.mrb[0].mxu0
      %v1427 = vpop.f32.mrb[0].mxu0
      %v1428 = vadd.f32 0.0, %v1427
      %v1429 = vpop.f32.mrb[0].mxu0
      %1430 = vmatprep.mubr.bf16.mxu0 0
      %1431 = vmatmul.mubr.bf16.gmra.mrb[0].mxu0 %v1336
      %v1432 = vpop.f32.mrb[0].mxu0
      %v1433 = vadd.f32 0.0, %v1432
      %v1434 = vpop.f32.mrb[0].mxu0
      %v1435 = vpop.f32.mrb[0].mxu0
      %v1436 = vadd.f32 0.0, %v1435
      %v1437 = vpop.f32.mrb[0].mxu0
      %1438 = vmatprep.mubr.bf16.mxu0 0
      %1439 = vmatmul.mubr.bf16.gmra.mrb[0].mxu0 %v1339
      %v1440 = vpop.f32.mrb[0].mxu0
      %v1441 = vadd.f32 0.0, %v1440
      %v1442 = vpop.f32.mrb[0].mxu0
      %v1443 = vpop.f32.mrb[0].mxu0
      %v1444 = vadd.f32 0.0, %v1443
      %v1445 = vpop.f32.mrb[0].mxu0
      %1446 = vmatprep.mubr.bf16.mxu0 0
      %1447 = vmatmul.mubr.bf16.gmra.mrb[0].mxu0 %v1342
      %v1448 = vpop.f32.mrb[0].mxu0
      %v1449 = vadd.f32 0.0, %v1448
      %v1450 = vpop.f32.mrb[0].mxu0
      %v1451 = vpop.f32.mrb[0].mxu0
      %v1452 = vadd.f32 0.0, %v1451
      %v1453 = vpop.f32.mrb[0].mxu0
      %1454 = vmatprep.mubr.bf16.mxu0 0
      %1455 = vmatmul.mubr.bf16.gmra.mrb[0].mxu0 %v1345
      %v1456 = vpop.f32.mrb[0].mxu0
      %v1457 = vadd.f32 0.0, %v1456
      %v1458 = vpop.f32.mrb[0].mxu0
      %v1459 = vpop.f32.mrb[0].mxu0
      %v1460 = vadd.f32 0.0, %v1459
      %v1461 = vpop.f32.mrb[0].mxu0
      %1462 = vmatprep.mubr.bf16.mxu0 0
      %1463 = vmatmul.mubr.bf16.gmra.mrb[0].mxu0 %v1348
      %v1464 = vpop.f32.mrb[0].mxu0
      %v1465 = vadd.f32 0.0, %v1464
      %v1466 = vpop.f32.mrb[0].mxu0
      %v1467 = vpop.f32.mrb[0].mxu0
      %v1468 = vadd.f32 0.0, %v1467
      %v1469 = vpop.f32.mrb[0].mxu0
      %1470 = vmatprep.mubr.bf16.mxu0 0
      %1471 = vmatmul.mubr.bf16.gmra.mrb[0].mxu0 %v1351
      %v1472 = vpop.f32.mrb[0].mxu0
      %v1473 = vadd.f32 0.0, %v1472
      %v1474 = vpop.f32.mrb[0].mxu0
      %v1475 = vpop.f32.mrb[0].mxu0
      %v1476 = vadd.f32 0.0, %v1475
      %v1477 = vpop.f32.mrb[0].mxu0
      %1478 = vmatprep.mubr.bf16.mxu0 0
      %1479 = vmatmul.mubr.bf16.gmra.mrb[0].mxu0 %v1354
      %v1480 = vpop.f32.mrb[0].mxu0
      %v1481 = vadd.f32 0.0, %v1480
      %v1482 = vpop.f32.mrb[0].mxu0
      %v1483 = vpop.f32.mrb[0].mxu0
      %v1484 = vadd.f32 0.0, %v1483
      %v1485 = vpop.f32.mrb[0].mxu0
      %1486 = vmatprep.mubr.bf16.mxu0 0
      %1487 = vmatmul.mubr.bf16.gmra.mrb[0].mxu0 %v1357
      %v1488 = vpop.f32.mrb[0].mxu0
      %v1489 = vadd.f32 0.0, %v1488
      %v1490 = vpop.f32.mrb[0].mxu0
      %v1491 = vpop.f32.mrb[0].mxu0
      %v1492 = vadd.f32 0.0, %v1491
      %v1493 = vpop.f32.mrb[0].mxu0
      %1494 = vmatprep.mubr.bf16.mxu0 0
      %1495 = vmatmul.mubr.bf16.gmra.mrb[0].mxu0 %v1360
      %v1496 = vpop.f32.mrb[0].mxu0
      %v1497 = vadd.f32 0.0, %v1496
      %v1498 = vpop.f32.mrb[0].mxu0
      %v1499 = vpop.f32.mrb[0].mxu0
      %v1500 = vadd.f32 0.0, %v1499
      %v1501 = vpop.f32.mrb[0].mxu0
      %1502 = vmatprep.mubr.bf16.mxu0 0
      %1503 = vmatmul.mubr.bf16.gmra.mrb[0].mxu0 %v1363
      %v1504 = vpop.f32.mrb[0].mxu0
      %v1505 = vadd.f32 0.0, %v1504
      %v1506 = vpop.f32.mrb[0].mxu0
      %v1507 = vpop.f32.mrb[0].mxu0
      %v1508 = vadd.f32 0.0, %v1507
      %v1509 = vpop.f32.mrb[0].mxu0
      %1510 = vmatprep.mubr.bf16.mxu0 0
      %1511 = vmatmul.mubr.bf16.gmra.mrb[0].mxu0 %v1366
      %v1512 = vpop.f32.mrb[0].mxu0
      %v1513 = vadd.f32 0.0, %v1512
      %v1514 = vpop.f32.mrb[0].mxu0
      %v1515 = vpop.f32.mrb[0].mxu0
      %v1516 = vadd.f32 0.0, %v1515
      %v1517 = vpop.f32.mrb[0].mxu0
      %1518 = vmatprep.mubr.bf16.mxu0 0
      %1519 = vmatmul.mubr.bf16.gmra.mrb[0].mxu0 %v1369
      %v1520 = vpop.f32.mrb[0].mxu0
      %v1521 = vadd.f32 0.0, %v1520
      %v1522 = vpop.f32.mrb[0].mxu0
      %v1523 = vpop.f32.mrb[0].mxu0
      %v1524 = vadd.f32 0.0, %v1523
      %v1525 = vpop.f32.mrb[0].mxu0
      %1526 = vmatprep.mubr.bf16.mxu0 0
      %1527 = vmatmul.mubr.bf16.gmra.mrb[0].mxu0 %v1372
      %v1528 = vpop.f32.mrb[0].mxu0
      %v1529 = vadd.f32 0.0, %v1528
      %v1530 = vpop.f32.mrb[0].mxu0
      %v1531 = vpop.f32.mrb[0].mxu0
      %v1532 = vadd.f32 0.0, %v1531
      %v1533 = vpop.f32.mrb[0].mxu0
      %1534 = vdwg.mxu0
      %v1535 = vld [vmem:[%s7] sm:$0x1]
      %v1537 = vlaneseq
      %v1538 = vshrl.u32 %v1537, 7
      %v1539 = vsub.s32 0, %v1538
      %v1540 = vrot.slane %v1535, %v1539
      %v1542 = vmul.f32 %v1409, %v1540
      %v1543 = vmul.f32 %v1412, %v1540
      %v1544 = vmul.f32 %v1417, %v1540
      %v1545 = vmul.f32 %v1420, %v1540
      %v1546 = vmul.f32 %v1425, %v1540
      %v1547 = vmul.f32 %v1428, %v1540
      %v1548 = vmul.f32 %v1433, %v1540
      %v1549 = vmul.f32 %v1436, %v1540
      %v1550 = vmul.f32 %v1441, %v1540
      %v1551 = vmul.f32 %v1444, %v1540
      %v1552 = vmul.f32 %v1449, %v1540
      %v1553 = vmul.f32 %v1452, %v1540
      %v1554 = vmul.f32 %v1457, %v1540
      %v1555 = vmul.f32 %v1460, %v1540
      %v1556 = vmul.f32 %v1465, %v1540
      %v1557 = vmul.f32 %v1468, %v1540
      %v1558 = vmul.f32 %v1473, %v1540
      %v1559 = vmul.f32 %v1476, %v1540
      %v1560 = vmul.f32 %v1481, %v1540
      %v1561 = vmul.f32 %v1484, %v1540
      %v1562 = vmul.f32 %v1489, %v1540
      %v1563 = vmul.f32 %v1492, %v1540
      %v1564 = vmul.f32 %v1497, %v1540
      %v1565 = vmul.f32 %v1500, %v1540
      %v1566 = vmul.f32 %v1505, %v1540
      %v1567 = vmul.f32 %v1508, %v1540
      %v1568 = vmul.f32 %v1513, %v1540
      %v1569 = vmul.f32 %v1516, %v1540
      %v1570 = vmul.f32 %v1521, %v1540
      %v1571 = vmul.f32 %v1524, %v1540
      %v1572 = vmul.f32 %v1529, %v1540
      %v1573 = vmul.f32 %v1532, %v1540
      %v1574 = vld [vmem:[%s8] sm:$0x1]
      %v1576 = vlaneseq
      %v1577 = vshrl.u32 %v1576, 7
      %v1578 = vsub.s32 0, %v1577
      %v1579 = vrot.slane %v1574, %v1578
      %v1581 = vadd.f32 %v1542, %v1579
      %v1582 = vadd.f32 %v1543, %v1579
      %v1583 = vadd.f32 %v1544, %v1579
      %v1584 = vadd.f32 %v1545, %v1579
      %v1585 = vadd.f32 %v1546, %v1579
      %v1586 = vadd.f32 %v1547, %v1579
      %v1587 = vadd.f32 %v1548, %v1579
      %v1588 = vadd.f32 %v1549, %v1579
      %v1589 = vadd.f32 %v1550, %v1579
      %v1590 = vadd.f32 %v1551, %v1579
      %v1591 = vadd.f32 %v1552, %v1579
      %v1592 = vadd.f32 %v1553, %v1579
      %v1593 = vadd.f32 %v1554, %v1579
      %v1594 = vadd.f32 %v1555, %v1579
      %v1595 = vadd.f32 %v1556, %v1579
      %v1596 = vadd.f32 %v1557, %v1579
      %v1597 = vadd.f32 %v1558, %v1579
      %v1598 = vadd.f32 %v1559, %v1579
      %v1599 = vadd.f32 %v1560, %v1579
      %v1600 = vadd.f32 %v1561, %v1579
      %v1601 = vadd.f32 %v1562, %v1579
      %v1602 = vadd.f32 %v1563, %v1579
      %v1603 = vadd.f32 %v1564, %v1579
      %v1604 = vadd.f32 %v1565, %v1579
      %v1605 = vadd.f32 %v1566, %v1579
      %v1606 = vadd.f32 %v1567, %v1579
      %v1607 = vadd.f32 %v1568, %v1579
      %v1608 = vadd.f32 %v1569, %v1579
      %v1609 = vadd.f32 %v1570, %v1579
      %v1610 = vadd.f32 %v1571, %v1579
      %v1611 = vadd.f32 %v1572, %v1579
      %v1612 = vadd.f32 %v1573, %v1579
      %v1613 = vmul.f32 %v1581, 0.2
      %v1614 = vmul.f32 %v1582, 0.2
      %v1615 = vmul.f32 %v1583, 0.2
      %v1616 = vmul.f32 %v1584, 0.2
      %v1617 = vmul.f32 %v1585, 0.2
      %v1618 = vmul.f32 %v1586, 0.2
      %v1619 = vmul.f32 %v1587, 0.2
      %v1620 = vmul.f32 %v1588, 0.2
      %v1621 = vmul.f32 %v1589, 0.2
      %v1622 = vmul.f32 %v1590, 0.2
      %v1623 = vmul.f32 %v1591, 0.2
      %v1624 = vmul.f32 %v1592, 0.2
      %v1625 = vmul.f32 %v1593, 0.2
      %v1626 = vmul.f32 %v1594, 0.2
      %v1627 = vmul.f32 %v1595, 0.2
      %v1628 = vmul.f32 %v1596, 0.2
      %v1629 = vmul.f32 %v1597, 0.2
      %v1630 = vmul.f32 %v1598, 0.2
      %v1631 = vmul.f32 %v1599, 0.2
      %v1632 = vmul.f32 %v1600, 0.2
      %v1633 = vmul.f32 %v1601, 0.2
      %v1634 = vmul.f32 %v1602, 0.2
      %v1635 = vmul.f32 %v1603, 0.2
      %v1636 = vmul.f32 %v1604, 0.2
      %v1637 = vmul.f32 %v1605, 0.2
      %v1638 = vmul.f32 %v1606, 0.2
      %v1639 = vmul.f32 %v1607, 0.2
      %v1640 = vmul.f32 %v1608, 0.2
      %v1641 = vmul.f32 %v1609, 0.2
      %v1642 = vmul.f32 %v1610, 0.2
      %v1643 = vmul.f32 %v1611, 0.2
      %v1644 = vmul.f32 %v1612, 0.2
      %v1645 = vmax.f32 %v1581, %v1613
      %v1646 = vmax.f32 %v1582, %v1614
      %v1647 = vmax.f32 %v1583, %v1615
      %v1648 = vmax.f32 %v1584, %v1616
      %v1649 = vmax.f32 %v1585, %v1617
      %v1650 = vmax.f32 %v1586, %v1618
      %v1651 = vmax.f32 %v1587, %v1619
      %v1652 = vmax.f32 %v1588, %v1620
      %v1653 = vmax.f32 %v1589, %v1621
      %v1654 = vmax.f32 %v1590, %v1622
      %v1655 = vmax.f32 %v1591, %v1623
      %v1656 = vmax.f32 %v1592, %v1624
      %v1657 = vmax.f32 %v1593, %v1625
      %v1658 = vmax.f32 %v1594, %v1626
      %v1659 = vmax.f32 %v1595, %v1627
      %v1660 = vmax.f32 %v1596, %v1628
      %v1661 = vmax.f32 %v1597, %v1629
      %v1662 = vmax.f32 %v1598, %v1630
      %v1663 = vmax.f32 %v1599, %v1631
      %v1664 = vmax.f32 %v1600, %v1632
      %v1665 = vmax.f32 %v1601, %v1633
      %v1666 = vmax.f32 %v1602, %v1634
      %v1667 = vmax.f32 %v1603, %v1635
      %v1668 = vmax.f32 %v1604, %v1636
      %v1669 = vmax.f32 %v1605, %v1637
      %v1670 = vmax.f32 %v1606, %v1638
      %v1671 = vmax.f32 %v1607, %v1639
      %v1672 = vmax.f32 %v1608, %v1640
      %v1673 = vmax.f32 %v1609, %v1641
      %v1674 = vmax.f32 %v1610, %v1642
      %v1675 = vmax.f32 %v1611, %v1643
      %v1676 = vmax.f32 %v1612, %v1644
      %v1677 = vsel %vm1325, %v1645, -inf
      %v1678 = vrot.slane %v1677, 4
      %v1679 = vmax.f32 %v1677, %v1678
      %v1680 = vrot.slane %v1679, 2
      %v1681 = vmax.f32 %v1679, %v1680
      %v1682 = vrot.slane %v1681, 1
      %v1683 = vmax.f32 %v1681, %v1682
      %v1684 = vsel %vm1325, %v1646, -inf
      %v1685 = vrot.slane %v1684, 4
      %v1686 = vmax.f32 %v1684, %v1685
      %v1687 = vrot.slane %v1686, 2
      %v1688 = vmax.f32 %v1686, %v1687
      %v1689 = vrot.slane %v1688, 1
      %v1690 = vmax.f32 %v1688, %v1689
      %v1691 = vsel %vm1325, %v1647, -inf
      %v1692 = vrot.slane %v1691, 4
      %v1693 = vmax.f32 %v1691, %v1692
      %v1694 = vrot.slane %v1693, 2
      %v1695 = vmax.f32 %v1693, %v1694
      %v1696 = vrot.slane %v1695, 1
      %v1697 = vmax.f32 %v1695, %v1696
      %v1698 = vsel %vm1325, %v1648, -inf
      %v1699 = vrot.slane %v1698, 4
      %v1700 = vmax.f32 %v1698, %v1699
      %v1701 = vrot.slane %v1700, 2
      %v1702 = vmax.f32 %v1700, %v1701
      %v1703 = vrot.slane %v1702, 1
      %v1704 = vmax.f32 %v1702, %v1703
      %v1705 = vsel %vm1325, %v1649, -inf
      %v1706 = vrot.slane %v1705, 4
      %v1707 = vmax.f32 %v1705, %v1706
      %v1708 = vrot.slane %v1707, 2
      %v1709 = vmax.f32 %v1707, %v1708
      %v1710 = vrot.slane %v1709, 1
      %v1711 = vmax.f32 %v1709, %v1710
      %v1712 = vsel %vm1325, %v1650, -inf
      %v1713 = vrot.slane %v1712, 4
      %v1714 = vmax.f32 %v1712, %v1713
      %v1715 = vrot.slane %v1714, 2
      %v1716 = vmax.f32 %v1714, %v1715
      %v1717 = vrot.slane %v1716, 1
      %v1718 = vmax.f32 %v1716, %v1717
      %v1719 = vsel %vm1325, %v1651, -inf
      %v1720 = vrot.slane %v1719, 4
      %v1721 = vmax.f32 %v1719, %v1720
      %v1722 = vrot.slane %v1721, 2
      %v1723 = vmax.f32 %v1721, %v1722
      %v1724 = vrot.slane %v1723, 1
      %v1725 = vmax.f32 %v1723, %v1724
      %v1726 = vsel %vm1325, %v1652, -inf
      %v1727 = vrot.slane %v1726, 4
      %v1728 = vmax.f32 %v1726, %v1727
      %v1729 = vrot.slane %v1728, 2
      %v1730 = vmax.f32 %v1728, %v1729
      %v1731 = vrot.slane %v1730, 1
      %v1732 = vmax.f32 %v1730, %v1731
      %v1733 = vsel %vm1325, %v1653, -inf
      %v1734 = vrot.slane %v1733, 4
      %v1735 = vmax.f32 %v1733, %v1734
      %v1736 = vrot.slane %v1735, 2
      %v1737 = vmax.f32 %v1735, %v1736
      %v1738 = vrot.slane %v1737, 1
      %v1739 = vmax.f32 %v1737, %v1738
      %v1740 = vsel %vm1325, %v1654, -inf
      %v1741 = vrot.slane %v1740, 4
      %v1742 = vmax.f32 %v1740, %v1741
      %v1743 = vrot.slane %v1742, 2
      %v1744 = vmax.f32 %v1742, %v1743
      %v1745 = vrot.slane %v1744, 1
      %v1746 = vmax.f32 %v1744, %v1745
      %v1747 = vsel %vm1325, %v1655, -inf
      %v1748 = vrot.slane %v1747, 4
      %v1749 = vmax.f32 %v1747, %v1748
      %v1750 = vrot.slane %v1749, 2
      %v1751 = vmax.f32 %v1749, %v1750
      %v1752 = vrot.slane %v1751, 1
      %v1753 = vmax.f32 %v1751, %v1752
      %v1754 = vsel %vm1325, %v1656, -inf
      %v1755 = vrot.slane %v1754, 4
      %v1756 = vmax.f32 %v1754, %v1755
      %v1757 = vrot.slane %v1756, 2
      %v1758 = vmax.f32 %v1756, %v1757
      %v1759 = vrot.slane %v1758, 1
      %v1760 = vmax.f32 %v1758, %v1759
      %v1761 = vsel %vm1325, %v1657, -inf
      %v1762 = vrot.slane %v1761, 4
      %v1763 = vmax.f32 %v1761, %v1762
      %v1764 = vrot.slane %v1763, 2
      %v1765 = vmax.f32 %v1763, %v1764
      %v1766 = vrot.slane %v1765, 1
      %v1767 = vmax.f32 %v1765, %v1766
      %v1768 = vsel %vm1325, %v1658, -inf
      %v1769 = vrot.slane %v1768, 4
      %v1770 = vmax.f32 %v1768, %v1769
      %v1771 = vrot.slane %v1770, 2
      %v1772 = vmax.f32 %v1770, %v1771
      %v1773 = vrot.slane %v1772, 1
      %v1774 = vmax.f32 %v1772, %v1773
      %v1775 = vsel %vm1325, %v1659, -inf
      %v1776 = vrot.slane %v1775, 4
      %v1777 = vmax.f32 %v1775, %v1776
      %v1778 = vrot.slane %v1777, 2
      %v1779 = vmax.f32 %v1777, %v1778
      %v1780 = vrot.slane %v1779, 1
      %v1781 = vmax.f32 %v1779, %v1780
      %v1782 = vsel %vm1325, %v1660, -inf
      %v1783 = vrot.slane %v1782, 4
      %v1784 = vmax.f32 %v1782, %v1783
      %v1785 = vrot.slane %v1784, 2
      %v1786 = vmax.f32 %v1784, %v1785
      %v1787 = vrot.slane %v1786, 1
      %v1788 = vmax.f32 %v1786, %v1787
      %v1789 = vsel %vm1325, %v1661, -inf
      %v1790 = vrot.slane %v1789, 4
      %v1791 = vmax.f32 %v1789, %v1790
      %v1792 = vrot.slane %v1791, 2
      %v1793 = vmax.f32 %v1791, %v1792
      %v1794 = vrot.slane %v1793, 1
      %v1795 = vmax.f32 %v1793, %v1794
      %v1796 = vsel %vm1325, %v1662, -inf
      %v1797 = vrot.slane %v1796, 4
      %v1798 = vmax.f32 %v1796, %v1797
      %v1799 = vrot.slane %v1798, 2
      %v1800 = vmax.f32 %v1798, %v1799
      %v1801 = vrot.slane %v1800, 1
      %v1802 = vmax.f32 %v1800, %v1801
      %v1803 = vsel %vm1325, %v1663, -inf
      %v1804 = vrot.slane %v1803, 4
      %v1805 = vmax.f32 %v1803, %v1804
      %v1806 = vrot.slane %v1805, 2
      %v1807 = vmax.f32 %v1805, %v1806
      %v1808 = vrot.slane %v1807, 1
      %v1809 = vmax.f32 %v1807, %v1808
      %v1810 = vsel %vm1325, %v1664, -inf
      %v1811 = vrot.slane %v1810, 4
      %v1812 = vmax.f32 %v1810, %v1811
      %v1813 = vrot.slane %v1812, 2
      %v1814 = vmax.f32 %v1812, %v1813
      %v1815 = vrot.slane %v1814, 1
      %v1816 = vmax.f32 %v1814, %v1815
      %v1817 = vsel %vm1325, %v1665, -inf
      %v1818 = vrot.slane %v1817, 4
      %v1819 = vmax.f32 %v1817, %v1818
      %v1820 = vrot.slane %v1819, 2
      %v1821 = vmax.f32 %v1819, %v1820
      %v1822 = vrot.slane %v1821, 1
      %v1823 = vmax.f32 %v1821, %v1822
      %v1824 = vsel %vm1325, %v1666, -inf
      %v1825 = vrot.slane %v1824, 4
      %v1826 = vmax.f32 %v1824, %v1825
      %v1827 = vrot.slane %v1826, 2
      %v1828 = vmax.f32 %v1826, %v1827
      %v1829 = vrot.slane %v1828, 1
      %v1830 = vmax.f32 %v1828, %v1829
      %v1831 = vsel %vm1325, %v1667, -inf
      %v1832 = vrot.slane %v1831, 4
      %v1833 = vmax.f32 %v1831, %v1832
      %v1834 = vrot.slane %v1833, 2
      %v1835 = vmax.f32 %v1833, %v1834
      %v1836 = vrot.slane %v1835, 1
      %v1837 = vmax.f32 %v1835, %v1836
      %v1838 = vsel %vm1325, %v1668, -inf
      %v1839 = vrot.slane %v1838, 4
      %v1840 = vmax.f32 %v1838, %v1839
      %v1841 = vrot.slane %v1840, 2
      %v1842 = vmax.f32 %v1840, %v1841
      %v1843 = vrot.slane %v1842, 1
      %v1844 = vmax.f32 %v1842, %v1843
      %v1845 = vsel %vm1325, %v1669, -inf
      %v1846 = vrot.slane %v1845, 4
      %v1847 = vmax.f32 %v1845, %v1846
      %v1848 = vrot.slane %v1847, 2
      %v1849 = vmax.f32 %v1847, %v1848
      %v1850 = vrot.slane %v1849, 1
      %v1851 = vmax.f32 %v1849, %v1850
      %v1852 = vsel %vm1325, %v1670, -inf
      %v1853 = vrot.slane %v1852, 4
      %v1854 = vmax.f32 %v1852, %v1853
      %v1855 = vrot.slane %v1854, 2
      %v1856 = vmax.f32 %v1854, %v1855
      %v1857 = vrot.slane %v1856, 1
      %v1858 = vmax.f32 %v1856, %v1857
      %v1859 = vsel %vm1325, %v1671, -inf
      %v1860 = vrot.slane %v1859, 4
      %v1861 = vmax.f32 %v1859, %v1860
      %v1862 = vrot.slane %v1861, 2
      %v1863 = vmax.f32 %v1861, %v1862
      %v1864 = vrot.slane %v1863, 1
      %v1865 = vmax.f32 %v1863, %v1864
      %v1866 = vsel %vm1325, %v1672, -inf
      %v1867 = vrot.slane %v1866, 4
      %v1868 = vmax.f32 %v1866, %v1867
      %v1869 = vrot.slane %v1868, 2
      %v1870 = vmax.f32 %v1868, %v1869
      %v1871 = vrot.slane %v1870, 1
      %v1872 = vmax.f32 %v1870, %v1871
      %v1873 = vsel %vm1325, %v1673, -inf
      %v1874 = vrot.slane %v1873, 4
      %v1875 = vmax.f32 %v1873, %v1874
      %v1876 = vrot.slane %v1875, 2
      %v1877 = vmax.f32 %v1875, %v1876
      %v1878 = vrot.slane %v1877, 1
      %v1879 = vmax.f32 %v1877, %v1878
      %v1880 = vsel %vm1325, %v1674, -inf
      %v1881 = vrot.slane %v1880, 4
      %v1882 = vmax.f32 %v1880, %v1881
      %v1883 = vrot.slane %v1882, 2
      %v1884 = vmax.f32 %v1882, %v1883
      %v1885 = vrot.slane %v1884, 1
      %v1886 = vmax.f32 %v1884, %v1885
      %v1887 = vsel %vm1325, %v1675, -inf
      %v1888 = vrot.slane %v1887, 4
      %v1889 = vmax.f32 %v1887, %v1888
      %v1890 = vrot.slane %v1889, 2
      %v1891 = vmax.f32 %v1889, %v1890
      %v1892 = vrot.slane %v1891, 1
      %v1893 = vmax.f32 %v1891, %v1892
      %v1894 = vsel %vm1325, %v1676, -inf
      %v1895 = vrot.slane %v1894, 4
      %v1896 = vmax.f32 %v1894, %v1895
      %v1897 = vrot.slane %v1896, 2
      %v1898 = vmax.f32 %v1896, %v1897
      %v1899 = vrot.slane %v1898, 1
      %v1900 = vmax.f32 %v1898, %v1899
      %vm1933 = vcmask 1041409
      %v1934 = vsel %vm1933, %v1690, %v1683
      %vm1935 = vcmask 1042434
      %v1936 = vsel %vm1935, %v1697, %v1934
      %vm1937 = vcmask 1043459
      %v1938 = vsel %vm1937, %v1704, %v1936
      %vm1939 = vcmask 1044484
      %v1940 = vsel %vm1939, %v1711, %v1938
      %vm1941 = vcmask 1045509
      %v1942 = vsel %vm1941, %v1718, %v1940
      %vm1943 = vcmask 1046534
      %v1944 = vsel %vm1943, %v1725, %v1942
      %vm1945 = vcmask 1047559
      %v1946 = vsel %vm1945, %v1732, %v1944
      %v1947 = vsel %vm1933, %v1746, %v1739
      %v1948 = vsel %vm1935, %v1753, %v1947
      %v1949 = vsel %vm1937, %v1760, %v1948
      %v1950 = vsel %vm1939, %v1767, %v1949
      %v1951 = vsel %vm1941, %v1774, %v1950
      %v1952 = vsel %vm1943, %v1781, %v1951
      %v1953 = vsel %vm1945, %v1788, %v1952
      %v1954 = vsel %vm1933, %v1802, %v1795
      %v1955 = vsel %vm1935, %v1809, %v1954
      %v1956 = vsel %vm1937, %v1816, %v1955
      %v1957 = vsel %vm1939, %v1823, %v1956
      %v1958 = vsel %vm1941, %v1830, %v1957
      %v1959 = vsel %vm1943, %v1837, %v1958
      %v1960 = vsel %vm1945, %v1844, %v1959
      %v1961 = vsel %vm1933, %v1858, %v1851
      %v1962 = vsel %vm1935, %v1865, %v1961
      %v1963 = vsel %vm1937, %v1872, %v1962
      %v1964 = vsel %vm1939, %v1879, %v1963
      %v1965 = vsel %vm1941, %v1886, %v1964
      %v1966 = vsel %vm1943, %v1893, %v1965
      %v1967 = vsel %vm1945, %v1900, %v1966
      %1972 = vst.msk [vmem:[%s356] sm:$0xff] %vm1325, %v1946
      %1973 = vst.msk [vmem:[%s356 + $0x8] sm:$0xff] %vm1325, %v1953
      %1974 = vst.msk [vmem:[%s356 + $0x10] sm:$0xff] %vm1325, %v1960
      %1975 = vst.msk [vmem:[%s356 + $0x18] sm:$0xff] %vm1325, %v1967
      %s1976 = smul.u32 4, %s20
      %p1977 = scmp.lt.s32.totalorder %s1976, 31
      %s1978 = scalar_select %p1977, %s1976, 31
      %s1979 = smul.addr %s1978, 8
      %s1980 = scalar_lea.vmem %s9, %s1979
      // Predicated region
      $region57: #{edge_graph_conv_block.5} parent=55 // pred_check
        %p1981 = pneg %p237
      $region58: #{edge_graph_conv_block.5} parent=55 // pred_check_branch
        %1983 = sbr.rel (%p1981) target = $region60
      $region59: #{edge_graph_conv_block.5} parent=55 // pred_region
        %s1984 = smul.u32 4, %s20
      $region60: #{edge_graph_conv_block.5} parent=55 // pred_fallthru
        _
    $region56: #{edge_graph_conv_block.5} parent=5 // pred_fallthru
      _
    %p1985 = scmp.le.s32.totalorder 2, %s15
    // Predicated region
    $region61: #{edge_graph_conv_block.5} parent=5 // pred_check
      %p1986 = pneg %p1985
    $region62: #{edge_graph_conv_block.5} parent=5 // pred_check_branch
      %1988 = sbr.rel (%p1986) target = $region64
    $region63: #{edge_graph_conv_block.5} parent=5 // pred_region
      %s1989 = ssub.s32 %s15, 2
      // Predicated region
      $region65: #{edge_graph_conv_block.5} parent=63 // pred_check
        %p1990 = pneg %p243
      $region66: #{edge_graph_conv_block.5} parent=63 // pred_check_branch
        %1992 = sbr.rel (%p1990) target = $region68
      $region67: #{edge_graph_conv_block.5} parent=63 // pred_region
        %s1993 = smul.u32 4, %s21
        %p1994 = scmp.lt.s32.totalorder %s1993, 31
        %s1995 = scalar_select %p1994, %s1993, 31
        %s1996 = smul.addr %s1995, 8
        %s1997 = scalar_lea.vmem %s9, %s1996
      $region68: #{edge_graph_conv_block.5} parent=63 // pred_fallthru
        _
    $region64: #{edge_graph_conv_block.5} parent=5 // pred_fallthru
      _
  $region6: #{edge_graph_conv_block.5} parent=0 // loop_footer
    %s19 = sadd.s32 1, %s15
  $region7: #{edge_graph_conv_block.5} parent=0 // loop_footer_branch
    %14 = sbr.rel target = $region3
  $region8: #{edge_graph_conv_block.5} parent=0 // loop_exit
    _

</llo_original>
